<compile_context>
chip_gen: v5e
topology: v5e:2x2
jax: 0.10.0
libtpu: 0.0.40
codegen_flags: <defaults>
</compile_context>

<pallas_src>
import functools

import jax
import jax.numpy as jnp
from jax.experimental import pallas as pl
from jax.experimental.pallas import tpu as pltpu

IN_FEATURES = 784          # 1 * 28 * 28
HIDDEN = 2000              # out_features
LIFETIME_K = 5             # lifetime_sparsity_amount
NEG_SLOPE = 0.01           # nn.LeakyReLU default

NUM_CORE_SPLITS = 2        # leading "parallel" grid axis (megacore on v7x)
TH = 1024                  # hidden-chunk rows per grid step (multiple of 8)
HIDDEN_PADDED = NUM_CORE_SPLITS * TH * pl.cdiv(HIDDEN, NUM_CORE_SPLITS * TH)  # 2048
NC = HIDDEN_PADDED // (NUM_CORE_SPLITS * TH)   # hidden chunks per core split (= 1)


def _lifetime_topk_mask(h, k):
    """Keep, per column (hidden unit), the top-k values across the batch (rows).

    k passes of (max over batch, exclude) yield the k-th largest value per
    column; everything below it is zeroed.  Ties with the k-th value survive
    (same convention as the counting formulation).  Zero-padded hidden columns
    stay zero, so padding is semantically inert.
    """
    remaining = h
    kth = None
    for _ in range(k):                                   # static unroll, k <= 5
        kth = jnp.max(remaining, axis=0, keepdims=True)  # (1, TH) XLU sublane reduce
        remaining = jnp.where(remaining >= kth, -jnp.inf, remaining)
    return jnp.where(h >= kth, h, jnp.zeros_like(h))


def _fcwta_kernel(x_ref, w_ref, b1_ref, out_ref, acc_ref, *, k, nc):
    # x_ref  : (B, 784)  bf16   full batch, resident across the whole grid
    # w_ref  : (TH, 784) bf16   current hidden chunk of the tied weight
    # b1_ref : (1, TH)   f32    encoder bias chunk
    # out_ref: (B, 784)  f32    partial reconstruction for this core split
    # acc_ref: (B, 784)  f32    VMEM accumulator carried over hidden chunks
    i = pl.program_id(1)

    @pl.when(i == 0)
    def _():
        acc_ref[...] = jnp.zeros_like(acc_ref)

    x = x_ref[...]
    w = w_ref[...]

    # Encoder chunk: h = x @ W_c.T + b1_c -> (B, TH), f32 MXU accumulation.
    # Contraction on the rhs minor dim; any per-chunk (TH, 784) transpose Mosaic
    # materializes is small and hidden under the weight DMA.
    h = jax.lax.dot_general(
        x, w, (((1,), (1,)), ((), ())), preferred_element_type=jnp.float32
    )
    h = h + b1_ref[...]                          # bias once per chunk (f32)
    h = jnp.where(h > 0, h, NEG_SLOPE * h)       # LeakyReLU, f32 VPU

    # Lifetime sparsity — exact per chunk since the full batch is resident and
    # the top-k mask is independent per hidden column.
    h = _lifetime_topk_mask(h, k)

    # Decoder with tied weights: partial += h @ W_c -> (B, 784).
    acc_ref[...] += jnp.dot(
        h.astype(jnp.bfloat16), w, preferred_element_type=jnp.float32
    )

    @pl.when(i == nc - 1)
    def _():
        out_ref[...] = acc_ref[...].astype(out_ref.dtype)


def prepare_params(w1, b1):
    """One-time parameter prep (outside the per-step hot path): pad the hidden
    dim 2000 -> 2048 with zero rows and cast the tied weight to bf16 (halves
    the HBM-bound weight traffic).  Encoder bias stays f32."""
    pad = HIDDEN_PADDED - w1.shape[0]
    w1p = jnp.pad(w1, ((0, pad), (0, 0))).astype(jnp.bfloat16)          # (2048, 784)
    b1p = jnp.pad(b1, (0, pad)).reshape(1, HIDDEN_PADDED).astype(jnp.float32)
    return w1p, b1p


@jax.jit
def fcwta_forward(x_nchw, w1p, b1p, b2):
    """x_nchw: (B, C, H, W) with C*H*W == 784. Returns the (B, 784) f32 reconstruction."""
    B = x_nchw.shape[0]
    x = x_nchw.reshape(B, -1).astype(jnp.bfloat16)   # nn.Flatten + matmul input dtype
    assert x.shape[1] == IN_FEATURES

    k = min(LIFETIME_K, B)
    kernel = functools.partial(_fcwta_kernel, k=k, nc=NC)

    partials = pl.pallas_call(
        kernel,
        out_shape=jax.ShapeDtypeStruct((NUM_CORE_SPLITS, B, IN_FEATURES), jnp.float32),
        grid_spec=pltpu.PrefetchScalarGridSpec(
            num_scalar_prefetch=0,
            grid=(NUM_CORE_SPLITS, NC),
            in_specs=[
                pl.BlockSpec((B, IN_FEATURES), lambda c, i: (0, 0)),            # x (resident)
                pl.BlockSpec((TH, IN_FEATURES), lambda c, i: (c * NC + i, 0)),  # weight chunk
                pl.BlockSpec((1, TH), lambda c, i: (0, c * NC + i)),            # b1 chunk
            ],
            out_specs=pl.BlockSpec((None, B, IN_FEATURES), lambda c, i: (c, 0, 0)),
            scratch_shapes=[pltpu.VMEM((B, IN_FEATURES), jnp.float32)],
        ),
        compiler_params=pltpu.CompilerParams(
            dimension_semantics=("parallel", "arbitrary"),
            vmem_limit_bytes=32 << 20,
        ),
    )(x, w1p, b1p)

    # Combine the core-split partials and add the decoder bias once (fuses into
    # one small XLA epilogue op under jit).
    return partials[0] + partials[1] + b2[None, :]


def _reference_forward(x_nchw, w1p, b1p, b2):
    """Pure-JAX reference using the same prepared (bf16 weight / f32 accumulate)
    numerics as the kernel, for a tight correctness comparison."""
    B = x_nchw.shape[0]
    x = x_nchw.reshape(B, -1).astype(jnp.bfloat16)
    h = jax.lax.dot_general(
        x, w1p, (((1,), (1,)), ((), ())), preferred_element_type=jnp.float32
    ) + b1p
    h = jnp.where(h > 0, h, NEG_SLOPE * h)
    h = _lifetime_topk_mask(h, min(LIFETIME_K, B))
    y = jnp.dot(h.astype(jnp.bfloat16), w1p, preferred_element_type=jnp.float32)
    return y + b2[None, :]


if __name__ == "__main__":
    key = jax.random.PRNGKey(0)
    kx, kw1, kb1, kb2 = jax.random.split(key, 4)

    B = 8  # small batch; k = 5 lifetime winners per hidden unit across the batch
    x = jax.random.normal(kx, (B, 1, 28, 28), dtype=jnp.float32)

    # Deterministic init mimicking nn.Linear uniform(-1/sqrt(fan_in), 1/sqrt(fan_in)).
    bound_enc = 1.0 / float(IN_FEATURES) ** 0.5
    bound_dec = 1.0 / float(HIDDEN) ** 0.5
    w1 = jax.random.uniform(kw1, (HIDDEN, IN_FEATURES), jnp.float32, -bound_enc, bound_enc)
    b1 = jax.random.uniform(kb1, (HIDDEN,), jnp.float32, -bound_enc, bound_enc)
    b2 = jax.random.uniform(kb2, (IN_FEATURES,), jnp.float32, -bound_dec, bound_dec)

    # One-time weight prep (pad + bf16 cast) — done outside the per-call hot path.
    w1p, b1p = prepare_params(w1, b1)
    w1p, b1p = jax.block_until_ready((w1p, b1p))

    out = jax.block_until_ready(fcwta_forward(x, w1p, b1p, b2))
    ref = jax.block_until_ready(_reference_forward(x, w1p, b1p, b2))

    assert out.shape == (B, IN_FEATURES)
    assert jnp.allclose(out, ref, atol=1e-3, rtol=1e-3), float(jnp.max(jnp.abs(out - ref)))
    print("KERNEL_OK")
</pallas_src>

<mosaic_0001>
module attributes {stable_mosaic.version = 11 : i64} {
  func.func @_fcwta_kernel(%arg0: i32, %arg1: i32, %arg2: memref<8x784xbf16, #tpu.memory_space<vmem>>, %arg3: memref<1024x784xbf16, #tpu.memory_space<vmem>>, %arg4: memref<1x1024xf32, #tpu.memory_space<vmem>>, %arg5: memref<1x8x784xf32, #tpu.memory_space<vmem>>, %arg6: memref<8x784xf32, #tpu.memory_space<vmem>>) attributes {dimension_semantics = [#tpu.dimension_semantics<parallel>, #tpu.dimension_semantics<arbitrary>], iteration_bounds = array<i64: 2, 1>, scalar_prefetch = 0 : i64, scratch_operands = 1 : i64, tpu.core_type = #tpu.core_type<tc>, window_params = [{pipeline_mode = #tpu.pipeline_mode<synchronous>, transform_indices = @transform_0, window_bounds = array<i64: 8, 784>}, {transform_indices = @transform_1, window_bounds = array<i64: 1024, 784>}, {transform_indices = @transform_2, window_bounds = array<i64: 1, 1024>}, {transform_indices = @transform_3, window_bounds = array<i64: 1, 8, 784>}]} {
    %c0_i32 = arith.constant 0 : i32
    %0 = arith.cmpi eq, %arg1, %c0_i32 : i32
    %1 = arith.extui %0 : i1 to i32
    %c0_i32_0 = arith.constant 0 : i32
    %2 = arith.cmpi ne, %1, %c0_i32_0 : i32
    scf.if %2 {
      %cst_25 = arith.constant 0.000000e+00 : f32
      %52 = vector.broadcast %cst_25 : f32 to vector<8x784xf32>
      %c0_26 = arith.constant 0 : index
      %c0_27 = arith.constant 0 : index
      %53 = vector.load %arg6[%c0_26, %c0_27] : memref<8x784xf32, #tpu.memory_space<vmem>>, vector<8x784xf32>
      tpu.vector_store %arg6[%c0_26, %c0_27], %52 {strides = array<i32>} : memref<8x784xf32, #tpu.memory_space<vmem>>, vector<8x784xf32>,
    } else {
    }
    %c0 = arith.constant 0 : index
    %c0_1 = arith.constant 0 : index
    %3 = vector.load %arg2[%c0, %c0_1] : memref<8x784xbf16, #tpu.memory_space<vmem>>, vector<8x784xbf16>
    %c0_2 = arith.constant 0 : index
    %c0_3 = arith.constant 0 : index
    %4 = vector.load %arg3[%c0_2, %c0_3] : memref<1024x784xbf16, #tpu.memory_space<vmem>>, vector<1024x784xbf16>
    %cst = arith.constant dense<0.000000e+00> : vector<8x1024xf32>
    %5 = tpu.matmul %3, %4, %cst {dimension_numbers = #tpu.dot_dimension_numbers<[1], [1], [0], [0], [0, 0, 1, 0], [], []>} : vector<8x784xbf16>, vector<1024x784xbf16>, vector<8x1024xf32> -> vector<8x1024xf32>
    %c0_4 = arith.constant 0 : index
    %c0_5 = arith.constant 0 : index
    %6 = vector.load %arg4[%c0_4, %c0_5] : memref<1x1024xf32, #tpu.memory_space<vmem>>, vector<1x1024xf32>
    %7 = vector.broadcast %6 : vector<1x1024xf32> to vector<8x1024xf32>
    %8 = arith.addf %5, %7 : vector<8x1024xf32>
    %cst_6 = arith.constant 0.000000e+00 : f32
    %9 = vector.broadcast %cst_6 : f32 to vector<8x1024xf32>
    %10 = arith.cmpf ogt, %8, %9 : vector<8x1024xf32>
    %cst_7 = arith.constant 0.00999999977 : f32
    %11 = vector.broadcast %cst_7 : f32 to vector<8x1024xf32>
    %12 = arith.mulf %11, %8 : vector<8x1024xf32>
    %13 = arith.select %10, %8, %12 : vector<8x1024xi1>, vector<8x1024xf32>
    %cst_8 = arith.constant dense<0xFF800000> : vector<1024xf32>
    %14 = vector.multi_reduction <maximumf>, %13, %cst_8 [0] : vector<8x1024xf32> to vector<1024xf32>
    %15 = vector.shape_cast %14 : vector<1024xf32> to vector<1x1024xf32>
    %16 = vector.broadcast %15 : vector<1x1024xf32> to vector<8x1024xf32>
    %17 = arith.cmpf oge, %13, %16 : vector<8x1024xf32>
    %cst_9 = arith.constant 0xFF800000 : f32
    %18 = vector.broadcast %cst_9 : f32 to vector<8x1024xf32>
    %19 = arith.select %17, %18, %13 : vector<8x1024xi1>, vector<8x1024xf32>
    %cst_10 = arith.constant dense<0xFF800000> : vector<1024xf32>
    %20 = vector.multi_reduction <maximumf>, %19, %cst_10 [0] : vector<8x1024xf32> to vector<1024xf32>
    %21 = vector.shape_cast %20 : vector<1024xf32> to vector<1x1024xf32>
    %22 = vector.broadcast %21 : vector<1x1024xf32> to vector<8x1024xf32>
    %23 = arith.cmpf oge, %19, %22 : vector<8x1024xf32>
    %cst_11 = arith.constant 0xFF800000 : f32
    %24 = vector.broadcast %cst_11 : f32 to vector<8x1024xf32>
    %25 = arith.select %23, %24, %19 : vector<8x1024xi1>, vector<8x1024xf32>
    %cst_12 = arith.constant dense<0xFF800000> : vector<1024xf32>
    %26 = vector.multi_reduction <maximumf>, %25, %cst_12 [0] : vector<8x1024xf32> to vector<1024xf32>
    %27 = vector.shape_cast %26 : vector<1024xf32> to vector<1x1024xf32>
    %28 = vector.broadcast %27 : vector<1x1024xf32> to vector<8x1024xf32>
    %29 = arith.cmpf oge, %25, %28 : vector<8x1024xf32>
    %cst_13 = arith.constant 0xFF800000 : f32
    %30 = vector.broadcast %cst_13 : f32 to vector<8x1024xf32>
    %31 = arith.select %29, %30, %25 : vector<8x1024xi1>, vector<8x1024xf32>
    %cst_14 = arith.constant dense<0xFF800000> : vector<1024xf32>
    %32 = vector.multi_reduction <maximumf>, %31, %cst_14 [0] : vector<8x1024xf32> to vector<1024xf32>
    %33 = vector.shape_cast %32 : vector<1024xf32> to vector<1x1024xf32>
    %34 = vector.broadcast %33 : vector<1x1024xf32> to vector<8x1024xf32>
    %35 = arith.cmpf oge, %31, %34 : vector<8x1024xf32>
    %cst_15 = arith.constant 0xFF800000 : f32
    %36 = vector.broadcast %cst_15 : f32 to vector<8x1024xf32>
    %37 = arith.select %35, %36, %31 : vector<8x1024xi1>, vector<8x1024xf32>
    %cst_16 = arith.constant dense<0xFF800000> : vector<1024xf32>
    %38 = vector.multi_reduction <maximumf>, %37, %cst_16 [0] : vector<8x1024xf32> to vector<1024xf32>
    %39 = vector.shape_cast %38 : vector<1024xf32> to vector<1x1024xf32>
    %40 = vector.broadcast %39 : vector<1x1024xf32> to vector<8x1024xf32>
    %41 = arith.cmpf oge, %13, %40 : vector<8x1024xf32>
    %cst_17 = arith.constant 0.000000e+00 : f32
    %42 = vector.broadcast %cst_17 : f32 to vector<8x1024xf32>
    %43 = arith.select %41, %13, %42 : vector<8x1024xi1>, vector<8x1024xf32>
    %c0_18 = arith.constant 0 : index
    %c0_19 = arith.constant 0 : index
    %44 = vector.load %arg6[%c0_18, %c0_19] : memref<8x784xf32, #tpu.memory_space<vmem>>, vector<8x784xf32>
    %45 = arith.truncf %43 : vector<8x1024xf32> to vector<8x1024xbf16>
    %cst_20 = arith.constant dense<0.000000e+00> : vector<8x784xf32>
    %46 = tpu.matmul %45, %4, %cst_20 {dimension_numbers = #tpu.dot_dimension_numbers<[1], [0], [0], [1], [0, 0, 1, 1], [], []>} : vector<8x1024xbf16>, vector<1024x784xbf16>, vector<8x784xf32> -> vector<8x784xf32>
    %47 = arith.addf %44, %46 : vector<8x784xf32>
    %c0_21 = arith.constant 0 : index
    %c0_22 = arith.constant 0 : index
    %48 = vector.load %arg6[%c0_21, %c0_22] : memref<8x784xf32, #tpu.memory_space<vmem>>, vector<8x784xf32>
    tpu.vector_store %arg6[%c0_21, %c0_22], %47 {strides = array<i32>} : memref<8x784xf32, #tpu.memory_space<vmem>>, vector<8x784xf32>,
    %c0_i32_23 = arith.constant 0 : i32
    %49 = arith.cmpi eq, %arg1, %c0_i32_23 : i32
    %50 = arith.extui %49 : i1 to i32
    %c0_i32_24 = arith.constant 0 : i32
    %51 = arith.cmpi ne, %50, %c0_i32_24 : i32
    scf.if %51 {
      %c0_25 = arith.constant 0 : index
      %c0_26 = arith.constant 0 : index
      %52 = vector.load %arg6[%c0_25, %c0_26] : memref<8x784xf32, #tpu.memory_space<vmem>>, vector<8x784xf32>
      %c0_27 = arith.constant 0 : index
      %c0_28 = arith.constant 0 : index
      %c0_29 = arith.constant 0 : index
      %53 = vector.load %arg5[%c0_27, %c0_28, %c0_29] : memref<1x8x784xf32, #tpu.memory_space<vmem>>, vector<1x8x784xf32>
      %54 = vector.shape_cast %53 : vector<1x8x784xf32> to vector<8x784xf32>
      %55 = vector.shape_cast %52 : vector<8x784xf32> to vector<1x8x784xf32>
      tpu.vector_store %arg5[%c0_27, %c0_28, %c0_29], %55 {strides = array<i32>} : memref<1x8x784xf32, #tpu.memory_space<vmem>>, vector<1x8x784xf32>,
    } else {
    }
    return
  }
  func.func @transform_0(%arg0: i32, %arg1: i32) -> (i32, i32) {
    %c0_i32 = arith.constant 0 : i32
    %c0_i32_0 = arith.constant 0 : i32
    %c0_i32_1 = arith.constant 0 : i32
    return %c0_i32, %c0_i32_0 : i32, i32
  }
  func.func @transform_1(%arg0: i32, %arg1: i32) -> (i32, i32) {
    %c1_i32 = arith.constant 1 : i32
    %0 = arith.muli %arg0, %c1_i32 : i32
    %1 = arith.addi %0, %arg1 : i32
    %c0_i32 = arith.constant 0 : i32
    %c0_i32_0 = arith.constant 0 : i32
    return %1, %c0_i32 : i32, i32
  }
  func.func @transform_2(%arg0: i32, %arg1: i32) -> (i32, i32) {
    %c1_i32 = arith.constant 1 : i32
    %0 = arith.muli %arg0, %c1_i32 : i32
    %1 = arith.addi %0, %arg1 : i32
    %c0_i32 = arith.constant 0 : i32
    %c0_i32_0 = arith.constant 0 : i32
    return %c0_i32, %1 : i32, i32
  }
  func.func @transform_3(%arg0: i32, %arg1: i32) -> (i32, i32, i32) {
    %c0_i32 = arith.constant 0 : i32
    %c0_i32_0 = arith.constant 0 : i32
    %c0_i32_1 = arith.constant 0 : i32
    return %arg0, %c0_i32, %c0_i32_0 : i32, i32, i32
  }
}

</mosaic_0001>

<llo_original>
// kernel: fcwta_forward.1
$region0: #{fcwta_forward.1}
  #allocation0 [shape = 'u32[]', space=smem, size = 0x4, offset = 0x4, fixed_abs, tag = 'smem constant byte address 0x4 - core index']
  #allocation1 [shape = 'u32[72,128]{1,0:T(1,128)}', space=vmem, size = 0x9000, scoped, tag = 'internal scratch']
  #allocation2 [shape = 'f32[8,784]{1,0:T(8,128)}', space=vmem, size = 0x7000, scoped, tag = 'scratch operand']
  %s0 = inlined_call_operand.vmem [shape: bf16[8,784], index: 0, kind: input, shape index: {}]
  %s1 = inlined_call_operand.vmem [shape: bf16[2048,784], index: 1, kind: input, shape index: {}]
  %s2 = inlined_call_operand.vmem [shape: f32[1,2048], index: 2, kind: input, shape index: {}]
  %s3 = inlined_call_operand.vmem [shape: f32[2,8,784], index: 3, kind: output, shape index: {}]
  %s4 = sld [smem:[#allocation0]]
  $region53: #{fcwta_forward.1} parent=0
    _
  %s6 = ssub.s32 1, %s4
  %s7 = scalar_select 0, %s6, %s4
  loop: start=0, step=1, limit=4
  $region2: #{fcwta_forward.1} parent=0 // loop_pre_header
    _
  $region3: #{fcwta_forward.1} parent=0 // loop_header
    %s9 = sphi 0, %s13
    %p10 = scmp.ge.s32.totalorder %s9, 4
    %s16 = sphi 0, %s28
    %s17 = sphi 0, %s24
    %s18 = sphi 0, %s16
    %s19 = sphi 0, %s17
    %s20 = sphi 0, %s18
    %s21 = sphi 0, %s19
    %s29 = sphi 0, %s29
    %s31 = sphi 0, %s29
    %s32 = sphi 0, %s31
    %s46 = sphi 0, %s32
    %s54 = sphi 0, %s56
    %s57 = sphi 0, %s54
    %s58 = sphi 0, %s57
    %s74 = sphi 0, %s58
    %s82 = sphi 0, %s84
    %s85 = sphi 0, %s82
    %s86 = sphi 0, %s85
    %s102 = sphi 0, %s86
    %s108 = sphi 0, %s110
    %s111 = sphi 0, %s108
    %s112 = sphi 0, %s111
    %s128 = sphi 0, %s112
  $region4: #{fcwta_forward.1} parent=0 // loop_header_branch
    %12 = sbr.rel (%p10) target = $region8
  $region5: #{fcwta_forward.1} parent=0 // loop_body
    %s14 = ssub.s32 %s9, 1
    %s15 = ssub.s32 %s9, 2
    %s22 = sadd.s32 1, %s17
    %p23 = scmp.ge.s32.totalorder %s22, 1
    %s24 = scalar_select %p23, 0, %s22
    %s25 = sadd.s32 1, %s16
    %s26 = scalar_select %p23, %s25, %s16
    %p27 = scmp.ge.s32.totalorder %s26, 2
    %s28 = scalar_select %p27, 0, %s26
    %s30 = sadd.s32 %s29, 1
    %p33 = scmp.eq.s32.totalorder %s9, 1
    %p34 = scmp.ne.s32.totalorder %s29, %s31
    %p35 = scmp.eq.s32.totalorder %s9, 0
    %p36 = por %p34, %p35
    %p37 = scmp.ne.s32.totalorder %s29, %s31
    %p38 = scmp.eq.s32.totalorder %s14, 1
    %p39 = por %p37, %p38
    %p40 = scmp.ne.s32.totalorder %s31, %s32
    %p41 = scmp.eq.s32.totalorder %s14, 0
    %p42 = por %p40, %p41
    %p43 = scmp.ne.s32.totalorder %s31, %s32
    %p44 = scmp.eq.s32.totalorder %s15, 1
    %p45 = por %p43, %p44
    %p47 = scmp.ne.s32.totalorder %s32, %s46
    %p48 = scmp.eq.s32.totalorder %s15, 0
    %p49 = por %p47, %p48
    %s50 = sadd.s32 %s16, %s17
    %s51 = sadd.s32 %s28, %s24
    %s52 = ssub.s32 %s50, %s51
    %p53 = scmp.eq.s32.totalorder %s52, 0
    %s55 = sadd.s32 %s54, 1
    %s56 = scalar_select %p53, %s54, %s55
    %p59 = pneg %p53
    %p60 = scmp.eq.s32.totalorder %s9, 1
    %p61 = por %p59, %p60
    %p62 = scmp.ne.s32.totalorder %s54, %s57
    %p63 = scmp.eq.s32.totalorder %s9, 0
    %p64 = por %p62, %p63
    %p65 = scmp.ne.s32.totalorder %s54, %s57
    %p66 = scmp.eq.s32.totalorder %s14, 1
    %p67 = por %p65, %p66
    %p68 = scmp.ne.s32.totalorder %s57, %s58
    %p69 = scmp.eq.s32.totalorder %s14, 0
    %p70 = por %p68, %p69
    %p71 = scmp.ne.s32.totalorder %s57, %s58
    %p72 = scmp.eq.s32.totalorder %s15, 1
    %p73 = por %p71, %p72
    %p75 = scmp.ne.s32.totalorder %s58, %s74
    %p76 = scmp.eq.s32.totalorder %s15, 0
    %p77 = por %p75, %p76
    %s78 = sadd.s32 %s16, %s17
    %s79 = sadd.s32 %s28, %s24
    %s80 = ssub.s32 %s78, %s79
    %p81 = scmp.eq.s32.totalorder %s80, 0
    %s83 = sadd.s32 %s82, 1
    %s84 = scalar_select %p81, %s82, %s83
    %p87 = pneg %p81
    %p88 = scmp.eq.s32.totalorder %s9, 1
    %p89 = por %p87, %p88
    %p90 = scmp.ne.s32.totalorder %s82, %s85
    %p91 = scmp.eq.s32.totalorder %s9, 0
    %p92 = por %p90, %p91
    %p93 = scmp.ne.s32.totalorder %s82, %s85
    %p94 = scmp.eq.s32.totalorder %s14, 1
    %p95 = por %p93, %p94
    %p96 = scmp.ne.s32.totalorder %s85, %s86
    %p97 = scmp.eq.s32.totalorder %s14, 0
    %p98 = por %p96, %p97
    %p99 = scmp.ne.s32.totalorder %s85, %s86
    %p100 = scmp.eq.s32.totalorder %s15, 1
    %p101 = por %p99, %p100
    %p103 = scmp.ne.s32.totalorder %s86, %s102
    %p104 = scmp.eq.s32.totalorder %s15, 0
    %p105 = por %p103, %p104
    %s106 = ssub.s32 %s16, %s28
    %p107 = scmp.eq.s32.totalorder %s106, 0
    %s109 = sadd.s32 %s108, 1
    %s110 = scalar_select %p107, %s108, %s109
    %p113 = pneg %p107
    %p114 = scmp.eq.s32.totalorder %s9, 1
    %p115 = por %p113, %p114
    %p116 = scmp.ne.s32.totalorder %s108, %s111
    %p117 = scmp.eq.s32.totalorder %s9, 0
    %p118 = por %p116, %p117
    %p119 = scmp.ne.s32.totalorder %s108, %s111
    %p120 = scmp.eq.s32.totalorder %s14, 1
    %p121 = por %p119, %p120
    %p122 = scmp.ne.s32.totalorder %s111, %s112
    %p123 = scmp.eq.s32.totalorder %s14, 0
    %p124 = por %p122, %p123
    %p125 = scmp.ne.s32.totalorder %s111, %s112
    %p126 = scmp.eq.s32.totalorder %s15, 1
    %p127 = por %p125, %p126
    %p129 = scmp.ne.s32.totalorder %s112, %s128
    %p130 = scmp.eq.s32.totalorder %s15, 0
    %p131 = por %p129, %p130
    %p132 = scmp.le.s32.totalorder 1, %s9
    %p133 = scmp.lt.s32.totalorder %s9, 3
    %p134 = pnand %p132, %p133
    %p135 = pneg %p134
    // Predicated region
    $region9: #{fcwta_forward.1} parent=5 // pred_check
      _
    $region10: #{fcwta_forward.1} parent=5 // pred_check_branch
      %137 = sbr.rel (%p134) target = $region12
    $region11: #{fcwta_forward.1} parent=5 // pred_region
      %s138 = ssub.s32 %s9, 1
      // Predicated region
      $region13: #{fcwta_forward.1} parent=11 // pred_check
        %p139 = pneg %p42
      $region14: #{fcwta_forward.1} parent=11 // pred_check_branch
        %141 = sbr.rel (%p139) target = $region16
      $region15: #{fcwta_forward.1} parent=11 // pred_region
        _
      $region16: #{fcwta_forward.1} parent=11 // pred_fallthru
        _
    $region12: #{fcwta_forward.1} parent=5 // pred_fallthru
      _
    %p142 = scmp.lt.s32.totalorder %s9, 2
    // Predicated region
    $region17: #{fcwta_forward.1} parent=5 // pred_check
      %p143 = pneg %p142
    $region18: #{fcwta_forward.1} parent=5 // pred_check_branch
      %145 = sbr.rel (%p143) target = $region20
    $region19: #{fcwta_forward.1} parent=5 // pred_region
      // Predicated region
      $region21: #{fcwta_forward.1} parent=19 // pred_check
        %p146 = pneg %p64
      $region22: #{fcwta_forward.1} parent=19 // pred_check_branch
        %148 = sbr.rel (%p146) target = $region24
      $region23: #{fcwta_forward.1} parent=19 // pred_region
        %s149 = sadd.s32 %s16, %s17
        %s150 = smul.u32 128, %s149
        %p151 = scmp.lt.s32.totalorder %s150, 255
        %s152 = scalar_select %p151, %s150, 255
        %s153 = smul.addr %s152, 7
        %s154 = smul.addr %s153, 4
        %s155 = scalar_lea.vmem %s1, %s154
        %s156 = sadd.s32 %s16, %s17
        %s157 = smul.u32 128, %s156
      $region24: #{fcwta_forward.1} parent=19 // pred_fallthru
        _
      // Predicated region
      $region25: #{fcwta_forward.1} parent=19 // pred_check
        %p158 = pneg %p92
      $region26: #{fcwta_forward.1} parent=19 // pred_check_branch
        %160 = sbr.rel (%p158) target = $region28
      $region27: #{fcwta_forward.1} parent=19 // pred_region
        %s161 = sadd.s32 %s16, %s17
        %s162 = smul.u32 8, %s161
        %p163 = scmp.lt.s32.totalorder %s162, 15
        %s164 = scalar_select %p163, %s162, 15
        %s165 = scalar_lea.vmem %s2, %s164
        %s166 = sadd.s32 %s16, %s17
        %s167 = smul.u32 8, %s166
      $region28: #{fcwta_forward.1} parent=19 // pred_fallthru
        _
    $region20: #{fcwta_forward.1} parent=5 // pred_fallthru
      _
    %p168 = scmp.le.s32.totalorder 1, %s9
    %p169 = scmp.lt.s32.totalorder %s9, 3
    %p170 = pnand %p168, %p169
    %p171 = pneg %p170
    // Predicated region
    $region29: #{fcwta_forward.1} parent=5 // pred_check
      _
    $region30: #{fcwta_forward.1} parent=5 // pred_check_branch
      %173 = sbr.rel (%p170) target = $region32
    $region31: #{fcwta_forward.1} parent=5 // pred_region
      %s174 = ssub.s32 %s9, 1
      %p175 = pneg %p42
      %p176 = pneg %p39
      %s177 = sadd.s32 %s18, %s19
      %s178 = smul.u32 128, %s177
      %p179 = scmp.lt.s32.totalorder %s178, 255
      %s180 = scalar_select %p179, %s178, 255
      %s181 = smul.addr %s180, 7
      %s182 = smul.addr %s181, 4
      %s183 = scalar_lea.vmem %s1, %s182
      %p184 = pneg %p70
      %p185 = pneg %p67
      %s186 = sadd.s32 %s18, %s19
      %s187 = smul.u32 8, %s186
      %p188 = scmp.lt.s32.totalorder %s187, 15
      %s189 = scalar_select %p188, %s187, 15
      %s190 = scalar_lea.vmem %s2, %s189
      %p191 = pneg %p98
      %p192 = pneg %p95
      %p193 = pneg %p124
      %p194 = pneg %p121
      %p195 = scmp.lt.s32.totalorder %s18, 1
      %s196 = scalar_select %p195, %s18, 1
      %s197 = smul.addr %s196, 7
      %s198 = smul.addr %s197, 8
      %s199 = scalar_lea.vmem %s3, %s198
      %s200 = sadd.s32 %s18, %s19
      %s201 = smul.u32 128, %s200
      %p202 = scmp.lt.s32.totalorder %s201, 255
      %s203 = scalar_select %p202, %s201, 255
      %s204 = smul.addr %s203, 7
      %s205 = smul.addr %s204, 4
      %s206 = scalar_lea.vmem %s1, %s205
      %s207 = sadd.s32 %s18, %s19
      %s208 = smul.u32 128, %s207
      %s209 = sadd.s32 %s18, %s19
      %s210 = smul.u32 8, %s209
      %p211 = scmp.lt.s32.totalorder %s210, 15
      %s212 = scalar_select %p211, %s210, 15
      %s213 = scalar_lea.vmem %s2, %s212
      %s214 = sadd.s32 %s18, %s19
      %s215 = smul.u32 8, %s214
      %p216 = scmp.lt.s32.totalorder %s18, 1
      %s217 = scalar_select %p216, %s18, 1
      %s218 = smul.addr %s217, 7
      %s219 = smul.addr %s218, 8
      %s220 = scalar_lea.vmem %s3, %s219
      %p221 = scmp.eq.s32.totalorder %s19, 0
      // Predicated region
      $region33: #{fcwta_forward.1} parent=31 // pred_check
        %p222 = pneg %p221
      $region34: #{fcwta_forward.1} parent=31 // pred_check_branch
        %224 = sbr.rel (%p222) target = $region36
      $region35: #{fcwta_forward.1} parent=31 // pred_region
        %225 = vst [vmem:[#allocation2] sm:$0xff] 0.0
        %226 = vst [vmem:[#allocation2 + $0x8] sm:$0xff] 0.0
        %227 = vst [vmem:[#allocation2 + $0x10] sm:$0xff] 0.0
        %228 = vst [vmem:[#allocation2 + $0x18] sm:$0xff] 0.0
        %229 = vst [vmem:[#allocation2 + $0x20] sm:$0xff] 0.0
        %230 = vst [vmem:[#allocation2 + $0x28] sm:$0xff] 0.0
        %vm231 = vcmask 130048
        %232 = vst.msk [vmem:[#allocation2 + $0x30] sm:$0xff] %vm231, 0.0
      $region36: #{fcwta_forward.1} parent=31 // pred_fallthru
        _
      %v233 = vld [vmem:[%s0] sm:$0xff]
      %v234 = vld [vmem:[%s0 + $0x8] sm:$0xff]
      %v235 = vld [vmem:[%s0 + $0x10] sm:$0xff]
      %v236 = vld [vmem:[%s0 + $0x18] sm:$0xf]
      %v237 = vld [vmem:[%s206] sm:$0xff]
      %v238 = vld [vmem:[%s206 + $0x8] sm:$0xff]
      %v239 = vld [vmem:[%s206 + $0x10] sm:$0xff]
      %v240 = vld [vmem:[%s206 + $0x18] sm:$0xf]
      %v241 = vld [vmem:[%s206 + $0x1c] sm:$0xff]
      %v242 = vld [vmem:[%s206 + $0x24] sm:$0xff]
      %v243 = vld [vmem:[%s206 + $0x2c] sm:$0xff]
      %v244 = vld [vmem:[%s206 + $0x34] sm:$0xf]
      %v245 = vld [vmem:[%s206 + $0x38] sm:$0xff]
      %v246 = vld [vmem:[%s206 + $0x40] sm:$0xff]
      %v247 = vld [vmem:[%s206 + $0x48] sm:$0xff]
      %v248 = vld [vmem:[%s206 + $0x50] sm:$0xf]
      %v249 = vld [vmem:[%s206 + $0x54] sm:$0xff]
      %v250 = vld [vmem:[%s206 + $0x5c] sm:$0xff]
      %v251 = vld [vmem:[%s206 + $0x64] sm:$0xff]
      %v252 = vld [vmem:[%s206 + $0x6c] sm:$0xf]
      %v253 = vld [vmem:[%s206 + $0x70] sm:$0xff]
      %v254 = vld [vmem:[%s206 + $0x78] sm:$0xff]
      %v255 = vld [vmem:[%s206 + $0x80] sm:$0xff]
      %v256 = vld [vmem:[%s206 + $0x88] sm:$0xf]
      %v257 = vld [vmem:[%s206 + $0x8c] sm:$0xff]
      %v258 = vld [vmem:[%s206 + $0x94] sm:$0xff]
      %v259 = vld [vmem:[%s206 + $0x9c] sm:$0xff]
      %v260 = vld [vmem:[%s206 + $0xa4] sm:$0xf]
      %v261 = vld [vmem:[%s206 + $0xa8] sm:$0xff]
      %v262 = vld [vmem:[%s206 + $0xb0] sm:$0xff]
      %v263 = vld [vmem:[%s206 + $0xb8] sm:$0xff]
      %v264 = vld [vmem:[%s206 + $0xc0] sm:$0xf]
      %v265 = vld [vmem:[%s206 + $0xc4] sm:$0xff]
      %v266 = vld [vmem:[%s206 + $0xcc] sm:$0xff]
      %v267 = vld [vmem:[%s206 + $0xd4] sm:$0xff]
      %v268 = vld [vmem:[%s206 + $0xdc] sm:$0xf]
      %v269 = vld [vmem:[%s206 + $0xe0] sm:$0xff]
      %v270 = vld [vmem:[%s206 + $0xe8] sm:$0xff]
      %v271 = vld [vmem:[%s206 + $0xf0] sm:$0xff]
      %v272 = vld [vmem:[%s206 + $0xf8] sm:$0xf]
      %v273 = vld [vmem:[%s206 + $0xfc] sm:$0xff]
      %v274 = vld [vmem:[%s206 + $0x104] sm:$0xff]
      %v275 = vld [vmem:[%s206 + $0x10c] sm:$0xff]
      %v276 = vld [vmem:[%s206 + $0x114] sm:$0xf]
      %v277 = vld [vmem:[%s206 + $0x118] sm:$0xff]
      %v278 = vld [vmem:[%s206 + $0x120] sm:$0xff]
      %v279 = vld [vmem:[%s206 + $0x128] sm:$0xff]
      %v280 = vld [vmem:[%s206 + $0x130] sm:$0xf]
      %v281 = vld [vmem:[%s206 + $0x134] sm:$0xff]
      %v282 = vld [vmem:[%s206 + $0x13c] sm:$0xff]
      %v283 = vld [vmem:[%s206 + $0x144] sm:$0xff]
      %v284 = vld [vmem:[%s206 + $0x14c] sm:$0xf]
      %v285 = vld [vmem:[%s206 + $0x150] sm:$0xff]
      %v286 = vld [vmem:[%s206 + $0x158] sm:$0xff]
      %v287 = vld [vmem:[%s206 + $0x160] sm:$0xff]
      %v288 = vld [vmem:[%s206 + $0x168] sm:$0xf]
      %v289 = vld [vmem:[%s206 + $0x16c] sm:$0xff]
      %v290 = vld [vmem:[%s206 + $0x174] sm:$0xff]
      %v291 = vld [vmem:[%s206 + $0x17c] sm:$0xff]
      %v292 = vld [vmem:[%s206 + $0x184] sm:$0xf]
      %v293 = vld [vmem:[%s206 + $0x188] sm:$0xff]
      %v294 = vld [vmem:[%s206 + $0x190] sm:$0xff]
      %v295 = vld [vmem:[%s206 + $0x198] sm:$0xff]
      %v296 = vld [vmem:[%s206 + $0x1a0] sm:$0xf]
      %v297 = vld [vmem:[%s206 + $0x1a4] sm:$0xff]
      %v298 = vld [vmem:[%s206 + $0x1ac] sm:$0xff]
      %v299 = vld [vmem:[%s206 + $0x1b4] sm:$0xff]
      %v300 = vld [vmem:[%s206 + $0x1bc] sm:$0xf]
      %v301 = vld [vmem:[%s206 + $0x1c0] sm:$0xff]
      %v302 = vld [vmem:[%s206 + $0x1c8] sm:$0xff]
      %v303 = vld [vmem:[%s206 + $0x1d0] sm:$0xff]
      %v304 = vld [vmem:[%s206 + $0x1d8] sm:$0xf]
      %v305 = vld [vmem:[%s206 + $0x1dc] sm:$0xff]
      %v306 = vld [vmem:[%s206 + $0x1e4] sm:$0xff]
      %v307 = vld [vmem:[%s206 + $0x1ec] sm:$0xff]
      %v308 = vld [vmem:[%s206 + $0x1f4] sm:$0xf]
      %v309 = vld [vmem:[%s206 + $0x1f8] sm:$0xff]
      %v310 = vld [vmem:[%s206 + $0x200] sm:$0xff]
      %v311 = vld [vmem:[%s206 + $0x208] sm:$0xff]
      %v312 = vld [vmem:[%s206 + $0x210] sm:$0xf]
      %v313 = vld [vmem:[%s206 + $0x214] sm:$0xff]
      %v314 = vld [vmem:[%s206 + $0x21c] sm:$0xff]
      %v315 = vld [vmem:[%s206 + $0x224] sm:$0xff]
      %v316 = vld [vmem:[%s206 + $0x22c] sm:$0xf]
      %v317 = vld [vmem:[%s206 + $0x230] sm:$0xff]
      %v318 = vld [vmem:[%s206 + $0x238] sm:$0xff]
      %v319 = vld [vmem:[%s206 + $0x240] sm:$0xff]
      %v320 = vld [vmem:[%s206 + $0x248] sm:$0xf]
      %v321 = vld [vmem:[%s206 + $0x24c] sm:$0xff]
      %v322 = vld [vmem:[%s206 + $0x254] sm:$0xff]
      %v323 = vld [vmem:[%s206 + $0x25c] sm:$0xff]
      %v324 = vld [vmem:[%s206 + $0x264] sm:$0xf]
      %v325 = vld [vmem:[%s206 + $0x268] sm:$0xff]
      %v326 = vld [vmem:[%s206 + $0x270] sm:$0xff]
      %v327 = vld [vmem:[%s206 + $0x278] sm:$0xff]
      %v328 = vld [vmem:[%s206 + $0x280] sm:$0xf]
      %v329 = vld [vmem:[%s206 + $0x284] sm:$0xff]
      %v330 = vld [vmem:[%s206 + $0x28c] sm:$0xff]
      %v331 = vld [vmem:[%s206 + $0x294] sm:$0xff]
      %v332 = vld [vmem:[%s206 + $0x29c] sm:$0xf]
      %v333 = vld [vmem:[%s206 + $0x2a0] sm:$0xff]
      %v334 = vld [vmem:[%s206 + $0x2a8] sm:$0xff]
      %v335 = vld [vmem:[%s206 + $0x2b0] sm:$0xff]
      %v336 = vld [vmem:[%s206 + $0x2b8] sm:$0xf]
      %v337 = vld [vmem:[%s206 + $0x2bc] sm:$0xff]
      %v338 = vld [vmem:[%s206 + $0x2c4] sm:$0xff]
      %v339 = vld [vmem:[%s206 + $0x2cc] sm:$0xff]
      %v340 = vld [vmem:[%s206 + $0x2d4] sm:$0xf]
      %v341 = vld [vmem:[%s206 + $0x2d8] sm:$0xff]
      %v342 = vld [vmem:[%s206 + $0x2e0] sm:$0xff]
      %v343 = vld [vmem:[%s206 + $0x2e8] sm:$0xff]
      %v344 = vld [vmem:[%s206 + $0x2f0] sm:$0xf]
      %v345 = vld [vmem:[%s206 + $0x2f4] sm:$0xff]
      %v346 = vld [vmem:[%s206 + $0x2fc] sm:$0xff]
      %v347 = vld [vmem:[%s206 + $0x304] sm:$0xff]
      %v348 = vld [vmem:[%s206 + $0x30c] sm:$0xf]
      %v349 = vld [vmem:[%s206 + $0x310] sm:$0xff]
      %v350 = vld [vmem:[%s206 + $0x318] sm:$0xff]
      %v351 = vld [vmem:[%s206 + $0x320] sm:$0xff]
      %v352 = vld [vmem:[%s206 + $0x328] sm:$0xf]
      %v353 = vld [vmem:[%s206 + $0x32c] sm:$0xff]
      %v354 = vld [vmem:[%s206 + $0x334] sm:$0xff]
      %v355 = vld [vmem:[%s206 + $0x33c] sm:$0xff]
      %v356 = vld [vmem:[%s206 + $0x344] sm:$0xf]
      %v357 = vld [vmem:[%s206 + $0x348] sm:$0xff]
      %v358 = vld [vmem:[%s206 + $0x350] sm:$0xff]
      %v359 = vld [vmem:[%s206 + $0x358] sm:$0xff]
      %v360 = vld [vmem:[%s206 + $0x360] sm:$0xf]
      %v361 = vld [vmem:[%s206 + $0x364] sm:$0xff]
      %v362 = vld [vmem:[%s206 + $0x36c] sm:$0xff]
      %v363 = vld [vmem:[%s206 + $0x374] sm:$0xff]
      %v364 = vld [vmem:[%s206 + $0x37c] sm:$0xf]
      %v365 = vld [vmem:[%s206 + $0x380] sm:$0xff]
      %v366 = vld [vmem:[%s206 + $0x388] sm:$0xff]
      %v367 = vld [vmem:[%s206 + $0x390] sm:$0xff]
      %v368 = vld [vmem:[%s206 + $0x398] sm:$0xf]
      %v369 = vld [vmem:[%s206 + $0x39c] sm:$0xff]
      %v370 = vld [vmem:[%s206 + $0x3a4] sm:$0xff]
      %v371 = vld [vmem:[%s206 + $0x3ac] sm:$0xff]
      %v372 = vld [vmem:[%s206 + $0x3b4] sm:$0xf]
      %v373 = vld [vmem:[%s206 + $0x3b8] sm:$0xff]
      %v374 = vld [vmem:[%s206 + $0x3c0] sm:$0xff]
      %v375 = vld [vmem:[%s206 + $0x3c8] sm:$0xff]
      %v376 = vld [vmem:[%s206 + $0x3d0] sm:$0xf]
      %v377 = vld [vmem:[%s206 + $0x3d4] sm:$0xff]
      %v378 = vld [vmem:[%s206 + $0x3dc] sm:$0xff]
      %v379 = vld [vmem:[%s206 + $0x3e4] sm:$0xff]
      %v380 = vld [vmem:[%s206 + $0x3ec] sm:$0xf]
      %v381 = vld [vmem:[%s206 + $0x3f0] sm:$0xff]
      %v382 = vld [vmem:[%s206 + $0x3f8] sm:$0xff]
      %v383 = vld [vmem:[%s206 + $0x400] sm:$0xff]
      %v384 = vld [vmem:[%s206 + $0x408] sm:$0xf]
      %v385 = vld [vmem:[%s206 + $0x40c] sm:$0xff]
      %v386 = vld [vmem:[%s206 + $0x414] sm:$0xff]
      %v387 = vld [vmem:[%s206 + $0x41c] sm:$0xff]
      %v388 = vld [vmem:[%s206 + $0x424] sm:$0xf]
      %v389 = vld [vmem:[%s206 + $0x428] sm:$0xff]
      %v390 = vld [vmem:[%s206 + $0x430] sm:$0xff]
      %v391 = vld [vmem:[%s206 + $0x438] sm:$0xff]
      %v392 = vld [vmem:[%s206 + $0x440] sm:$0xf]
      %v393 = vld [vmem:[%s206 + $0x444] sm:$0xff]
      %v394 = vld [vmem:[%s206 + $0x44c] sm:$0xff]
      %v395 = vld [vmem:[%s206 + $0x454] sm:$0xff]
      %v396 = vld [vmem:[%s206 + $0x45c] sm:$0xf]
      %v397 = vld [vmem:[%s206 + $0x460] sm:$0xff]
      %v398 = vld [vmem:[%s206 + $0x468] sm:$0xff]
      %v399 = vld [vmem:[%s206 + $0x470] sm:$0xff]
      %v400 = vld [vmem:[%s206 + $0x478] sm:$0xf]
      %v401 = vld [vmem:[%s206 + $0x47c] sm:$0xff]
      %v402 = vld [vmem:[%s206 + $0x484] sm:$0xff]
      %v403 = vld [vmem:[%s206 + $0x48c] sm:$0xff]
      %v404 = vld [vmem:[%s206 + $0x494] sm:$0xf]
      %v405 = vld [vmem:[%s206 + $0x498] sm:$0xff]
      %v406 = vld [vmem:[%s206 + $0x4a0] sm:$0xff]
      %v407 = vld [vmem:[%s206 + $0x4a8] sm:$0xff]
      %v408 = vld [vmem:[%s206 + $0x4b0] sm:$0xf]
      %v409 = vld [vmem:[%s206 + $0x4b4] sm:$0xff]
      %v410 = vld [vmem:[%s206 + $0x4bc] sm:$0xff]
      %v411 = vld [vmem:[%s206 + $0x4c4] sm:$0xff]
      %v412 = vld [vmem:[%s206 + $0x4cc] sm:$0xf]
      %v413 = vld [vmem:[%s206 + $0x4d0] sm:$0xff]
      %v414 = vld [vmem:[%s206 + $0x4d8] sm:$0xff]
      %v415 = vld [vmem:[%s206 + $0x4e0] sm:$0xff]
      %v416 = vld [vmem:[%s206 + $0x4e8] sm:$0xf]
      %v417 = vld [vmem:[%s206 + $0x4ec] sm:$0xff]
      %v418 = vld [vmem:[%s206 + $0x4f4] sm:$0xff]
      %v419 = vld [vmem:[%s206 + $0x4fc] sm:$0xff]
      %v420 = vld [vmem:[%s206 + $0x504] sm:$0xf]
      %v421 = vld [vmem:[%s206 + $0x508] sm:$0xff]
      %v422 = vld [vmem:[%s206 + $0x510] sm:$0xff]
      %v423 = vld [vmem:[%s206 + $0x518] sm:$0xff]
      %v424 = vld [vmem:[%s206 + $0x520] sm:$0xf]
      %v425 = vld [vmem:[%s206 + $0x524] sm:$0xff]
      %v426 = vld [vmem:[%s206 + $0x52c] sm:$0xff]
      %v427 = vld [vmem:[%s206 + $0x534] sm:$0xff]
      %v428 = vld [vmem:[%s206 + $0x53c] sm:$0xf]
      %v429 = vld [vmem:[%s206 + $0x540] sm:$0xff]
      %v430 = vld [vmem:[%s206 + $0x548] sm:$0xff]
      %v431 = vld [vmem:[%s206 + $0x550] sm:$0xff]
      %v432 = vld [vmem:[%s206 + $0x558] sm:$0xf]
      %v433 = vld [vmem:[%s206 + $0x55c] sm:$0xff]
      %v434 = vld [vmem:[%s206 + $0x564] sm:$0xff]
      %v435 = vld [vmem:[%s206 + $0x56c] sm:$0xff]
      %v436 = vld [vmem:[%s206 + $0x574] sm:$0xf]
      %v437 = vld [vmem:[%s206 + $0x578] sm:$0xff]
      %v438 = vld [vmem:[%s206 + $0x580] sm:$0xff]
      %v439 = vld [vmem:[%s206 + $0x588] sm:$0xff]
      %v440 = vld [vmem:[%s206 + $0x590] sm:$0xf]
      %v441 = vld [vmem:[%s206 + $0x594] sm:$0xff]
      %v442 = vld [vmem:[%s206 + $0x59c] sm:$0xff]
      %v443 = vld [vmem:[%s206 + $0x5a4] sm:$0xff]
      %v444 = vld [vmem:[%s206 + $0x5ac] sm:$0xf]
      %v445 = vld [vmem:[%s206 + $0x5b0] sm:$0xff]
      %v446 = vld [vmem:[%s206 + $0x5b8] sm:$0xff]
      %v447 = vld [vmem:[%s206 + $0x5c0] sm:$0xff]
      %v448 = vld [vmem:[%s206 + $0x5c8] sm:$0xf]
      %v449 = vld [vmem:[%s206 + $0x5cc] sm:$0xff]
      %v450 = vld [vmem:[%s206 + $0x5d4] sm:$0xff]
      %v451 = vld [vmem:[%s206 + $0x5dc] sm:$0xff]
      %v452 = vld [vmem:[%s206 + $0x5e4] sm:$0xf]
      %v453 = vld [vmem:[%s206 + $0x5e8] sm:$0xff]
      %v454 = vld [vmem:[%s206 + $0x5f0] sm:$0xff]
      %v455 = vld [vmem:[%s206 + $0x5f8] sm:$0xff]
      %v456 = vld [vmem:[%s206 + $0x600] sm:$0xf]
      %v457 = vld [vmem:[%s206 + $0x604] sm:$0xff]
      %v458 = vld [vmem:[%s206 + $0x60c] sm:$0xff]
      %v459 = vld [vmem:[%s206 + $0x614] sm:$0xff]
      %v460 = vld [vmem:[%s206 + $0x61c] sm:$0xf]
      %v461 = vld [vmem:[%s206 + $0x620] sm:$0xff]
      %v462 = vld [vmem:[%s206 + $0x628] sm:$0xff]
      %v463 = vld [vmem:[%s206 + $0x630] sm:$0xff]
      %v464 = vld [vmem:[%s206 + $0x638] sm:$0xf]
      %v465 = vld [vmem:[%s206 + $0x63c] sm:$0xff]
      %v466 = vld [vmem:[%s206 + $0x644] sm:$0xff]
      %v467 = vld [vmem:[%s206 + $0x64c] sm:$0xff]
      %v468 = vld [vmem:[%s206 + $0x654] sm:$0xf]
      %v469 = vld [vmem:[%s206 + $0x658] sm:$0xff]
      %v470 = vld [vmem:[%s206 + $0x660] sm:$0xff]
      %v471 = vld [vmem:[%s206 + $0x668] sm:$0xff]
      %v472 = vld [vmem:[%s206 + $0x670] sm:$0xf]
      %v473 = vld [vmem:[%s206 + $0x674] sm:$0xff]
      %v474 = vld [vmem:[%s206 + $0x67c] sm:$0xff]
      %v475 = vld [vmem:[%s206 + $0x684] sm:$0xff]
      %v476 = vld [vmem:[%s206 + $0x68c] sm:$0xf]
      %v477 = vld [vmem:[%s206 + $0x690] sm:$0xff]
      %v478 = vld [vmem:[%s206 + $0x698] sm:$0xff]
      %v479 = vld [vmem:[%s206 + $0x6a0] sm:$0xff]
      %v480 = vld [vmem:[%s206 + $0x6a8] sm:$0xf]
      %v481 = vld [vmem:[%s206 + $0x6ac] sm:$0xff]
      %v482 = vld [vmem:[%s206 + $0x6b4] sm:$0xff]
      %v483 = vld [vmem:[%s206 + $0x6bc] sm:$0xff]
      %v484 = vld [vmem:[%s206 + $0x6c4] sm:$0xf]
      %v485 = vld [vmem:[%s206 + $0x6c8] sm:$0xff]
      %v486 = vld [vmem:[%s206 + $0x6d0] sm:$0xff]
      %v487 = vld [vmem:[%s206 + $0x6d8] sm:$0xff]
      %v488 = vld [vmem:[%s206 + $0x6e0] sm:$0xf]
      %v489 = vld [vmem:[%s206 + $0x6e4] sm:$0xff]
      %v490 = vld [vmem:[%s206 + $0x6ec] sm:$0xff]
      %v491 = vld [vmem:[%s206 + $0x6f4] sm:$0xff]
      %v492 = vld [vmem:[%s206 + $0x6fc] sm:$0xf]
      %v493 = vld [vmem:[%s206 + $0x700] sm:$0xff]
      %v494 = vld [vmem:[%s206 + $0x708] sm:$0xff]
      %v495 = vld [vmem:[%s206 + $0x710] sm:$0xff]
      %v496 = vld [vmem:[%s206 + $0x718] sm:$0xf]
      %v497 = vld [vmem:[%s206 + $0x71c] sm:$0xff]
      %v498 = vld [vmem:[%s206 + $0x724] sm:$0xff]
      %v499 = vld [vmem:[%s206 + $0x72c] sm:$0xff]
      %v500 = vld [vmem:[%s206 + $0x734] sm:$0xf]
      %v501 = vld [vmem:[%s206 + $0x738] sm:$0xff]
      %v502 = vld [vmem:[%s206 + $0x740] sm:$0xff]
      %v503 = vld [vmem:[%s206 + $0x748] sm:$0xff]
      %v504 = vld [vmem:[%s206 + $0x750] sm:$0xf]
      %v505 = vld [vmem:[%s206 + $0x754] sm:$0xff]
      %v506 = vld [vmem:[%s206 + $0x75c] sm:$0xff]
      %v507 = vld [vmem:[%s206 + $0x764] sm:$0xff]
      %v508 = vld [vmem:[%s206 + $0x76c] sm:$0xf]
      %v509 = vld [vmem:[%s206 + $0x770] sm:$0xff]
      %v510 = vld [vmem:[%s206 + $0x778] sm:$0xff]
      %v511 = vld [vmem:[%s206 + $0x780] sm:$0xff]
      %v512 = vld [vmem:[%s206 + $0x788] sm:$0xf]
      %v513 = vld [vmem:[%s206 + $0x78c] sm:$0xff]
      %v514 = vld [vmem:[%s206 + $0x794] sm:$0xff]
      %v515 = vld [vmem:[%s206 + $0x79c] sm:$0xff]
      %v516 = vld [vmem:[%s206 + $0x7a4] sm:$0xf]
      %v517 = vld [vmem:[%s206 + $0x7a8] sm:$0xff]
      %v518 = vld [vmem:[%s206 + $0x7b0] sm:$0xff]
      %v519 = vld [vmem:[%s206 + $0x7b8] sm:$0xff]
      %v520 = vld [vmem:[%s206 + $0x7c0] sm:$0xf]
      %v521 = vld [vmem:[%s206 + $0x7c4] sm:$0xff]
      %v522 = vld [vmem:[%s206 + $0x7cc] sm:$0xff]
      %v523 = vld [vmem:[%s206 + $0x7d4] sm:$0xff]
      %v524 = vld [vmem:[%s206 + $0x7dc] sm:$0xf]
      %v525 = vld [vmem:[%s206 + $0x7e0] sm:$0xff]
      %v526 = vld [vmem:[%s206 + $0x7e8] sm:$0xff]
      %v527 = vld [vmem:[%s206 + $0x7f0] sm:$0xff]
      %v528 = vld [vmem:[%s206 + $0x7f8] sm:$0xf]
      %v529 = vld [vmem:[%s206 + $0x7fc] sm:$0xff]
      %v530 = vld [vmem:[%s206 + $0x804] sm:$0xff]
      %v531 = vld [vmem:[%s206 + $0x80c] sm:$0xff]
      %v532 = vld [vmem:[%s206 + $0x814] sm:$0xf]
      %v533 = vld [vmem:[%s206 + $0x818] sm:$0xff]
      %v534 = vld [vmem:[%s206 + $0x820] sm:$0xff]
      %v535 = vld [vmem:[%s206 + $0x828] sm:$0xff]
      %v536 = vld [vmem:[%s206 + $0x830] sm:$0xf]
      %v537 = vld [vmem:[%s206 + $0x834] sm:$0xff]
      %v538 = vld [vmem:[%s206 + $0x83c] sm:$0xff]
      %v539 = vld [vmem:[%s206 + $0x844] sm:$0xff]
      %v540 = vld [vmem:[%s206 + $0x84c] sm:$0xf]
      %v541 = vld [vmem:[%s206 + $0x850] sm:$0xff]
      %v542 = vld [vmem:[%s206 + $0x858] sm:$0xff]
      %v543 = vld [vmem:[%s206 + $0x860] sm:$0xff]
      %v544 = vld [vmem:[%s206 + $0x868] sm:$0xf]
      %v545 = vld [vmem:[%s206 + $0x86c] sm:$0xff]
      %v546 = vld [vmem:[%s206 + $0x874] sm:$0xff]
      %v547 = vld [vmem:[%s206 + $0x87c] sm:$0xff]
      %v548 = vld [vmem:[%s206 + $0x884] sm:$0xf]
      %v549 = vld [vmem:[%s206 + $0x888] sm:$0xff]
      %v550 = vld [vmem:[%s206 + $0x890] sm:$0xff]
      %v551 = vld [vmem:[%s206 + $0x898] sm:$0xff]
      %v552 = vld [vmem:[%s206 + $0x8a0] sm:$0xf]
      %v553 = vld [vmem:[%s206 + $0x8a4] sm:$0xff]
      %v554 = vld [vmem:[%s206 + $0x8ac] sm:$0xff]
      %v555 = vld [vmem:[%s206 + $0x8b4] sm:$0xff]
      %v556 = vld [vmem:[%s206 + $0x8bc] sm:$0xf]
      %v557 = vld [vmem:[%s206 + $0x8c0] sm:$0xff]
      %v558 = vld [vmem:[%s206 + $0x8c8] sm:$0xff]
      %v559 = vld [vmem:[%s206 + $0x8d0] sm:$0xff]
      %v560 = vld [vmem:[%s206 + $0x8d8] sm:$0xf]
      %v561 = vld [vmem:[%s206 + $0x8dc] sm:$0xff]
      %v562 = vld [vmem:[%s206 + $0x8e4] sm:$0xff]
      %v563 = vld [vmem:[%s206 + $0x8ec] sm:$0xff]
      %v564 = vld [vmem:[%s206 + $0x8f4] sm:$0xf]
      %v565 = vld [vmem:[%s206 + $0x8f8] sm:$0xff]
      %v566 = vld [vmem:[%s206 + $0x900] sm:$0xff]
      %v567 = vld [vmem:[%s206 + $0x908] sm:$0xff]
      %v568 = vld [vmem:[%s206 + $0x910] sm:$0xf]
      %v569 = vld [vmem:[%s206 + $0x914] sm:$0xff]
      %v570 = vld [vmem:[%s206 + $0x91c] sm:$0xff]
      %v571 = vld [vmem:[%s206 + $0x924] sm:$0xff]
      %v572 = vld [vmem:[%s206 + $0x92c] sm:$0xf]
      %v573 = vld [vmem:[%s206 + $0x930] sm:$0xff]
      %v574 = vld [vmem:[%s206 + $0x938] sm:$0xff]
      %v575 = vld [vmem:[%s206 + $0x940] sm:$0xff]
      %v576 = vld [vmem:[%s206 + $0x948] sm:$0xf]
      %v577 = vld [vmem:[%s206 + $0x94c] sm:$0xff]
      %v578 = vld [vmem:[%s206 + $0x954] sm:$0xff]
      %v579 = vld [vmem:[%s206 + $0x95c] sm:$0xff]
      %v580 = vld [vmem:[%s206 + $0x964] sm:$0xf]
      %v581 = vld [vmem:[%s206 + $0x968] sm:$0xff]
      %v582 = vld [vmem:[%s206 + $0x970] sm:$0xff]
      %v583 = vld [vmem:[%s206 + $0x978] sm:$0xff]
      %v584 = vld [vmem:[%s206 + $0x980] sm:$0xf]
      %v585 = vld [vmem:[%s206 + $0x984] sm:$0xff]
      %v586 = vld [vmem:[%s206 + $0x98c] sm:$0xff]
      %v587 = vld [vmem:[%s206 + $0x994] sm:$0xff]
      %v588 = vld [vmem:[%s206 + $0x99c] sm:$0xf]
      %v589 = vld [vmem:[%s206 + $0x9a0] sm:$0xff]
      %v590 = vld [vmem:[%s206 + $0x9a8] sm:$0xff]
      %v591 = vld [vmem:[%s206 + $0x9b0] sm:$0xff]
      %v592 = vld [vmem:[%s206 + $0x9b8] sm:$0xf]
      %v593 = vld [vmem:[%s206 + $0x9bc] sm:$0xff]
      %v594 = vld [vmem:[%s206 + $0x9c4] sm:$0xff]
      %v595 = vld [vmem:[%s206 + $0x9cc] sm:$0xff]
      %v596 = vld [vmem:[%s206 + $0x9d4] sm:$0xf]
      %v597 = vld [vmem:[%s206 + $0x9d8] sm:$0xff]
      %v598 = vld [vmem:[%s206 + $0x9e0] sm:$0xff]
      %v599 = vld [vmem:[%s206 + $0x9e8] sm:$0xff]
      %v600 = vld [vmem:[%s206 + $0x9f0] sm:$0xf]
      %v601 = vld [vmem:[%s206 + $0x9f4] sm:$0xff]
      %v602 = vld [vmem:[%s206 + $0x9fc] sm:$0xff]
      %v603 = vld [vmem:[%s206 + $0xa04] sm:$0xff]
      %v604 = vld [vmem:[%s206 + $0xa0c] sm:$0xf]
      %v605 = vld [vmem:[%s206 + $0xa10] sm:$0xff]
      %v606 = vld [vmem:[%s206 + $0xa18] sm:$0xff]
      %v607 = vld [vmem:[%s206 + $0xa20] sm:$0xff]
      %v608 = vld [vmem:[%s206 + $0xa28] sm:$0xf]
      %v609 = vld [vmem:[%s206 + $0xa2c] sm:$0xff]
      %v610 = vld [vmem:[%s206 + $0xa34] sm:$0xff]
      %v611 = vld [vmem:[%s206 + $0xa3c] sm:$0xff]
      %v612 = vld [vmem:[%s206 + $0xa44] sm:$0xf]
      %v613 = vld [vmem:[%s206 + $0xa48] sm:$0xff]
      %v614 = vld [vmem:[%s206 + $0xa50] sm:$0xff]
      %v615 = vld [vmem:[%s206 + $0xa58] sm:$0xff]
      %v616 = vld [vmem:[%s206 + $0xa60] sm:$0xf]
      %v617 = vld [vmem:[%s206 + $0xa64] sm:$0xff]
      %v618 = vld [vmem:[%s206 + $0xa6c] sm:$0xff]
      %v619 = vld [vmem:[%s206 + $0xa74] sm:$0xff]
      %v620 = vld [vmem:[%s206 + $0xa7c] sm:$0xf]
      %v621 = vld [vmem:[%s206 + $0xa80] sm:$0xff]
      %v622 = vld [vmem:[%s206 + $0xa88] sm:$0xff]
      %v623 = vld [vmem:[%s206 + $0xa90] sm:$0xff]
      %v624 = vld [vmem:[%s206 + $0xa98] sm:$0xf]
      %v625 = vld [vmem:[%s206 + $0xa9c] sm:$0xff]
      %v626 = vld [vmem:[%s206 + $0xaa4] sm:$0xff]
      %v627 = vld [vmem:[%s206 + $0xaac] sm:$0xff]
      %v628 = vld [vmem:[%s206 + $0xab4] sm:$0xf]
      %v629 = vld [vmem:[%s206 + $0xab8] sm:$0xff]
      %v630 = vld [vmem:[%s206 + $0xac0] sm:$0xff]
      %v631 = vld [vmem:[%s206 + $0xac8] sm:$0xff]
      %v632 = vld [vmem:[%s206 + $0xad0] sm:$0xf]
      %v633 = vld [vmem:[%s206 + $0xad4] sm:$0xff]
      %v634 = vld [vmem:[%s206 + $0xadc] sm:$0xff]
      %v635 = vld [vmem:[%s206 + $0xae4] sm:$0xff]
      %v636 = vld [vmem:[%s206 + $0xaec] sm:$0xf]
      %v637 = vld [vmem:[%s206 + $0xaf0] sm:$0xff]
      %v638 = vld [vmem:[%s206 + $0xaf8] sm:$0xff]
      %v639 = vld [vmem:[%s206 + $0xb00] sm:$0xff]
      %v640 = vld [vmem:[%s206 + $0xb08] sm:$0xf]
      %v641 = vld [vmem:[%s206 + $0xb0c] sm:$0xff]
      %v642 = vld [vmem:[%s206 + $0xb14] sm:$0xff]
      %v643 = vld [vmem:[%s206 + $0xb1c] sm:$0xff]
      %v644 = vld [vmem:[%s206 + $0xb24] sm:$0xf]
      %v645 = vld [vmem:[%s206 + $0xb28] sm:$0xff]
      %v646 = vld [vmem:[%s206 + $0xb30] sm:$0xff]
      %v647 = vld [vmem:[%s206 + $0xb38] sm:$0xff]
      %v648 = vld [vmem:[%s206 + $0xb40] sm:$0xf]
      %v649 = vld [vmem:[%s206 + $0xb44] sm:$0xff]
      %v650 = vld [vmem:[%s206 + $0xb4c] sm:$0xff]
      %v651 = vld [vmem:[%s206 + $0xb54] sm:$0xff]
      %v652 = vld [vmem:[%s206 + $0xb5c] sm:$0xf]
      %v653 = vld [vmem:[%s206 + $0xb60] sm:$0xff]
      %v654 = vld [vmem:[%s206 + $0xb68] sm:$0xff]
      %v655 = vld [vmem:[%s206 + $0xb70] sm:$0xff]
      %v656 = vld [vmem:[%s206 + $0xb78] sm:$0xf]
      %v657 = vld [vmem:[%s206 + $0xb7c] sm:$0xff]
      %v658 = vld [vmem:[%s206 + $0xb84] sm:$0xff]
      %v659 = vld [vmem:[%s206 + $0xb8c] sm:$0xff]
      %v660 = vld [vmem:[%s206 + $0xb94] sm:$0xf]
      %v661 = vld [vmem:[%s206 + $0xb98] sm:$0xff]
      %v662 = vld [vmem:[%s206 + $0xba0] sm:$0xff]
      %v663 = vld [vmem:[%s206 + $0xba8] sm:$0xff]
      %v664 = vld [vmem:[%s206 + $0xbb0] sm:$0xf]
      %v665 = vld [vmem:[%s206 + $0xbb4] sm:$0xff]
      %v666 = vld [vmem:[%s206 + $0xbbc] sm:$0xff]
      %v667 = vld [vmem:[%s206 + $0xbc4] sm:$0xff]
      %v668 = vld [vmem:[%s206 + $0xbcc] sm:$0xf]
      %v669 = vld [vmem:[%s206 + $0xbd0] sm:$0xff]
      %v670 = vld [vmem:[%s206 + $0xbd8] sm:$0xff]
      %v671 = vld [vmem:[%s206 + $0xbe0] sm:$0xff]
      %v672 = vld [vmem:[%s206 + $0xbe8] sm:$0xf]
      %v673 = vld [vmem:[%s206 + $0xbec] sm:$0xff]
      %v674 = vld [vmem:[%s206 + $0xbf4] sm:$0xff]
      %v675 = vld [vmem:[%s206 + $0xbfc] sm:$0xff]
      %v676 = vld [vmem:[%s206 + $0xc04] sm:$0xf]
      %v677 = vld [vmem:[%s206 + $0xc08] sm:$0xff]
      %v678 = vld [vmem:[%s206 + $0xc10] sm:$0xff]
      %v679 = vld [vmem:[%s206 + $0xc18] sm:$0xff]
      %v680 = vld [vmem:[%s206 + $0xc20] sm:$0xf]
      %v681 = vld [vmem:[%s206 + $0xc24] sm:$0xff]
      %v682 = vld [vmem:[%s206 + $0xc2c] sm:$0xff]
      %v683 = vld [vmem:[%s206 + $0xc34] sm:$0xff]
      %v684 = vld [vmem:[%s206 + $0xc3c] sm:$0xf]
      %v685 = vld [vmem:[%s206 + $0xc40] sm:$0xff]
      %v686 = vld [vmem:[%s206 + $0xc48] sm:$0xff]
      %v687 = vld [vmem:[%s206 + $0xc50] sm:$0xff]
      %v688 = vld [vmem:[%s206 + $0xc58] sm:$0xf]
      %v689 = vld [vmem:[%s206 + $0xc5c] sm:$0xff]
      %v690 = vld [vmem:[%s206 + $0xc64] sm:$0xff]
      %v691 = vld [vmem:[%s206 + $0xc6c] sm:$0xff]
      %v692 = vld [vmem:[%s206 + $0xc74] sm:$0xf]
      %v693 = vld [vmem:[%s206 + $0xc78] sm:$0xff]
      %v694 = vld [vmem:[%s206 + $0xc80] sm:$0xff]
      %v695 = vld [vmem:[%s206 + $0xc88] sm:$0xff]
      %v696 = vld [vmem:[%s206 + $0xc90] sm:$0xf]
      %v697 = vld [vmem:[%s206 + $0xc94] sm:$0xff]
      %v698 = vld [vmem:[%s206 + $0xc9c] sm:$0xff]
      %v699 = vld [vmem:[%s206 + $0xca4] sm:$0xff]
      %v700 = vld [vmem:[%s206 + $0xcac] sm:$0xf]
      %v701 = vld [vmem:[%s206 + $0xcb0] sm:$0xff]
      %v702 = vld [vmem:[%s206 + $0xcb8] sm:$0xff]
      %v703 = vld [vmem:[%s206 + $0xcc0] sm:$0xff]
      %v704 = vld [vmem:[%s206 + $0xcc8] sm:$0xf]
      %v705 = vld [vmem:[%s206 + $0xccc] sm:$0xff]
      %v706 = vld [vmem:[%s206 + $0xcd4] sm:$0xff]
      %v707 = vld [vmem:[%s206 + $0xcdc] sm:$0xff]
      %v708 = vld [vmem:[%s206 + $0xce4] sm:$0xf]
      %v709 = vld [vmem:[%s206 + $0xce8] sm:$0xff]
      %v710 = vld [vmem:[%s206 + $0xcf0] sm:$0xff]
      %v711 = vld [vmem:[%s206 + $0xcf8] sm:$0xff]
      %v712 = vld [vmem:[%s206 + $0xd00] sm:$0xf]
      %v713 = vld [vmem:[%s206 + $0xd04] sm:$0xff]
      %v714 = vld [vmem:[%s206 + $0xd0c] sm:$0xff]
      %v715 = vld [vmem:[%s206 + $0xd14] sm:$0xff]
      %v716 = vld [vmem:[%s206 + $0xd1c] sm:$0xf]
      %v717 = vld [vmem:[%s206 + $0xd20] sm:$0xff]
      %v718 = vld [vmem:[%s206 + $0xd28] sm:$0xff]
      %v719 = vld [vmem:[%s206 + $0xd30] sm:$0xff]
      %v720 = vld [vmem:[%s206 + $0xd38] sm:$0xf]
      %v721 = vld [vmem:[%s206 + $0xd3c] sm:$0xff]
      %v722 = vld [vmem:[%s206 + $0xd44] sm:$0xff]
      %v723 = vld [vmem:[%s206 + $0xd4c] sm:$0xff]
      %v724 = vld [vmem:[%s206 + $0xd54] sm:$0xf]
      %v725 = vld [vmem:[%s206 + $0xd58] sm:$0xff]
      %v726 = vld [vmem:[%s206 + $0xd60] sm:$0xff]
      %v727 = vld [vmem:[%s206 + $0xd68] sm:$0xff]
      %v728 = vld [vmem:[%s206 + $0xd70] sm:$0xf]
      %v729 = vld [vmem:[%s206 + $0xd74] sm:$0xff]
      %v730 = vld [vmem:[%s206 + $0xd7c] sm:$0xff]
      %v731 = vld [vmem:[%s206 + $0xd84] sm:$0xff]
      %v732 = vld [vmem:[%s206 + $0xd8c] sm:$0xf]
      %v733 = vld [vmem:[%s206 + $0xd90] sm:$0xff]
      %v734 = vld [vmem:[%s206 + $0xd98] sm:$0xff]
      %v735 = vld [vmem:[%s206 + $0xda0] sm:$0xff]
      %v736 = vld [vmem:[%s206 + $0xda8] sm:$0xf]
      %v737 = vld [vmem:[%s206 + $0xdac] sm:$0xff]
      %v738 = vld [vmem:[%s206 + $0xdb4] sm:$0xff]
      %v739 = vld [vmem:[%s206 + $0xdbc] sm:$0xff]
      %v740 = vld [vmem:[%s206 + $0xdc4] sm:$0xf]
      %v741 = vld [vmem:[%s206 + $0xdc8] sm:$0xff]
      %v742 = vld [vmem:[%s206 + $0xdd0] sm:$0xff]
      %v743 = vld [vmem:[%s206 + $0xdd8] sm:$0xff]
      %v744 = vld [vmem:[%s206 + $0xde0] sm:$0xf]
      %v745 = vld [vmem:[%s206 + $0xde4] sm:$0xff]
      %v746 = vld [vmem:[%s206 + $0xdec] sm:$0xff]
      %v747 = vld [vmem:[%s206 + $0xdf4] sm:$0xff]
      %v748 = vld [vmem:[%s206 + $0xdfc] sm:$0xf]
      %v749 = vld [vmem:[%s213] sm:$0xff]
      %v751 = vperm.slane %v749, 0
      %v752 = vperm.slane %v749, 1
      %v753 = vperm.slane %v749, 2
      %v754 = vperm.slane %v749, 3
      %v755 = vperm.slane %v749, 4
      %v756 = vperm.slane %v749, 5
      %v757 = vperm.slane %v749, 6
      %v758 = vperm.slane %v749, 7
      %v771 = vunpack.c.l.b16 %v233
      %v772 = vunpack.c.h.b16 %v233
      %v773 = vunpack.c.l.b16 %v234
      %v774 = vunpack.c.h.b16 %v234
      %v775 = vunpack.c.l.b16 %v235
      %v776 = vunpack.c.h.b16 %v235
      %v777 = vunpack.c.l.b16 %v236
      %v778 = vpack.c.b16 %v771, %v771
      %v779 = vpack.c.b16 %v772, %v772
      %v780 = vpack.c.b16 %v773, %v773
      %v781 = vpack.c.b16 %v774, %v774
      %v782 = vpack.c.b16 %v775, %v775
      %v783 = vpack.c.b16 %v776, %v776
      %v784 = vpack.c.b16 %v777, %v777
      %v1303 = vunpack.c.l.b16 %v237
      %v1304 = vunpack.c.h.b16 %v237
      %v1305 = vunpack.c.l.b16 %v238
      %v1306 = vunpack.c.h.b16 %v238
      %v1307 = vunpack.c.l.b16 %v239
      %v1308 = vunpack.c.h.b16 %v239
      %v1309 = vunpack.c.l.b16 %v240
      %v1310 = vunpack.c.l.b16 %v241
      %v1311 = vunpack.c.h.b16 %v241
      %v1312 = vunpack.c.l.b16 %v242
      %v1313 = vunpack.c.h.b16 %v242
      %v1314 = vunpack.c.l.b16 %v243
      %v1315 = vunpack.c.h.b16 %v243
      %v1316 = vunpack.c.l.b16 %v244
      %v1317 = vunpack.c.l.b16 %v245
      %v1318 = vunpack.c.h.b16 %v245
      %v1319 = vunpack.c.l.b16 %v246
      %v1320 = vunpack.c.h.b16 %v246
      %v1321 = vunpack.c.l.b16 %v247
      %v1322 = vunpack.c.h.b16 %v247
      %v1323 = vunpack.c.l.b16 %v248
      %v1324 = vunpack.c.l.b16 %v249
      %v1325 = vunpack.c.h.b16 %v249
      %v1326 = vunpack.c.l.b16 %v250
      %v1327 = vunpack.c.h.b16 %v250
      %v1328 = vunpack.c.l.b16 %v251
      %v1329 = vunpack.c.h.b16 %v251
      %v1330 = vunpack.c.l.b16 %v252
      %v1331 = vunpack.c.l.b16 %v253
      %v1332 = vunpack.c.h.b16 %v253
      %v1333 = vunpack.c.l.b16 %v254
      %v1334 = vunpack.c.h.b16 %v254
      %v1335 = vunpack.c.l.b16 %v255
      %v1336 = vunpack.c.h.b16 %v255
      %v1337 = vunpack.c.l.b16 %v256
      %v1338 = vunpack.c.l.b16 %v257
      %v1339 = vunpack.c.h.b16 %v257
      %v1340 = vunpack.c.l.b16 %v258
      %v1341 = vunpack.c.h.b16 %v258
      %v1342 = vunpack.c.l.b16 %v259
      %v1343 = vunpack.c.h.b16 %v259
      %v1344 = vunpack.c.l.b16 %v260
      %v1345 = vunpack.c.l.b16 %v261
      %v1346 = vunpack.c.h.b16 %v261
      %v1347 = vunpack.c.l.b16 %v262
      %v1348 = vunpack.c.h.b16 %v262
      %v1349 = vunpack.c.l.b16 %v263
      %v1350 = vunpack.c.h.b16 %v263
      %v1351 = vunpack.c.l.b16 %v264
      %v1352 = vunpack.c.l.b16 %v265
      %v1353 = vunpack.c.h.b16 %v265
      %v1354 = vunpack.c.l.b16 %v266
      %v1355 = vunpack.c.h.b16 %v266
      %v1356 = vunpack.c.l.b16 %v267
      %v1357 = vunpack.c.h.b16 %v267
      %v1358 = vunpack.c.l.b16 %v268
      %v1359 = vunpack.c.l.b16 %v269
      %v1360 = vunpack.c.h.b16 %v269
      %v1361 = vunpack.c.l.b16 %v270
      %v1362 = vunpack.c.h.b16 %v270
      %v1363 = vunpack.c.l.b16 %v271
      %v1364 = vunpack.c.h.b16 %v271
      %v1365 = vunpack.c.l.b16 %v272
      %v1366 = vunpack.c.l.b16 %v273
      %v1367 = vunpack.c.h.b16 %v273
      %v1368 = vunpack.c.l.b16 %v274
      %v1369 = vunpack.c.h.b16 %v274
      %v1370 = vunpack.c.l.b16 %v275
      %v1371 = vunpack.c.h.b16 %v275
      %v1372 = vunpack.c.l.b16 %v276
      %v1373 = vunpack.c.l.b16 %v277
      %v1374 = vunpack.c.h.b16 %v277
      %v1375 = vunpack.c.l.b16 %v278
      %v1376 = vunpack.c.h.b16 %v278
      %v1377 = vunpack.c.l.b16 %v279
      %v1378 = vunpack.c.h.b16 %v279
      %v1379 = vunpack.c.l.b16 %v280
      %v1380 = vunpack.c.l.b16 %v281
      %v1381 = vunpack.c.h.b16 %v281
      %v1382 = vunpack.c.l.b16 %v282
      %v1383 = vunpack.c.h.b16 %v282
      %v1384 = vunpack.c.l.b16 %v283
      %v1385 = vunpack.c.h.b16 %v283
      %v1386 = vunpack.c.l.b16 %v284
      %v1387 = vunpack.c.l.b16 %v285
      %v1388 = vunpack.c.h.b16 %v285
      %v1389 = vunpack.c.l.b16 %v286
      %v1390 = vunpack.c.h.b16 %v286
      %v1391 = vunpack.c.l.b16 %v287
      %v1392 = vunpack.c.h.b16 %v287
      %v1393 = vunpack.c.l.b16 %v288
      %v1394 = vunpack.c.l.b16 %v289
      %v1395 = vunpack.c.h.b16 %v289
      %v1396 = vunpack.c.l.b16 %v290
      %v1397 = vunpack.c.h.b16 %v290
      %v1398 = vunpack.c.l.b16 %v291
      %v1399 = vunpack.c.h.b16 %v291
      %v1400 = vunpack.c.l.b16 %v292
      %v1401 = vunpack.c.l.b16 %v293
      %v1402 = vunpack.c.h.b16 %v293
      %v1403 = vunpack.c.l.b16 %v294
      %v1404 = vunpack.c.h.b16 %v294
      %v1405 = vunpack.c.l.b16 %v295
      %v1406 = vunpack.c.h.b16 %v295
      %v1407 = vunpack.c.l.b16 %v296
      %v1408 = vunpack.c.l.b16 %v297
      %v1409 = vunpack.c.h.b16 %v297
      %v1410 = vunpack.c.l.b16 %v298
      %v1411 = vunpack.c.h.b16 %v298
      %v1412 = vunpack.c.l.b16 %v299
      %v1413 = vunpack.c.h.b16 %v299
      %v1414 = vunpack.c.l.b16 %v300
      %v1415 = vunpack.c.l.b16 %v301
      %v1416 = vunpack.c.h.b16 %v301
      %v1417 = vunpack.c.l.b16 %v302
      %v1418 = vunpack.c.h.b16 %v302
      %v1419 = vunpack.c.l.b16 %v303
      %v1420 = vunpack.c.h.b16 %v303
      %v1421 = vunpack.c.l.b16 %v304
      %v1422 = vunpack.c.l.b16 %v305
      %v1423 = vunpack.c.h.b16 %v305
      %v1424 = vunpack.c.l.b16 %v306
      %v1425 = vunpack.c.h.b16 %v306
      %v1426 = vunpack.c.l.b16 %v307
      %v1427 = vunpack.c.h.b16 %v307
      %v1428 = vunpack.c.l.b16 %v308
      %v1429 = vunpack.c.l.b16 %v309
      %v1430 = vunpack.c.h.b16 %v309
      %v1431 = vunpack.c.l.b16 %v310
      %v1432 = vunpack.c.h.b16 %v310
      %v1433 = vunpack.c.l.b16 %v311
      %v1434 = vunpack.c.h.b16 %v311
      %v1435 = vunpack.c.l.b16 %v312
      %v1436 = vunpack.c.l.b16 %v313
      %v1437 = vunpack.c.h.b16 %v313
      %v1438 = vunpack.c.l.b16 %v314
      %v1439 = vunpack.c.h.b16 %v314
      %v1440 = vunpack.c.l.b16 %v315
      %v1441 = vunpack.c.h.b16 %v315
      %v1442 = vunpack.c.l.b16 %v316
      %v1443 = vunpack.c.l.b16 %v317
      %v1444 = vunpack.c.h.b16 %v317
      %v1445 = vunpack.c.l.b16 %v318
      %v1446 = vunpack.c.h.b16 %v318
      %v1447 = vunpack.c.l.b16 %v319
      %v1448 = vunpack.c.h.b16 %v319
      %v1449 = vunpack.c.l.b16 %v320
      %v1450 = vunpack.c.l.b16 %v321
      %v1451 = vunpack.c.h.b16 %v321
      %v1452 = vunpack.c.l.b16 %v322
      %v1453 = vunpack.c.h.b16 %v322
      %v1454 = vunpack.c.l.b16 %v323
      %v1455 = vunpack.c.h.b16 %v323
      %v1456 = vunpack.c.l.b16 %v324
      %v1457 = vunpack.c.l.b16 %v325
      %v1458 = vunpack.c.h.b16 %v325
      %v1459 = vunpack.c.l.b16 %v326
      %v1460 = vunpack.c.h.b16 %v326
      %v1461 = vunpack.c.l.b16 %v327
      %v1462 = vunpack.c.h.b16 %v327
      %v1463 = vunpack.c.l.b16 %v328
      %v1464 = vunpack.c.l.b16 %v329
      %v1465 = vunpack.c.h.b16 %v329
      %v1466 = vunpack.c.l.b16 %v330
      %v1467 = vunpack.c.h.b16 %v330
      %v1468 = vunpack.c.l.b16 %v331
      %v1469 = vunpack.c.h.b16 %v331
      %v1470 = vunpack.c.l.b16 %v332
      %v1471 = vunpack.c.l.b16 %v333
      %v1472 = vunpack.c.h.b16 %v333
      %v1473 = vunpack.c.l.b16 %v334
      %v1474 = vunpack.c.h.b16 %v334
      %v1475 = vunpack.c.l.b16 %v335
      %v1476 = vunpack.c.h.b16 %v335
      %v1477 = vunpack.c.l.b16 %v336
      %v1478 = vunpack.c.l.b16 %v337
      %v1479 = vunpack.c.h.b16 %v337
      %v1480 = vunpack.c.l.b16 %v338
      %v1481 = vunpack.c.h.b16 %v338
      %v1482 = vunpack.c.l.b16 %v339
      %v1483 = vunpack.c.h.b16 %v339
      %v1484 = vunpack.c.l.b16 %v340
      %v1485 = vunpack.c.l.b16 %v341
      %v1486 = vunpack.c.h.b16 %v341
      %v1487 = vunpack.c.l.b16 %v342
      %v1488 = vunpack.c.h.b16 %v342
      %v1489 = vunpack.c.l.b16 %v343
      %v1490 = vunpack.c.h.b16 %v343
      %v1491 = vunpack.c.l.b16 %v344
      %v1492 = vunpack.c.l.b16 %v345
      %v1493 = vunpack.c.h.b16 %v345
      %v1494 = vunpack.c.l.b16 %v346
      %v1495 = vunpack.c.h.b16 %v346
      %v1496 = vunpack.c.l.b16 %v347
      %v1497 = vunpack.c.h.b16 %v347
      %v1498 = vunpack.c.l.b16 %v348
      %v1499 = vunpack.c.l.b16 %v349
      %v1500 = vunpack.c.h.b16 %v349
      %v1501 = vunpack.c.l.b16 %v350
      %v1502 = vunpack.c.h.b16 %v350
      %v1503 = vunpack.c.l.b16 %v351
      %v1504 = vunpack.c.h.b16 %v351
      %v1505 = vunpack.c.l.b16 %v352
      %v1506 = vunpack.c.l.b16 %v353
      %v1507 = vunpack.c.h.b16 %v353
      %v1508 = vunpack.c.l.b16 %v354
      %v1509 = vunpack.c.h.b16 %v354
      %v1510 = vunpack.c.l.b16 %v355
      %v1511 = vunpack.c.h.b16 %v355
      %v1512 = vunpack.c.l.b16 %v356
      %v1513 = vunpack.c.l.b16 %v357
      %v1514 = vunpack.c.h.b16 %v357
      %v1515 = vunpack.c.l.b16 %v358
      %v1516 = vunpack.c.h.b16 %v358
      %v1517 = vunpack.c.l.b16 %v359
      %v1518 = vunpack.c.h.b16 %v359
      %v1519 = vunpack.c.l.b16 %v360
      %v1520 = vunpack.c.l.b16 %v361
      %v1521 = vunpack.c.h.b16 %v361
      %v1522 = vunpack.c.l.b16 %v362
      %v1523 = vunpack.c.h.b16 %v362
      %v1524 = vunpack.c.l.b16 %v363
      %v1525 = vunpack.c.h.b16 %v363
      %v1526 = vunpack.c.l.b16 %v364
      %v1527 = vunpack.c.l.b16 %v365
      %v1528 = vunpack.c.h.b16 %v365
      %v1529 = vunpack.c.l.b16 %v366
      %v1530 = vunpack.c.h.b16 %v366
      %v1531 = vunpack.c.l.b16 %v367
      %v1532 = vunpack.c.h.b16 %v367
      %v1533 = vunpack.c.l.b16 %v368
      %v1534 = vunpack.c.l.b16 %v369
      %v1535 = vunpack.c.h.b16 %v369
      %v1536 = vunpack.c.l.b16 %v370
      %v1537 = vunpack.c.h.b16 %v370
      %v1538 = vunpack.c.l.b16 %v371
      %v1539 = vunpack.c.h.b16 %v371
      %v1540 = vunpack.c.l.b16 %v372
      %v1541 = vunpack.c.l.b16 %v373
      %v1542 = vunpack.c.h.b16 %v373
      %v1543 = vunpack.c.l.b16 %v374
      %v1544 = vunpack.c.h.b16 %v374
      %v1545 = vunpack.c.l.b16 %v375
      %v1546 = vunpack.c.h.b16 %v375
      %v1547 = vunpack.c.l.b16 %v376
      %v1548 = vunpack.c.l.b16 %v377
      %v1549 = vunpack.c.h.b16 %v377
      %v1550 = vunpack.c.l.b16 %v378
      %v1551 = vunpack.c.h.b16 %v378
      %v1552 = vunpack.c.l.b16 %v379
      %v1553 = vunpack.c.h.b16 %v379
      %v1554 = vunpack.c.l.b16 %v380
      %v1555 = vunpack.c.l.b16 %v381
      %v1556 = vunpack.c.h.b16 %v381
      %v1557 = vunpack.c.l.b16 %v382
      %v1558 = vunpack.c.h.b16 %v382
      %v1559 = vunpack.c.l.b16 %v383
      %v1560 = vunpack.c.h.b16 %v383
      %v1561 = vunpack.c.l.b16 %v384
      %v1562 = vunpack.c.l.b16 %v385
      %v1563 = vunpack.c.h.b16 %v385
      %v1564 = vunpack.c.l.b16 %v386
      %v1565 = vunpack.c.h.b16 %v386
      %v1566 = vunpack.c.l.b16 %v387
      %v1567 = vunpack.c.h.b16 %v387
      %v1568 = vunpack.c.l.b16 %v388
      %v1569 = vunpack.c.l.b16 %v389
      %v1570 = vunpack.c.h.b16 %v389
      %v1571 = vunpack.c.l.b16 %v390
      %v1572 = vunpack.c.h.b16 %v390
      %v1573 = vunpack.c.l.b16 %v391
      %v1574 = vunpack.c.h.b16 %v391
      %v1575 = vunpack.c.l.b16 %v392
      %v1576 = vunpack.c.l.b16 %v393
      %v1577 = vunpack.c.h.b16 %v393
      %v1578 = vunpack.c.l.b16 %v394
      %v1579 = vunpack.c.h.b16 %v394
      %v1580 = vunpack.c.l.b16 %v395
      %v1581 = vunpack.c.h.b16 %v395
      %v1582 = vunpack.c.l.b16 %v396
      %v1583 = vunpack.c.l.b16 %v397
      %v1584 = vunpack.c.h.b16 %v397
      %v1585 = vunpack.c.l.b16 %v398
      %v1586 = vunpack.c.h.b16 %v398
      %v1587 = vunpack.c.l.b16 %v399
      %v1588 = vunpack.c.h.b16 %v399
      %v1589 = vunpack.c.l.b16 %v400
      %v1590 = vunpack.c.l.b16 %v401
      %v1591 = vunpack.c.h.b16 %v401
      %v1592 = vunpack.c.l.b16 %v402
      %v1593 = vunpack.c.h.b16 %v402
      %v1594 = vunpack.c.l.b16 %v403
      %v1595 = vunpack.c.h.b16 %v403
      %v1596 = vunpack.c.l.b16 %v404
      %v1597 = vunpack.c.l.b16 %v405
      %v1598 = vunpack.c.h.b16 %v405
      %v1599 = vunpack.c.l.b16 %v406
      %v1600 = vunpack.c.h.b16 %v406
      %v1601 = vunpack.c.l.b16 %v407
      %v1602 = vunpack.c.h.b16 %v407
      %v1603 = vunpack.c.l.b16 %v408
      %v1604 = vunpack.c.l.b16 %v409
      %v1605 = vunpack.c.h.b16 %v409
      %v1606 = vunpack.c.l.b16 %v410
      %v1607 = vunpack.c.h.b16 %v410
      %v1608 = vunpack.c.l.b16 %v411
      %v1609 = vunpack.c.h.b16 %v411
      %v1610 = vunpack.c.l.b16 %v412
      %v1611 = vunpack.c.l.b16 %v413
      %v1612 = vunpack.c.h.b16 %v413
      %v1613 = vunpack.c.l.b16 %v414
      %v1614 = vunpack.c.h.b16 %v414
      %v1615 = vunpack.c.l.b16 %v415
      %v1616 = vunpack.c.h.b16 %v415
      %v1617 = vunpack.c.l.b16 %v416
      %v1618 = vunpack.c.l.b16 %v417
      %v1619 = vunpack.c.h.b16 %v417
      %v1620 = vunpack.c.l.b16 %v418
      %v1621 = vunpack.c.h.b16 %v418
      %v1622 = vunpack.c.l.b16 %v419
      %v1623 = vunpack.c.h.b16 %v419
      %v1624 = vunpack.c.l.b16 %v420
      %v1625 = vunpack.c.l.b16 %v421
      %v1626 = vunpack.c.h.b16 %v421
      %v1627 = vunpack.c.l.b16 %v422
      %v1628 = vunpack.c.h.b16 %v422
      %v1629 = vunpack.c.l.b16 %v423
      %v1630 = vunpack.c.h.b16 %v423
      %v1631 = vunpack.c.l.b16 %v424
      %v1632 = vunpack.c.l.b16 %v425
      %v1633 = vunpack.c.h.b16 %v425
      %v1634 = vunpack.c.l.b16 %v426
      %v1635 = vunpack.c.h.b16 %v426
      %v1636 = vunpack.c.l.b16 %v427
      %v1637 = vunpack.c.h.b16 %v427
      %v1638 = vunpack.c.l.b16 %v428
      %v1639 = vunpack.c.l.b16 %v429
      %v1640 = vunpack.c.h.b16 %v429
      %v1641 = vunpack.c.l.b16 %v430
      %v1642 = vunpack.c.h.b16 %v430
      %v1643 = vunpack.c.l.b16 %v431
      %v1644 = vunpack.c.h.b16 %v431
      %v1645 = vunpack.c.l.b16 %v432
      %v1646 = vunpack.c.l.b16 %v433
      %v1647 = vunpack.c.h.b16 %v433
      %v1648 = vunpack.c.l.b16 %v434
      %v1649 = vunpack.c.h.b16 %v434
      %v1650 = vunpack.c.l.b16 %v435
      %v1651 = vunpack.c.h.b16 %v435
      %v1652 = vunpack.c.l.b16 %v436
      %v1653 = vunpack.c.l.b16 %v437
      %v1654 = vunpack.c.h.b16 %v437
      %v1655 = vunpack.c.l.b16 %v438
      %v1656 = vunpack.c.h.b16 %v438
      %v1657 = vunpack.c.l.b16 %v439
      %v1658 = vunpack.c.h.b16 %v439
      %v1659 = vunpack.c.l.b16 %v440
      %v1660 = vunpack.c.l.b16 %v441
      %v1661 = vunpack.c.h.b16 %v441
      %v1662 = vunpack.c.l.b16 %v442
      %v1663 = vunpack.c.h.b16 %v442
      %v1664 = vunpack.c.l.b16 %v443
      %v1665 = vunpack.c.h.b16 %v443
      %v1666 = vunpack.c.l.b16 %v444
      %v1667 = vunpack.c.l.b16 %v445
      %v1668 = vunpack.c.h.b16 %v445
      %v1669 = vunpack.c.l.b16 %v446
      %v1670 = vunpack.c.h.b16 %v446
      %v1671 = vunpack.c.l.b16 %v447
      %v1672 = vunpack.c.h.b16 %v447
      %v1673 = vunpack.c.l.b16 %v448
      %v1674 = vunpack.c.l.b16 %v449
      %v1675 = vunpack.c.h.b16 %v449
      %v1676 = vunpack.c.l.b16 %v450
      %v1677 = vunpack.c.h.b16 %v450
      %v1678 = vunpack.c.l.b16 %v451
      %v1679 = vunpack.c.h.b16 %v451
      %v1680 = vunpack.c.l.b16 %v452
      %v1681 = vunpack.c.l.b16 %v453
      %v1682 = vunpack.c.h.b16 %v453
      %v1683 = vunpack.c.l.b16 %v454
      %v1684 = vunpack.c.h.b16 %v454
      %v1685 = vunpack.c.l.b16 %v455
      %v1686 = vunpack.c.h.b16 %v455
      %v1687 = vunpack.c.l.b16 %v456
      %v1688 = vunpack.c.l.b16 %v457
      %v1689 = vunpack.c.h.b16 %v457
      %v1690 = vunpack.c.l.b16 %v458
      %v1691 = vunpack.c.h.b16 %v458
      %v1692 = vunpack.c.l.b16 %v459
      %v1693 = vunpack.c.h.b16 %v459
      %v1694 = vunpack.c.l.b16 %v460
      %v1695 = vunpack.c.l.b16 %v461
      %v1696 = vunpack.c.h.b16 %v461
      %v1697 = vunpack.c.l.b16 %v462
      %v1698 = vunpack.c.h.b16 %v462
      %v1699 = vunpack.c.l.b16 %v463
      %v1700 = vunpack.c.h.b16 %v463
      %v1701 = vunpack.c.l.b16 %v464
      %v1702 = vunpack.c.l.b16 %v465
      %v1703 = vunpack.c.h.b16 %v465
      %v1704 = vunpack.c.l.b16 %v466
      %v1705 = vunpack.c.h.b16 %v466
      %v1706 = vunpack.c.l.b16 %v467
      %v1707 = vunpack.c.h.b16 %v467
      %v1708 = vunpack.c.l.b16 %v468
      %v1709 = vunpack.c.l.b16 %v469
      %v1710 = vunpack.c.h.b16 %v469
      %v1711 = vunpack.c.l.b16 %v470
      %v1712 = vunpack.c.h.b16 %v470
      %v1713 = vunpack.c.l.b16 %v471
      %v1714 = vunpack.c.h.b16 %v471
      %v1715 = vunpack.c.l.b16 %v472
      %v1716 = vunpack.c.l.b16 %v473
      %v1717 = vunpack.c.h.b16 %v473
      %v1718 = vunpack.c.l.b16 %v474
      %v1719 = vunpack.c.h.b16 %v474
      %v1720 = vunpack.c.l.b16 %v475
      %v1721 = vunpack.c.h.b16 %v475
      %v1722 = vunpack.c.l.b16 %v476
      %v1723 = vunpack.c.l.b16 %v477
      %v1724 = vunpack.c.h.b16 %v477
      %v1725 = vunpack.c.l.b16 %v478
      %v1726 = vunpack.c.h.b16 %v478
      %v1727 = vunpack.c.l.b16 %v479
      %v1728 = vunpack.c.h.b16 %v479
      %v1729 = vunpack.c.l.b16 %v480
      %v1730 = vunpack.c.l.b16 %v481
      %v1731 = vunpack.c.h.b16 %v481
      %v1732 = vunpack.c.l.b16 %v482
      %v1733 = vunpack.c.h.b16 %v482
      %v1734 = vunpack.c.l.b16 %v483
      %v1735 = vunpack.c.h.b16 %v483
      %v1736 = vunpack.c.l.b16 %v484
      %v1737 = vunpack.c.l.b16 %v485
      %v1738 = vunpack.c.h.b16 %v485
      %v1739 = vunpack.c.l.b16 %v486
      %v1740 = vunpack.c.h.b16 %v486
      %v1741 = vunpack.c.l.b16 %v487
      %v1742 = vunpack.c.h.b16 %v487
      %v1743 = vunpack.c.l.b16 %v488
      %v1744 = vunpack.c.l.b16 %v489
      %v1745 = vunpack.c.h.b16 %v489
      %v1746 = vunpack.c.l.b16 %v490
      %v1747 = vunpack.c.h.b16 %v490
      %v1748 = vunpack.c.l.b16 %v491
      %v1749 = vunpack.c.h.b16 %v491
      %v1750 = vunpack.c.l.b16 %v492
      %v1751 = vunpack.c.l.b16 %v493
      %v1752 = vunpack.c.h.b16 %v493
      %v1753 = vunpack.c.l.b16 %v494
      %v1754 = vunpack.c.h.b16 %v494
      %v1755 = vunpack.c.l.b16 %v495
      %v1756 = vunpack.c.h.b16 %v495
      %v1757 = vunpack.c.l.b16 %v496
      %v1758 = vunpack.c.l.b16 %v497
      %v1759 = vunpack.c.h.b16 %v497
      %v1760 = vunpack.c.l.b16 %v498
      %v1761 = vunpack.c.h.b16 %v498
      %v1762 = vunpack.c.l.b16 %v499
      %v1763 = vunpack.c.h.b16 %v499
      %v1764 = vunpack.c.l.b16 %v500
      %v1765 = vunpack.c.l.b16 %v501
      %v1766 = vunpack.c.h.b16 %v501
      %v1767 = vunpack.c.l.b16 %v502
      %v1768 = vunpack.c.h.b16 %v502
      %v1769 = vunpack.c.l.b16 %v503
      %v1770 = vunpack.c.h.b16 %v503
      %v1771 = vunpack.c.l.b16 %v504
      %v1772 = vunpack.c.l.b16 %v505
      %v1773 = vunpack.c.h.b16 %v505
      %v1774 = vunpack.c.l.b16 %v506
      %v1775 = vunpack.c.h.b16 %v506
      %v1776 = vunpack.c.l.b16 %v507
      %v1777 = vunpack.c.h.b16 %v507
      %v1778 = vunpack.c.l.b16 %v508
      %v1779 = vunpack.c.l.b16 %v509
      %v1780 = vunpack.c.h.b16 %v509
      %v1781 = vunpack.c.l.b16 %v510
      %v1782 = vunpack.c.h.b16 %v510
      %v1783 = vunpack.c.l.b16 %v511
      %v1784 = vunpack.c.h.b16 %v511
      %v1785 = vunpack.c.l.b16 %v512
      %v1786 = vunpack.c.l.b16 %v513
      %v1787 = vunpack.c.h.b16 %v513
      %v1788 = vunpack.c.l.b16 %v514
      %v1789 = vunpack.c.h.b16 %v514
      %v1790 = vunpack.c.l.b16 %v515
      %v1791 = vunpack.c.h.b16 %v515
      %v1792 = vunpack.c.l.b16 %v516
      %v1793 = vunpack.c.l.b16 %v517
      %v1794 = vunpack.c.h.b16 %v517
      %v1795 = vunpack.c.l.b16 %v518
      %v1796 = vunpack.c.h.b16 %v518
      %v1797 = vunpack.c.l.b16 %v519
      %v1798 = vunpack.c.h.b16 %v519
      %v1799 = vunpack.c.l.b16 %v520
      %v1800 = vunpack.c.l.b16 %v521
      %v1801 = vunpack.c.h.b16 %v521
      %v1802 = vunpack.c.l.b16 %v522
      %v1803 = vunpack.c.h.b16 %v522
      %v1804 = vunpack.c.l.b16 %v523
      %v1805 = vunpack.c.h.b16 %v523
      %v1806 = vunpack.c.l.b16 %v524
      %v1807 = vunpack.c.l.b16 %v525
      %v1808 = vunpack.c.h.b16 %v525
      %v1809 = vunpack.c.l.b16 %v526
      %v1810 = vunpack.c.h.b16 %v526
      %v1811 = vunpack.c.l.b16 %v527
      %v1812 = vunpack.c.h.b16 %v527
      %v1813 = vunpack.c.l.b16 %v528
      %v1814 = vunpack.c.l.b16 %v529
      %v1815 = vunpack.c.h.b16 %v529
      %v1816 = vunpack.c.l.b16 %v530
      %v1817 = vunpack.c.h.b16 %v530
      %v1818 = vunpack.c.l.b16 %v531
      %v1819 = vunpack.c.h.b16 %v531
      %v1820 = vunpack.c.l.b16 %v532
      %v1821 = vunpack.c.l.b16 %v533
      %v1822 = vunpack.c.h.b16 %v533
      %v1823 = vunpack.c.l.b16 %v534
      %v1824 = vunpack.c.h.b16 %v534
      %v1825 = vunpack.c.l.b16 %v535
      %v1826 = vunpack.c.h.b16 %v535
      %v1827 = vunpack.c.l.b16 %v536
      %v1828 = vunpack.c.l.b16 %v537
      %v1829 = vunpack.c.h.b16 %v537
      %v1830 = vunpack.c.l.b16 %v538
      %v1831 = vunpack.c.h.b16 %v538
      %v1832 = vunpack.c.l.b16 %v539
      %v1833 = vunpack.c.h.b16 %v539
      %v1834 = vunpack.c.l.b16 %v540
      %v1835 = vunpack.c.l.b16 %v541
      %v1836 = vunpack.c.h.b16 %v541
      %v1837 = vunpack.c.l.b16 %v542
      %v1838 = vunpack.c.h.b16 %v542
      %v1839 = vunpack.c.l.b16 %v543
      %v1840 = vunpack.c.h.b16 %v543
      %v1841 = vunpack.c.l.b16 %v544
      %v1842 = vunpack.c.l.b16 %v545
      %v1843 = vunpack.c.h.b16 %v545
      %v1844 = vunpack.c.l.b16 %v546
      %v1845 = vunpack.c.h.b16 %v546
      %v1846 = vunpack.c.l.b16 %v547
      %v1847 = vunpack.c.h.b16 %v547
      %v1848 = vunpack.c.l.b16 %v548
      %v1849 = vunpack.c.l.b16 %v549
      %v1850 = vunpack.c.h.b16 %v549
      %v1851 = vunpack.c.l.b16 %v550
      %v1852 = vunpack.c.h.b16 %v550
      %v1853 = vunpack.c.l.b16 %v551
      %v1854 = vunpack.c.h.b16 %v551
      %v1855 = vunpack.c.l.b16 %v552
      %v1856 = vunpack.c.l.b16 %v553
      %v1857 = vunpack.c.h.b16 %v553
      %v1858 = vunpack.c.l.b16 %v554
      %v1859 = vunpack.c.h.b16 %v554
      %v1860 = vunpack.c.l.b16 %v555
      %v1861 = vunpack.c.h.b16 %v555
      %v1862 = vunpack.c.l.b16 %v556
      %v1863 = vunpack.c.l.b16 %v557
      %v1864 = vunpack.c.h.b16 %v557
      %v1865 = vunpack.c.l.b16 %v558
      %v1866 = vunpack.c.h.b16 %v558
      %v1867 = vunpack.c.l.b16 %v559
      %v1868 = vunpack.c.h.b16 %v559
      %v1869 = vunpack.c.l.b16 %v560
      %v1870 = vunpack.c.l.b16 %v561
      %v1871 = vunpack.c.h.b16 %v561
      %v1872 = vunpack.c.l.b16 %v562
      %v1873 = vunpack.c.h.b16 %v562
      %v1874 = vunpack.c.l.b16 %v563
      %v1875 = vunpack.c.h.b16 %v563
      %v1876 = vunpack.c.l.b16 %v564
      %v1877 = vunpack.c.l.b16 %v565
      %v1878 = vunpack.c.h.b16 %v565
      %v1879 = vunpack.c.l.b16 %v566
      %v1880 = vunpack.c.h.b16 %v566
      %v1881 = vunpack.c.l.b16 %v567
      %v1882 = vunpack.c.h.b16 %v567
      %v1883 = vunpack.c.l.b16 %v568
      %v1884 = vunpack.c.l.b16 %v569
      %v1885 = vunpack.c.h.b16 %v569
      %v1886 = vunpack.c.l.b16 %v570
      %v1887 = vunpack.c.h.b16 %v570
      %v1888 = vunpack.c.l.b16 %v571
      %v1889 = vunpack.c.h.b16 %v571
      %v1890 = vunpack.c.l.b16 %v572
      %v1891 = vunpack.c.l.b16 %v573
      %v1892 = vunpack.c.h.b16 %v573
      %v1893 = vunpack.c.l.b16 %v574
      %v1894 = vunpack.c.h.b16 %v574
      %v1895 = vunpack.c.l.b16 %v575
      %v1896 = vunpack.c.h.b16 %v575
      %v1897 = vunpack.c.l.b16 %v576
      %v1898 = vunpack.c.l.b16 %v577
      %v1899 = vunpack.c.h.b16 %v577
      %v1900 = vunpack.c.l.b16 %v578
      %v1901 = vunpack.c.h.b16 %v578
      %v1902 = vunpack.c.l.b16 %v579
      %v1903 = vunpack.c.h.b16 %v579
      %v1904 = vunpack.c.l.b16 %v580
      %v1905 = vunpack.c.l.b16 %v581
      %v1906 = vunpack.c.h.b16 %v581
      %v1907 = vunpack.c.l.b16 %v582
      %v1908 = vunpack.c.h.b16 %v582
      %v1909 = vunpack.c.l.b16 %v583
      %v1910 = vunpack.c.h.b16 %v583
      %v1911 = vunpack.c.l.b16 %v584
      %v1912 = vunpack.c.l.b16 %v585
      %v1913 = vunpack.c.h.b16 %v585
      %v1914 = vunpack.c.l.b16 %v586
      %v1915 = vunpack.c.h.b16 %v586
      %v1916 = vunpack.c.l.b16 %v587
      %v1917 = vunpack.c.h.b16 %v587
      %v1918 = vunpack.c.l.b16 %v588
      %v1919 = vunpack.c.l.b16 %v589
      %v1920 = vunpack.c.h.b16 %v589
      %v1921 = vunpack.c.l.b16 %v590
      %v1922 = vunpack.c.h.b16 %v590
      %v1923 = vunpack.c.l.b16 %v591
      %v1924 = vunpack.c.h.b16 %v591
      %v1925 = vunpack.c.l.b16 %v592
      %v1926 = vunpack.c.l.b16 %v593
      %v1927 = vunpack.c.h.b16 %v593
      %v1928 = vunpack.c.l.b16 %v594
      %v1929 = vunpack.c.h.b16 %v594
      %v1930 = vunpack.c.l.b16 %v595
      %v1931 = vunpack.c.h.b16 %v595
      %v1932 = vunpack.c.l.b16 %v596
      %v1933 = vunpack.c.l.b16 %v597
      %v1934 = vunpack.c.h.b16 %v597
      %v1935 = vunpack.c.l.b16 %v598
      %v1936 = vunpack.c.h.b16 %v598
      %v1937 = vunpack.c.l.b16 %v599
      %v1938 = vunpack.c.h.b16 %v599
      %v1939 = vunpack.c.l.b16 %v600
      %v1940 = vunpack.c.l.b16 %v601
      %v1941 = vunpack.c.h.b16 %v601
      %v1942 = vunpack.c.l.b16 %v602
      %v1943 = vunpack.c.h.b16 %v602
      %v1944 = vunpack.c.l.b16 %v603
      %v1945 = vunpack.c.h.b16 %v603
      %v1946 = vunpack.c.l.b16 %v604
      %v1947 = vunpack.c.l.b16 %v605
      %v1948 = vunpack.c.h.b16 %v605
      %v1949 = vunpack.c.l.b16 %v606
      %v1950 = vunpack.c.h.b16 %v606
      %v1951 = vunpack.c.l.b16 %v607
      %v1952 = vunpack.c.h.b16 %v607
      %v1953 = vunpack.c.l.b16 %v608
      %v1954 = vunpack.c.l.b16 %v609
      %v1955 = vunpack.c.h.b16 %v609
      %v1956 = vunpack.c.l.b16 %v610
      %v1957 = vunpack.c.h.b16 %v610
      %v1958 = vunpack.c.l.b16 %v611
      %v1959 = vunpack.c.h.b16 %v611
      %v1960 = vunpack.c.l.b16 %v612
      %v1961 = vunpack.c.l.b16 %v613
      %v1962 = vunpack.c.h.b16 %v613
      %v1963 = vunpack.c.l.b16 %v614
      %v1964 = vunpack.c.h.b16 %v614
      %v1965 = vunpack.c.l.b16 %v615
      %v1966 = vunpack.c.h.b16 %v615
      %v1967 = vunpack.c.l.b16 %v616
      %v1968 = vunpack.c.l.b16 %v617
      %v1969 = vunpack.c.h.b16 %v617
      %v1970 = vunpack.c.l.b16 %v618
      %v1971 = vunpack.c.h.b16 %v618
      %v1972 = vunpack.c.l.b16 %v619
      %v1973 = vunpack.c.h.b16 %v619
      %v1974 = vunpack.c.l.b16 %v620
      %v1975 = vunpack.c.l.b16 %v621
      %v1976 = vunpack.c.h.b16 %v621
      %v1977 = vunpack.c.l.b16 %v622
      %v1978 = vunpack.c.h.b16 %v622
      %v1979 = vunpack.c.l.b16 %v623
      %v1980 = vunpack.c.h.b16 %v623
      %v1981 = vunpack.c.l.b16 %v624
      %v1982 = vunpack.c.l.b16 %v625
      %v1983 = vunpack.c.h.b16 %v625
      %v1984 = vunpack.c.l.b16 %v626
      %v1985 = vunpack.c.h.b16 %v626
      %v1986 = vunpack.c.l.b16 %v627
      %v1987 = vunpack.c.h.b16 %v627
      %v1988 = vunpack.c.l.b16 %v628
      %v1989 = vunpack.c.l.b16 %v629
      %v1990 = vunpack.c.h.b16 %v629
      %v1991 = vunpack.c.l.b16 %v630
      %v1992 = vunpack.c.h.b16 %v630
      %v1993 = vunpack.c.l.b16 %v631
      %v1994 = vunpack.c.h.b16 %v631
      %v1995 = vunpack.c.l.b16 %v632
      %v1996 = vunpack.c.l.b16 %v633
      %v1997 = vunpack.c.h.b16 %v633
      %v1998 = vunpack.c.l.b16 %v634
      %v1999 = vunpack.c.h.b16 %v634
      %v2000 = vunpack.c.l.b16 %v635
      %v2001 = vunpack.c.h.b16 %v635
      %v2002 = vunpack.c.l.b16 %v636
      %v2003 = vunpack.c.l.b16 %v637
      %v2004 = vunpack.c.h.b16 %v637
      %v2005 = vunpack.c.l.b16 %v638
      %v2006 = vunpack.c.h.b16 %v638
      %v2007 = vunpack.c.l.b16 %v639
      %v2008 = vunpack.c.h.b16 %v639
      %v2009 = vunpack.c.l.b16 %v640
      %v2010 = vunpack.c.l.b16 %v641
      %v2011 = vunpack.c.h.b16 %v641
      %v2012 = vunpack.c.l.b16 %v642
      %v2013 = vunpack.c.h.b16 %v642
      %v2014 = vunpack.c.l.b16 %v643
      %v2015 = vunpack.c.h.b16 %v643
      %v2016 = vunpack.c.l.b16 %v644
      %v2017 = vunpack.c.l.b16 %v645
      %v2018 = vunpack.c.h.b16 %v645
      %v2019 = vunpack.c.l.b16 %v646
      %v2020 = vunpack.c.h.b16 %v646
      %v2021 = vunpack.c.l.b16 %v647
      %v2022 = vunpack.c.h.b16 %v647
      %v2023 = vunpack.c.l.b16 %v648
      %v2024 = vunpack.c.l.b16 %v649
      %v2025 = vunpack.c.h.b16 %v649
      %v2026 = vunpack.c.l.b16 %v650
      %v2027 = vunpack.c.h.b16 %v650
      %v2028 = vunpack.c.l.b16 %v651
      %v2029 = vunpack.c.h.b16 %v651
      %v2030 = vunpack.c.l.b16 %v652
      %v2031 = vunpack.c.l.b16 %v653
      %v2032 = vunpack.c.h.b16 %v653
      %v2033 = vunpack.c.l.b16 %v654
      %v2034 = vunpack.c.h.b16 %v654
      %v2035 = vunpack.c.l.b16 %v655
      %v2036 = vunpack.c.h.b16 %v655
      %v2037 = vunpack.c.l.b16 %v656
      %v2038 = vunpack.c.l.b16 %v657
      %v2039 = vunpack.c.h.b16 %v657
      %v2040 = vunpack.c.l.b16 %v658
      %v2041 = vunpack.c.h.b16 %v658
      %v2042 = vunpack.c.l.b16 %v659
      %v2043 = vunpack.c.h.b16 %v659
      %v2044 = vunpack.c.l.b16 %v660
      %v2045 = vunpack.c.l.b16 %v661
      %v2046 = vunpack.c.h.b16 %v661
      %v2047 = vunpack.c.l.b16 %v662
      %v2048 = vunpack.c.h.b16 %v662
      %v2049 = vunpack.c.l.b16 %v663
      %v2050 = vunpack.c.h.b16 %v663
      %v2051 = vunpack.c.l.b16 %v664
      %v2052 = vunpack.c.l.b16 %v665
      %v2053 = vunpack.c.h.b16 %v665
      %v2054 = vunpack.c.l.b16 %v666
      %v2055 = vunpack.c.h.b16 %v666
      %v2056 = vunpack.c.l.b16 %v667
      %v2057 = vunpack.c.h.b16 %v667
      %v2058 = vunpack.c.l.b16 %v668
      %v2059 = vunpack.c.l.b16 %v669
      %v2060 = vunpack.c.h.b16 %v669
      %v2061 = vunpack.c.l.b16 %v670
      %v2062 = vunpack.c.h.b16 %v670
      %v2063 = vunpack.c.l.b16 %v671
      %v2064 = vunpack.c.h.b16 %v671
      %v2065 = vunpack.c.l.b16 %v672
      %v2066 = vunpack.c.l.b16 %v673
      %v2067 = vunpack.c.h.b16 %v673
      %v2068 = vunpack.c.l.b16 %v674
      %v2069 = vunpack.c.h.b16 %v674
      %v2070 = vunpack.c.l.b16 %v675
      %v2071 = vunpack.c.h.b16 %v675
      %v2072 = vunpack.c.l.b16 %v676
      %v2073 = vunpack.c.l.b16 %v677
      %v2074 = vunpack.c.h.b16 %v677
      %v2075 = vunpack.c.l.b16 %v678
      %v2076 = vunpack.c.h.b16 %v678
      %v2077 = vunpack.c.l.b16 %v679
      %v2078 = vunpack.c.h.b16 %v679
      %v2079 = vunpack.c.l.b16 %v680
      %v2080 = vunpack.c.l.b16 %v681
      %v2081 = vunpack.c.h.b16 %v681
      %v2082 = vunpack.c.l.b16 %v682
      %v2083 = vunpack.c.h.b16 %v682
      %v2084 = vunpack.c.l.b16 %v683
      %v2085 = vunpack.c.h.b16 %v683
      %v2086 = vunpack.c.l.b16 %v684
      %v2087 = vunpack.c.l.b16 %v685
      %v2088 = vunpack.c.h.b16 %v685
      %v2089 = vunpack.c.l.b16 %v686
      %v2090 = vunpack.c.h.b16 %v686
      %v2091 = vunpack.c.l.b16 %v687
      %v2092 = vunpack.c.h.b16 %v687
      %v2093 = vunpack.c.l.b16 %v688
      %v2094 = vunpack.c.l.b16 %v689
      %v2095 = vunpack.c.h.b16 %v689
      %v2096 = vunpack.c.l.b16 %v690
      %v2097 = vunpack.c.h.b16 %v690
      %v2098 = vunpack.c.l.b16 %v691
      %v2099 = vunpack.c.h.b16 %v691
      %v2100 = vunpack.c.l.b16 %v692
      %v2101 = vunpack.c.l.b16 %v693
      %v2102 = vunpack.c.h.b16 %v693
      %v2103 = vunpack.c.l.b16 %v694
      %v2104 = vunpack.c.h.b16 %v694
      %v2105 = vunpack.c.l.b16 %v695
      %v2106 = vunpack.c.h.b16 %v695
      %v2107 = vunpack.c.l.b16 %v696
      %v2108 = vunpack.c.l.b16 %v697
      %v2109 = vunpack.c.h.b16 %v697
      %v2110 = vunpack.c.l.b16 %v698
      %v2111 = vunpack.c.h.b16 %v698
      %v2112 = vunpack.c.l.b16 %v699
      %v2113 = vunpack.c.h.b16 %v699
      %v2114 = vunpack.c.l.b16 %v700
      %v2115 = vunpack.c.l.b16 %v701
      %v2116 = vunpack.c.h.b16 %v701
      %v2117 = vunpack.c.l.b16 %v702
      %v2118 = vunpack.c.h.b16 %v702
      %v2119 = vunpack.c.l.b16 %v703
      %v2120 = vunpack.c.h.b16 %v703
      %v2121 = vunpack.c.l.b16 %v704
      %v2122 = vunpack.c.l.b16 %v705
      %v2123 = vunpack.c.h.b16 %v705
      %v2124 = vunpack.c.l.b16 %v706
      %v2125 = vunpack.c.h.b16 %v706
      %v2126 = vunpack.c.l.b16 %v707
      %v2127 = vunpack.c.h.b16 %v707
      %v2128 = vunpack.c.l.b16 %v708
      %v2129 = vunpack.c.l.b16 %v709
      %v2130 = vunpack.c.h.b16 %v709
      %v2131 = vunpack.c.l.b16 %v710
      %v2132 = vunpack.c.h.b16 %v710
      %v2133 = vunpack.c.l.b16 %v711
      %v2134 = vunpack.c.h.b16 %v711
      %v2135 = vunpack.c.l.b16 %v712
      %v2136 = vunpack.c.l.b16 %v713
      %v2137 = vunpack.c.h.b16 %v713
      %v2138 = vunpack.c.l.b16 %v714
      %v2139 = vunpack.c.h.b16 %v714
      %v2140 = vunpack.c.l.b16 %v715
      %v2141 = vunpack.c.h.b16 %v715
      %v2142 = vunpack.c.l.b16 %v716
      %v2143 = vunpack.c.l.b16 %v717
      %v2144 = vunpack.c.h.b16 %v717
      %v2145 = vunpack.c.l.b16 %v718
      %v2146 = vunpack.c.h.b16 %v718
      %v2147 = vunpack.c.l.b16 %v719
      %v2148 = vunpack.c.h.b16 %v719
      %v2149 = vunpack.c.l.b16 %v720
      %v2150 = vunpack.c.l.b16 %v721
      %v2151 = vunpack.c.h.b16 %v721
      %v2152 = vunpack.c.l.b16 %v722
      %v2153 = vunpack.c.h.b16 %v722
      %v2154 = vunpack.c.l.b16 %v723
      %v2155 = vunpack.c.h.b16 %v723
      %v2156 = vunpack.c.l.b16 %v724
      %v2157 = vunpack.c.l.b16 %v725
      %v2158 = vunpack.c.h.b16 %v725
      %v2159 = vunpack.c.l.b16 %v726
      %v2160 = vunpack.c.h.b16 %v726
      %v2161 = vunpack.c.l.b16 %v727
      %v2162 = vunpack.c.h.b16 %v727
      %v2163 = vunpack.c.l.b16 %v728
      %v2164 = vunpack.c.l.b16 %v729
      %v2165 = vunpack.c.h.b16 %v729
      %v2166 = vunpack.c.l.b16 %v730
      %v2167 = vunpack.c.h.b16 %v730
      %v2168 = vunpack.c.l.b16 %v731
      %v2169 = vunpack.c.h.b16 %v731
      %v2170 = vunpack.c.l.b16 %v732
      %v2171 = vunpack.c.l.b16 %v733
      %v2172 = vunpack.c.h.b16 %v733
      %v2173 = vunpack.c.l.b16 %v734
      %v2174 = vunpack.c.h.b16 %v734
      %v2175 = vunpack.c.l.b16 %v735
      %v2176 = vunpack.c.h.b16 %v735
      %v2177 = vunpack.c.l.b16 %v736
      %v2178 = vunpack.c.l.b16 %v737
      %v2179 = vunpack.c.h.b16 %v737
      %v2180 = vunpack.c.l.b16 %v738
      %v2181 = vunpack.c.h.b16 %v738
      %v2182 = vunpack.c.l.b16 %v739
      %v2183 = vunpack.c.h.b16 %v739
      %v2184 = vunpack.c.l.b16 %v740
      %v2185 = vunpack.c.l.b16 %v741
      %v2186 = vunpack.c.h.b16 %v741
      %v2187 = vunpack.c.l.b16 %v742
      %v2188 = vunpack.c.h.b16 %v742
      %v2189 = vunpack.c.l.b16 %v743
      %v2190 = vunpack.c.h.b16 %v743
      %v2191 = vunpack.c.l.b16 %v744
      %v2192 = vunpack.c.l.b16 %v745
      %v2193 = vunpack.c.h.b16 %v745
      %v2194 = vunpack.c.l.b16 %v746
      %v2195 = vunpack.c.h.b16 %v746
      %v2196 = vunpack.c.l.b16 %v747
      %v2197 = vunpack.c.h.b16 %v747
      %v2198 = vunpack.c.l.b16 %v748
      %v2199 = vpack.c.b16 %v1310, %v1303
      %v2200 = vpack.c.b16 %v1311, %v1304
      %v2201 = vpack.c.b16 %v1312, %v1305
      %v2202 = vpack.c.b16 %v1313, %v1306
      %v2203 = vpack.c.b16 %v1314, %v1307
      %v2204 = vpack.c.b16 %v1315, %v1308
      %v2205 = vpack.c.b16 %v1316, %v1309
      %v2206 = vpack.c.b16 %v1324, %v1317
      %v2207 = vpack.c.b16 %v1325, %v1318
      %v2208 = vpack.c.b16 %v1326, %v1319
      %v2209 = vpack.c.b16 %v1327, %v1320
      %v2210 = vpack.c.b16 %v1328, %v1321
      %v2211 = vpack.c.b16 %v1329, %v1322
      %v2212 = vpack.c.b16 %v1330, %v1323
      %v2213 = vpack.c.b16 %v1338, %v1331
      %v2214 = vpack.c.b16 %v1339, %v1332
      %v2215 = vpack.c.b16 %v1340, %v1333
      %v2216 = vpack.c.b16 %v1341, %v1334
      %v2217 = vpack.c.b16 %v1342, %v1335
      %v2218 = vpack.c.b16 %v1343, %v1336
      %v2219 = vpack.c.b16 %v1344, %v1337
      %v2220 = vpack.c.b16 %v1352, %v1345
      %v2221 = vpack.c.b16 %v1353, %v1346
      %v2222 = vpack.c.b16 %v1354, %v1347
      %v2223 = vpack.c.b16 %v1355, %v1348
      %v2224 = vpack.c.b16 %v1356, %v1349
      %v2225 = vpack.c.b16 %v1357, %v1350
      %v2226 = vpack.c.b16 %v1358, %v1351
      %v2227 = vpack.c.b16 %v1366, %v1359
      %v2228 = vpack.c.b16 %v1367, %v1360
      %v2229 = vpack.c.b16 %v1368, %v1361
      %v2230 = vpack.c.b16 %v1369, %v1362
      %v2231 = vpack.c.b16 %v1370, %v1363
      %v2232 = vpack.c.b16 %v1371, %v1364
      %v2233 = vpack.c.b16 %v1372, %v1365
      %v2234 = vpack.c.b16 %v1380, %v1373
      %v2235 = vpack.c.b16 %v1381, %v1374
      %v2236 = vpack.c.b16 %v1382, %v1375
      %v2237 = vpack.c.b16 %v1383, %v1376
      %v2238 = vpack.c.b16 %v1384, %v1377
      %v2239 = vpack.c.b16 %v1385, %v1378
      %v2240 = vpack.c.b16 %v1386, %v1379
      %v2241 = vpack.c.b16 %v1394, %v1387
      %v2242 = vpack.c.b16 %v1395, %v1388
      %v2243 = vpack.c.b16 %v1396, %v1389
      %v2244 = vpack.c.b16 %v1397, %v1390
      %v2245 = vpack.c.b16 %v1398, %v1391
      %v2246 = vpack.c.b16 %v1399, %v1392
      %v2247 = vpack.c.b16 %v1400, %v1393
      %v2248 = vpack.c.b16 %v1408, %v1401
      %v2249 = vpack.c.b16 %v1409, %v1402
      %v2250 = vpack.c.b16 %v1410, %v1403
      %v2251 = vpack.c.b16 %v1411, %v1404
      %v2252 = vpack.c.b16 %v1412, %v1405
      %v2253 = vpack.c.b16 %v1413, %v1406
      %v2254 = vpack.c.b16 %v1414, %v1407
      %v2255 = vpack.c.b16 %v1422, %v1415
      %v2256 = vpack.c.b16 %v1423, %v1416
      %v2257 = vpack.c.b16 %v1424, %v1417
      %v2258 = vpack.c.b16 %v1425, %v1418
      %v2259 = vpack.c.b16 %v1426, %v1419
      %v2260 = vpack.c.b16 %v1427, %v1420
      %v2261 = vpack.c.b16 %v1428, %v1421
      %v2262 = vpack.c.b16 %v1436, %v1429
      %v2263 = vpack.c.b16 %v1437, %v1430
      %v2264 = vpack.c.b16 %v1438, %v1431
      %v2265 = vpack.c.b16 %v1439, %v1432
      %v2266 = vpack.c.b16 %v1440, %v1433
      %v2267 = vpack.c.b16 %v1441, %v1434
      %v2268 = vpack.c.b16 %v1442, %v1435
      %v2269 = vpack.c.b16 %v1450, %v1443
      %v2270 = vpack.c.b16 %v1451, %v1444
      %v2271 = vpack.c.b16 %v1452, %v1445
      %v2272 = vpack.c.b16 %v1453, %v1446
      %v2273 = vpack.c.b16 %v1454, %v1447
      %v2274 = vpack.c.b16 %v1455, %v1448
      %v2275 = vpack.c.b16 %v1456, %v1449
      %v2276 = vpack.c.b16 %v1464, %v1457
      %v2277 = vpack.c.b16 %v1465, %v1458
      %v2278 = vpack.c.b16 %v1466, %v1459
      %v2279 = vpack.c.b16 %v1467, %v1460
      %v2280 = vpack.c.b16 %v1468, %v1461
      %v2281 = vpack.c.b16 %v1469, %v1462
      %v2282 = vpack.c.b16 %v1470, %v1463
      %v2283 = vpack.c.b16 %v1478, %v1471
      %v2284 = vpack.c.b16 %v1479, %v1472
      %v2285 = vpack.c.b16 %v1480, %v1473
      %v2286 = vpack.c.b16 %v1481, %v1474
      %v2287 = vpack.c.b16 %v1482, %v1475
      %v2288 = vpack.c.b16 %v1483, %v1476
      %v2289 = vpack.c.b16 %v1484, %v1477
      %v2290 = vpack.c.b16 %v1492, %v1485
      %v2291 = vpack.c.b16 %v1493, %v1486
      %v2292 = vpack.c.b16 %v1494, %v1487
      %v2293 = vpack.c.b16 %v1495, %v1488
      %v2294 = vpack.c.b16 %v1496, %v1489
      %v2295 = vpack.c.b16 %v1497, %v1490
      %v2296 = vpack.c.b16 %v1498, %v1491
      %v2297 = vpack.c.b16 %v1506, %v1499
      %v2298 = vpack.c.b16 %v1507, %v1500
      %v2299 = vpack.c.b16 %v1508, %v1501
      %v2300 = vpack.c.b16 %v1509, %v1502
      %v2301 = vpack.c.b16 %v1510, %v1503
      %v2302 = vpack.c.b16 %v1511, %v1504
      %v2303 = vpack.c.b16 %v1512, %v1505
      %v2304 = vpack.c.b16 %v1520, %v1513
      %v2305 = vpack.c.b16 %v1521, %v1514
      %v2306 = vpack.c.b16 %v1522, %v1515
      %v2307 = vpack.c.b16 %v1523, %v1516
      %v2308 = vpack.c.b16 %v1524, %v1517
      %v2309 = vpack.c.b16 %v1525, %v1518
      %v2310 = vpack.c.b16 %v1526, %v1519
      %v2311 = vpack.c.b16 %v1534, %v1527
      %v2312 = vpack.c.b16 %v1535, %v1528
      %v2313 = vpack.c.b16 %v1536, %v1529
      %v2314 = vpack.c.b16 %v1537, %v1530
      %v2315 = vpack.c.b16 %v1538, %v1531
      %v2316 = vpack.c.b16 %v1539, %v1532
      %v2317 = vpack.c.b16 %v1540, %v1533
      %v2318 = vpack.c.b16 %v1548, %v1541
      %v2319 = vpack.c.b16 %v1549, %v1542
      %v2320 = vpack.c.b16 %v1550, %v1543
      %v2321 = vpack.c.b16 %v1551, %v1544
      %v2322 = vpack.c.b16 %v1552, %v1545
      %v2323 = vpack.c.b16 %v1553, %v1546
      %v2324 = vpack.c.b16 %v1554, %v1547
      %v2325 = vpack.c.b16 %v1562, %v1555
      %v2326 = vpack.c.b16 %v1563, %v1556
      %v2327 = vpack.c.b16 %v1564, %v1557
      %v2328 = vpack.c.b16 %v1565, %v1558
      %v2329 = vpack.c.b16 %v1566, %v1559
      %v2330 = vpack.c.b16 %v1567, %v1560
      %v2331 = vpack.c.b16 %v1568, %v1561
      %v2332 = vpack.c.b16 %v1576, %v1569
      %v2333 = vpack.c.b16 %v1577, %v1570
      %v2334 = vpack.c.b16 %v1578, %v1571
      %v2335 = vpack.c.b16 %v1579, %v1572
      %v2336 = vpack.c.b16 %v1580, %v1573
      %v2337 = vpack.c.b16 %v1581, %v1574
      %v2338 = vpack.c.b16 %v1582, %v1575
      %v2339 = vpack.c.b16 %v1590, %v1583
      %v2340 = vpack.c.b16 %v1591, %v1584
      %v2341 = vpack.c.b16 %v1592, %v1585
      %v2342 = vpack.c.b16 %v1593, %v1586
      %v2343 = vpack.c.b16 %v1594, %v1587
      %v2344 = vpack.c.b16 %v1595, %v1588
      %v2345 = vpack.c.b16 %v1596, %v1589
      %v2346 = vpack.c.b16 %v1604, %v1597
      %v2347 = vpack.c.b16 %v1605, %v1598
      %v2348 = vpack.c.b16 %v1606, %v1599
      %v2349 = vpack.c.b16 %v1607, %v1600
      %v2350 = vpack.c.b16 %v1608, %v1601
      %v2351 = vpack.c.b16 %v1609, %v1602
      %v2352 = vpack.c.b16 %v1610, %v1603
      %v2353 = vpack.c.b16 %v1618, %v1611
      %v2354 = vpack.c.b16 %v1619, %v1612
      %v2355 = vpack.c.b16 %v1620, %v1613
      %v2356 = vpack.c.b16 %v1621, %v1614
      %v2357 = vpack.c.b16 %v1622, %v1615
      %v2358 = vpack.c.b16 %v1623, %v1616
      %v2359 = vpack.c.b16 %v1624, %v1617
      %v2360 = vpack.c.b16 %v1632, %v1625
      %v2361 = vpack.c.b16 %v1633, %v1626
      %v2362 = vpack.c.b16 %v1634, %v1627
      %v2363 = vpack.c.b16 %v1635, %v1628
      %v2364 = vpack.c.b16 %v1636, %v1629
      %v2365 = vpack.c.b16 %v1637, %v1630
      %v2366 = vpack.c.b16 %v1638, %v1631
      %v2367 = vpack.c.b16 %v1646, %v1639
      %v2368 = vpack.c.b16 %v1647, %v1640
      %v2369 = vpack.c.b16 %v1648, %v1641
      %v2370 = vpack.c.b16 %v1649, %v1642
      %v2371 = vpack.c.b16 %v1650, %v1643
      %v2372 = vpack.c.b16 %v1651, %v1644
      %v2373 = vpack.c.b16 %v1652, %v1645
      %v2374 = vpack.c.b16 %v1660, %v1653
      %v2375 = vpack.c.b16 %v1661, %v1654
      %v2376 = vpack.c.b16 %v1662, %v1655
      %v2377 = vpack.c.b16 %v1663, %v1656
      %v2378 = vpack.c.b16 %v1664, %v1657
      %v2379 = vpack.c.b16 %v1665, %v1658
      %v2380 = vpack.c.b16 %v1666, %v1659
      %v2381 = vpack.c.b16 %v1674, %v1667
      %v2382 = vpack.c.b16 %v1675, %v1668
      %v2383 = vpack.c.b16 %v1676, %v1669
      %v2384 = vpack.c.b16 %v1677, %v1670
      %v2385 = vpack.c.b16 %v1678, %v1671
      %v2386 = vpack.c.b16 %v1679, %v1672
      %v2387 = vpack.c.b16 %v1680, %v1673
      %v2388 = vpack.c.b16 %v1688, %v1681
      %v2389 = vpack.c.b16 %v1689, %v1682
      %v2390 = vpack.c.b16 %v1690, %v1683
      %v2391 = vpack.c.b16 %v1691, %v1684
      %v2392 = vpack.c.b16 %v1692, %v1685
      %v2393 = vpack.c.b16 %v1693, %v1686
      %v2394 = vpack.c.b16 %v1694, %v1687
      %v2395 = vpack.c.b16 %v1702, %v1695
      %v2396 = vpack.c.b16 %v1703, %v1696
      %v2397 = vpack.c.b16 %v1704, %v1697
      %v2398 = vpack.c.b16 %v1705, %v1698
      %v2399 = vpack.c.b16 %v1706, %v1699
      %v2400 = vpack.c.b16 %v1707, %v1700
      %v2401 = vpack.c.b16 %v1708, %v1701
      %v2402 = vpack.c.b16 %v1716, %v1709
      %v2403 = vpack.c.b16 %v1717, %v1710
      %v2404 = vpack.c.b16 %v1718, %v1711
      %v2405 = vpack.c.b16 %v1719, %v1712
      %v2406 = vpack.c.b16 %v1720, %v1713
      %v2407 = vpack.c.b16 %v1721, %v1714
      %v2408 = vpack.c.b16 %v1722, %v1715
      %v2409 = vpack.c.b16 %v1730, %v1723
      %v2410 = vpack.c.b16 %v1731, %v1724
      %v2411 = vpack.c.b16 %v1732, %v1725
      %v2412 = vpack.c.b16 %v1733, %v1726
      %v2413 = vpack.c.b16 %v1734, %v1727
      %v2414 = vpack.c.b16 %v1735, %v1728
      %v2415 = vpack.c.b16 %v1736, %v1729
      %v2416 = vpack.c.b16 %v1744, %v1737
      %v2417 = vpack.c.b16 %v1745, %v1738
      %v2418 = vpack.c.b16 %v1746, %v1739
      %v2419 = vpack.c.b16 %v1747, %v1740
      %v2420 = vpack.c.b16 %v1748, %v1741
      %v2421 = vpack.c.b16 %v1749, %v1742
      %v2422 = vpack.c.b16 %v1750, %v1743
      %v2423 = vpack.c.b16 %v1758, %v1751
      %v2424 = vpack.c.b16 %v1759, %v1752
      %v2425 = vpack.c.b16 %v1760, %v1753
      %v2426 = vpack.c.b16 %v1761, %v1754
      %v2427 = vpack.c.b16 %v1762, %v1755
      %v2428 = vpack.c.b16 %v1763, %v1756
      %v2429 = vpack.c.b16 %v1764, %v1757
      %v2430 = vpack.c.b16 %v1772, %v1765
      %v2431 = vpack.c.b16 %v1773, %v1766
      %v2432 = vpack.c.b16 %v1774, %v1767
      %v2433 = vpack.c.b16 %v1775, %v1768
      %v2434 = vpack.c.b16 %v1776, %v1769
      %v2435 = vpack.c.b16 %v1777, %v1770
      %v2436 = vpack.c.b16 %v1778, %v1771
      %v2437 = vpack.c.b16 %v1786, %v1779
      %v2438 = vpack.c.b16 %v1787, %v1780
      %v2439 = vpack.c.b16 %v1788, %v1781
      %v2440 = vpack.c.b16 %v1789, %v1782
      %v2441 = vpack.c.b16 %v1790, %v1783
      %v2442 = vpack.c.b16 %v1791, %v1784
      %v2443 = vpack.c.b16 %v1792, %v1785
      %v2444 = vpack.c.b16 %v1800, %v1793
      %v2445 = vpack.c.b16 %v1801, %v1794
      %v2446 = vpack.c.b16 %v1802, %v1795
      %v2447 = vpack.c.b16 %v1803, %v1796
      %v2448 = vpack.c.b16 %v1804, %v1797
      %v2449 = vpack.c.b16 %v1805, %v1798
      %v2450 = vpack.c.b16 %v1806, %v1799
      %v2451 = vpack.c.b16 %v1814, %v1807
      %v2452 = vpack.c.b16 %v1815, %v1808
      %v2453 = vpack.c.b16 %v1816, %v1809
      %v2454 = vpack.c.b16 %v1817, %v1810
      %v2455 = vpack.c.b16 %v1818, %v1811
      %v2456 = vpack.c.b16 %v1819, %v1812
      %v2457 = vpack.c.b16 %v1820, %v1813
      %v2458 = vpack.c.b16 %v1828, %v1821
      %v2459 = vpack.c.b16 %v1829, %v1822
      %v2460 = vpack.c.b16 %v1830, %v1823
      %v2461 = vpack.c.b16 %v1831, %v1824
      %v2462 = vpack.c.b16 %v1832, %v1825
      %v2463 = vpack.c.b16 %v1833, %v1826
      %v2464 = vpack.c.b16 %v1834, %v1827
      %v2465 = vpack.c.b16 %v1842, %v1835
      %v2466 = vpack.c.b16 %v1843, %v1836
      %v2467 = vpack.c.b16 %v1844, %v1837
      %v2468 = vpack.c.b16 %v1845, %v1838
      %v2469 = vpack.c.b16 %v1846, %v1839
      %v2470 = vpack.c.b16 %v1847, %v1840
      %v2471 = vpack.c.b16 %v1848, %v1841
      %v2472 = vpack.c.b16 %v1856, %v1849
      %v2473 = vpack.c.b16 %v1857, %v1850
      %v2474 = vpack.c.b16 %v1858, %v1851
      %v2475 = vpack.c.b16 %v1859, %v1852
      %v2476 = vpack.c.b16 %v1860, %v1853
      %v2477 = vpack.c.b16 %v1861, %v1854
      %v2478 = vpack.c.b16 %v1862, %v1855
      %v2479 = vpack.c.b16 %v1870, %v1863
      %v2480 = vpack.c.b16 %v1871, %v1864
      %v2481 = vpack.c.b16 %v1872, %v1865
      %v2482 = vpack.c.b16 %v1873, %v1866
      %v2483 = vpack.c.b16 %v1874, %v1867
      %v2484 = vpack.c.b16 %v1875, %v1868
      %v2485 = vpack.c.b16 %v1876, %v1869
      %v2486 = vpack.c.b16 %v1884, %v1877
      %v2487 = vpack.c.b16 %v1885, %v1878
      %v2488 = vpack.c.b16 %v1886, %v1879
      %v2489 = vpack.c.b16 %v1887, %v1880
      %v2490 = vpack.c.b16 %v1888, %v1881
      %v2491 = vpack.c.b16 %v1889, %v1882
      %v2492 = vpack.c.b16 %v1890, %v1883
      %v2493 = vpack.c.b16 %v1898, %v1891
      %v2494 = vpack.c.b16 %v1899, %v1892
      %v2495 = vpack.c.b16 %v1900, %v1893
      %v2496 = vpack.c.b16 %v1901, %v1894
      %v2497 = vpack.c.b16 %v1902, %v1895
      %v2498 = vpack.c.b16 %v1903, %v1896
      %v2499 = vpack.c.b16 %v1904, %v1897
      %v2500 = vpack.c.b16 %v1912, %v1905
      %v2501 = vpack.c.b16 %v1913, %v1906
      %v2502 = vpack.c.b16 %v1914, %v1907
      %v2503 = vpack.c.b16 %v1915, %v1908
      %v2504 = vpack.c.b16 %v1916, %v1909
      %v2505 = vpack.c.b16 %v1917, %v1910
      %v2506 = vpack.c.b16 %v1918, %v1911
      %v2507 = vpack.c.b16 %v1926, %v1919
      %v2508 = vpack.c.b16 %v1927, %v1920
      %v2509 = vpack.c.b16 %v1928, %v1921
      %v2510 = vpack.c.b16 %v1929, %v1922
      %v2511 = vpack.c.b16 %v1930, %v1923
      %v2512 = vpack.c.b16 %v1931, %v1924
      %v2513 = vpack.c.b16 %v1932, %v1925
      %v2514 = vpack.c.b16 %v1940, %v1933
      %v2515 = vpack.c.b16 %v1941, %v1934
      %v2516 = vpack.c.b16 %v1942, %v1935
      %v2517 = vpack.c.b16 %v1943, %v1936
      %v2518 = vpack.c.b16 %v1944, %v1937
      %v2519 = vpack.c.b16 %v1945, %v1938
      %v2520 = vpack.c.b16 %v1946, %v1939
      %v2521 = vpack.c.b16 %v1954, %v1947
      %v2522 = vpack.c.b16 %v1955, %v1948
      %v2523 = vpack.c.b16 %v1956, %v1949
      %v2524 = vpack.c.b16 %v1957, %v1950
      %v2525 = vpack.c.b16 %v1958, %v1951
      %v2526 = vpack.c.b16 %v1959, %v1952
      %v2527 = vpack.c.b16 %v1960, %v1953
      %v2528 = vpack.c.b16 %v1968, %v1961
      %v2529 = vpack.c.b16 %v1969, %v1962
      %v2530 = vpack.c.b16 %v1970, %v1963
      %v2531 = vpack.c.b16 %v1971, %v1964
      %v2532 = vpack.c.b16 %v1972, %v1965
      %v2533 = vpack.c.b16 %v1973, %v1966
      %v2534 = vpack.c.b16 %v1974, %v1967
      %v2535 = vpack.c.b16 %v1982, %v1975
      %v2536 = vpack.c.b16 %v1983, %v1976
      %v2537 = vpack.c.b16 %v1984, %v1977
      %v2538 = vpack.c.b16 %v1985, %v1978
      %v2539 = vpack.c.b16 %v1986, %v1979
      %v2540 = vpack.c.b16 %v1987, %v1980
      %v2541 = vpack.c.b16 %v1988, %v1981
      %v2542 = vpack.c.b16 %v1996, %v1989
      %v2543 = vpack.c.b16 %v1997, %v1990
      %v2544 = vpack.c.b16 %v1998, %v1991
      %v2545 = vpack.c.b16 %v1999, %v1992
      %v2546 = vpack.c.b16 %v2000, %v1993
      %v2547 = vpack.c.b16 %v2001, %v1994
      %v2548 = vpack.c.b16 %v2002, %v1995
      %v2549 = vpack.c.b16 %v2010, %v2003
      %v2550 = vpack.c.b16 %v2011, %v2004
      %v2551 = vpack.c.b16 %v2012, %v2005
      %v2552 = vpack.c.b16 %v2013, %v2006
      %v2553 = vpack.c.b16 %v2014, %v2007
      %v2554 = vpack.c.b16 %v2015, %v2008
      %v2555 = vpack.c.b16 %v2016, %v2009
      %v2556 = vpack.c.b16 %v2024, %v2017
      %v2557 = vpack.c.b16 %v2025, %v2018
      %v2558 = vpack.c.b16 %v2026, %v2019
      %v2559 = vpack.c.b16 %v2027, %v2020
      %v2560 = vpack.c.b16 %v2028, %v2021
      %v2561 = vpack.c.b16 %v2029, %v2022
      %v2562 = vpack.c.b16 %v2030, %v2023
      %v2563 = vpack.c.b16 %v2038, %v2031
      %v2564 = vpack.c.b16 %v2039, %v2032
      %v2565 = vpack.c.b16 %v2040, %v2033
      %v2566 = vpack.c.b16 %v2041, %v2034
      %v2567 = vpack.c.b16 %v2042, %v2035
      %v2568 = vpack.c.b16 %v2043, %v2036
      %v2569 = vpack.c.b16 %v2044, %v2037
      %v2570 = vpack.c.b16 %v2052, %v2045
      %v2571 = vpack.c.b16 %v2053, %v2046
      %v2572 = vpack.c.b16 %v2054, %v2047
      %v2573 = vpack.c.b16 %v2055, %v2048
      %v2574 = vpack.c.b16 %v2056, %v2049
      %v2575 = vpack.c.b16 %v2057, %v2050
      %v2576 = vpack.c.b16 %v2058, %v2051
      %v2577 = vpack.c.b16 %v2066, %v2059
      %v2578 = vpack.c.b16 %v2067, %v2060
      %v2579 = vpack.c.b16 %v2068, %v2061
      %v2580 = vpack.c.b16 %v2069, %v2062
      %v2581 = vpack.c.b16 %v2070, %v2063
      %v2582 = vpack.c.b16 %v2071, %v2064
      %v2583 = vpack.c.b16 %v2072, %v2065
      %v2584 = vpack.c.b16 %v2080, %v2073
      %v2585 = vpack.c.b16 %v2081, %v2074
      %v2586 = vpack.c.b16 %v2082, %v2075
      %v2587 = vpack.c.b16 %v2083, %v2076
      %v2588 = vpack.c.b16 %v2084, %v2077
      %v2589 = vpack.c.b16 %v2085, %v2078
      %v2590 = vpack.c.b16 %v2086, %v2079
      %v2591 = vpack.c.b16 %v2094, %v2087
      %v2592 = vpack.c.b16 %v2095, %v2088
      %v2593 = vpack.c.b16 %v2096, %v2089
      %v2594 = vpack.c.b16 %v2097, %v2090
      %v2595 = vpack.c.b16 %v2098, %v2091
      %v2596 = vpack.c.b16 %v2099, %v2092
      %v2597 = vpack.c.b16 %v2100, %v2093
      %v2598 = vpack.c.b16 %v2108, %v2101
      %v2599 = vpack.c.b16 %v2109, %v2102
      %v2600 = vpack.c.b16 %v2110, %v2103
      %v2601 = vpack.c.b16 %v2111, %v2104
      %v2602 = vpack.c.b16 %v2112, %v2105
      %v2603 = vpack.c.b16 %v2113, %v2106
      %v2604 = vpack.c.b16 %v2114, %v2107
      %v2605 = vpack.c.b16 %v2122, %v2115
      %v2606 = vpack.c.b16 %v2123, %v2116
      %v2607 = vpack.c.b16 %v2124, %v2117
      %v2608 = vpack.c.b16 %v2125, %v2118
      %v2609 = vpack.c.b16 %v2126, %v2119
      %v2610 = vpack.c.b16 %v2127, %v2120
      %v2611 = vpack.c.b16 %v2128, %v2121
      %v2612 = vpack.c.b16 %v2136, %v2129
      %v2613 = vpack.c.b16 %v2137, %v2130
      %v2614 = vpack.c.b16 %v2138, %v2131
      %v2615 = vpack.c.b16 %v2139, %v2132
      %v2616 = vpack.c.b16 %v2140, %v2133
      %v2617 = vpack.c.b16 %v2141, %v2134
      %v2618 = vpack.c.b16 %v2142, %v2135
      %v2619 = vpack.c.b16 %v2150, %v2143
      %v2620 = vpack.c.b16 %v2151, %v2144
      %v2621 = vpack.c.b16 %v2152, %v2145
      %v2622 = vpack.c.b16 %v2153, %v2146
      %v2623 = vpack.c.b16 %v2154, %v2147
      %v2624 = vpack.c.b16 %v2155, %v2148
      %v2625 = vpack.c.b16 %v2156, %v2149
      %v2626 = vpack.c.b16 %v2164, %v2157
      %v2627 = vpack.c.b16 %v2165, %v2158
      %v2628 = vpack.c.b16 %v2166, %v2159
      %v2629 = vpack.c.b16 %v2167, %v2160
      %v2630 = vpack.c.b16 %v2168, %v2161
      %v2631 = vpack.c.b16 %v2169, %v2162
      %v2632 = vpack.c.b16 %v2170, %v2163
      %v2633 = vpack.c.b16 %v2178, %v2171
      %v2634 = vpack.c.b16 %v2179, %v2172
      %v2635 = vpack.c.b16 %v2180, %v2173
      %v2636 = vpack.c.b16 %v2181, %v2174
      %v2637 = vpack.c.b16 %v2182, %v2175
      %v2638 = vpack.c.b16 %v2183, %v2176
      %v2639 = vpack.c.b16 %v2184, %v2177
      %v2640 = vpack.c.b16 %v2192, %v2185
      %v2641 = vpack.c.b16 %v2193, %v2186
      %v2642 = vpack.c.b16 %v2194, %v2187
      %v2643 = vpack.c.b16 %v2195, %v2188
      %v2644 = vpack.c.b16 %v2196, %v2189
      %v2645 = vpack.c.b16 %v2197, %v2190
      %v2646 = vpack.c.b16 %v2198, %v2191
      %vm3031 = vcmask 130048
      %v3033 = vsel %vm3031, %v784, 0
      %v3036 = vsel %vm3031, %v2205, 0
      %v3039 = vsel %vm3031, %v2212, 0
      %v3042 = vsel %vm3031, %v2219, 0
      %v3045 = vsel %vm3031, %v2226, 0
      %v3048 = vsel %vm3031, %v2233, 0
      %v3051 = vsel %vm3031, %v2240, 0
      %v3054 = vsel %vm3031, %v2247, 0
      %v3057 = vsel %vm3031, %v2254, 0
      %v3060 = vsel %vm3031, %v2261, 0
      %v3063 = vsel %vm3031, %v2268, 0
      %v3066 = vsel %vm3031, %v2275, 0
      %v3069 = vsel %vm3031, %v2282, 0
      %v3072 = vsel %vm3031, %v2289, 0
      %v3075 = vsel %vm3031, %v2296, 0
      %v3078 = vsel %vm3031, %v2303, 0
      %v3081 = vsel %vm3031, %v2310, 0
      %v3084 = vsel %vm3031, %v2317, 0
      %v3087 = vsel %vm3031, %v2324, 0
      %v3090 = vsel %vm3031, %v2331, 0
      %v3093 = vsel %vm3031, %v2338, 0
      %v3096 = vsel %vm3031, %v2345, 0
      %v3099 = vsel %vm3031, %v2352, 0
      %v3102 = vsel %vm3031, %v2359, 0
      %v3105 = vsel %vm3031, %v2366, 0
      %v3108 = vsel %vm3031, %v2373, 0
      %v3111 = vsel %vm3031, %v2380, 0
      %v3114 = vsel %vm3031, %v2387, 0
      %v3117 = vsel %vm3031, %v2394, 0
      %v3120 = vsel %vm3031, %v2401, 0
      %v3123 = vsel %vm3031, %v2408, 0
      %v3126 = vsel %vm3031, %v2415, 0
      %v3129 = vsel %vm3031, %v2422, 0
      %v3132 = vsel %vm3031, %v2429, 0
      %v3135 = vsel %vm3031, %v2436, 0
      %v3138 = vsel %vm3031, %v2443, 0
      %v3141 = vsel %vm3031, %v2450, 0
      %v3144 = vsel %vm3031, %v2457, 0
      %v3147 = vsel %vm3031, %v2464, 0
      %v3150 = vsel %vm3031, %v2471, 0
      %v3153 = vsel %vm3031, %v2478, 0
      %v3156 = vsel %vm3031, %v2485, 0
      %v3159 = vsel %vm3031, %v2492, 0
      %v3162 = vsel %vm3031, %v2499, 0
      %v3165 = vsel %vm3031, %v2506, 0
      %v3168 = vsel %vm3031, %v2513, 0
      %v3171 = vsel %vm3031, %v2520, 0
      %v3174 = vsel %vm3031, %v2527, 0
      %v3177 = vsel %vm3031, %v2534, 0
      %v3180 = vsel %vm3031, %v2541, 0
      %v3183 = vsel %vm3031, %v2548, 0
      %v3186 = vsel %vm3031, %v2555, 0
      %v3189 = vsel %vm3031, %v2562, 0
      %v3192 = vsel %vm3031, %v2569, 0
      %v3195 = vsel %vm3031, %v2576, 0
      %v3198 = vsel %vm3031, %v2583, 0
      %v3201 = vsel %vm3031, %v2590, 0
      %v3204 = vsel %vm3031, %v2597, 0
      %v3207 = vsel %vm3031, %v2604, 0
      %v3210 = vsel %vm3031, %v2611, 0
      %v3213 = vsel %vm3031, %v2618, 0
      %v3216 = vsel %vm3031, %v2625, 0
      %v3219 = vsel %vm3031, %v2632, 0
      %v3222 = vsel %vm3031, %v2639, 0
      %v3225 = vsel %vm3031, %v2646, 0
      %3227 = vmatpush.bf16.xpose.msra.mxu0 %v2248
      %3228 = vmatpush.bf16.xpose.msra.mxu0 %v2241
      %3229 = vmatpush.bf16.xpose.msra.mxu0 %v2234
      %3230 = vmatpush.bf16.xpose.msra.mxu0 %v2227
      %3231 = vmatpush.bf16.xpose.msra.mxu0 %v2220
      %3232 = vmatpush.bf16.xpose.msra.mxu0 %v2213
      %3233 = vmatpush.bf16.xpose.msra.mxu0 %v2206
      %3234 = vmatpush.bf16.xpose.msra.mxu0 %v2199
      %3235 = vmatmul.bf16.gmra.mxu0 %v778
      %v3236 = vpop.f32.mrf.mxu0
      %v3237 = vadd.f32 %v751, %v3236
      %v3238 = vpop.f32.mrf.mxu0
      %3239 = vdwg.mxu0
      %3240 = vmatpush.bf16.xpose.msra.mxu0 %v2249
      %3241 = vmatpush.bf16.xpose.msra.mxu0 %v2242
      %3242 = vmatpush.bf16.xpose.msra.mxu0 %v2235
      %3243 = vmatpush.bf16.xpose.msra.mxu0 %v2228
      %3244 = vmatpush.bf16.xpose.msra.mxu0 %v2221
      %3245 = vmatpush.bf16.xpose.msra.mxu0 %v2214
      %3246 = vmatpush.bf16.xpose.msra.mxu0 %v2207
      %3247 = vmatpush.bf16.xpose.msra.mxu0 %v2200
      %3248 = vmatmul.bf16.gmra.mxu0 %v779
      %v3249 = vpop.f32.mrf.mxu0
      %v3250 = vadd.f32 %v3237, %v3249
      %v3251 = vpop.f32.mrf.mxu0
      %3252 = vdwg.mxu0
      %3253 = vmatpush.bf16.xpose.msra.mxu0 %v2250
      %3254 = vmatpush.bf16.xpose.msra.mxu0 %v2243
      %3255 = vmatpush.bf16.xpose.msra.mxu0 %v2236
      %3256 = vmatpush.bf16.xpose.msra.mxu0 %v2229
      %3257 = vmatpush.bf16.xpose.msra.mxu0 %v2222
      %3258 = vmatpush.bf16.xpose.msra.mxu0 %v2215
      %3259 = vmatpush.bf16.xpose.msra.mxu0 %v2208
      %3260 = vmatpush.bf16.xpose.msra.mxu0 %v2201
      %3261 = vmatmul.bf16.gmra.mxu0 %v780
      %v3262 = vpop.f32.mrf.mxu0
      %v3263 = vadd.f32 %v3250, %v3262
      %v3264 = vpop.f32.mrf.mxu0
      %3265 = vdwg.mxu0
      %3266 = vmatpush.bf16.xpose.msra.mxu0 %v2251
      %3267 = vmatpush.bf16.xpose.msra.mxu0 %v2244
      %3268 = vmatpush.bf16.xpose.msra.mxu0 %v2237
      %3269 = vmatpush.bf16.xpose.msra.mxu0 %v2230
      %3270 = vmatpush.bf16.xpose.msra.mxu0 %v2223
      %3271 = vmatpush.bf16.xpose.msra.mxu0 %v2216
      %3272 = vmatpush.bf16.xpose.msra.mxu0 %v2209
      %3273 = vmatpush.bf16.xpose.msra.mxu0 %v2202
      %3274 = vmatmul.bf16.gmra.mxu0 %v781
      %v3275 = vpop.f32.mrf.mxu0
      %v3276 = vadd.f32 %v3263, %v3275
      %v3277 = vpop.f32.mrf.mxu0
      %3278 = vdwg.mxu0
      %3279 = vmatpush.bf16.xpose.msra.mxu0 %v2252
      %3280 = vmatpush.bf16.xpose.msra.mxu0 %v2245
      %3281 = vmatpush.bf16.xpose.msra.mxu0 %v2238
      %3282 = vmatpush.bf16.xpose.msra.mxu0 %v2231
      %3283 = vmatpush.bf16.xpose.msra.mxu0 %v2224
      %3284 = vmatpush.bf16.xpose.msra.mxu0 %v2217
      %3285 = vmatpush.bf16.xpose.msra.mxu0 %v2210
      %3286 = vmatpush.bf16.xpose.msra.mxu0 %v2203
      %3287 = vmatmul.bf16.gmra.mxu0 %v782
      %v3288 = vpop.f32.mrf.mxu0
      %v3289 = vadd.f32 %v3276, %v3288
      %v3290 = vpop.f32.mrf.mxu0
      %3291 = vdwg.mxu0
      %3292 = vmatpush.bf16.xpose.msra.mxu0 %v2253
      %3293 = vmatpush.bf16.xpose.msra.mxu0 %v2246
      %3294 = vmatpush.bf16.xpose.msra.mxu0 %v2239
      %3295 = vmatpush.bf16.xpose.msra.mxu0 %v2232
      %3296 = vmatpush.bf16.xpose.msra.mxu0 %v2225
      %3297 = vmatpush.bf16.xpose.msra.mxu0 %v2218
      %3298 = vmatpush.bf16.xpose.msra.mxu0 %v2211
      %3299 = vmatpush.bf16.xpose.msra.mxu0 %v2204
      %3300 = vmatmul.bf16.gmra.mxu0 %v783
      %v3301 = vpop.f32.mrf.mxu0
      %v3302 = vadd.f32 %v3289, %v3301
      %v3303 = vpop.f32.mrf.mxu0
      %3304 = vdwg.mxu0
      %3305 = vmatpush.bf16.xpose.msra.mxu0 %v3057
      %3306 = vmatpush.bf16.xpose.msra.mxu0 %v3054
      %3307 = vmatpush.bf16.xpose.msra.mxu0 %v3051
      %3308 = vmatpush.bf16.xpose.msra.mxu0 %v3048
      %3309 = vmatpush.bf16.xpose.msra.mxu0 %v3045
      %3310 = vmatpush.bf16.xpose.msra.mxu0 %v3042
      %3311 = vmatpush.bf16.xpose.msra.mxu0 %v3039
      %3312 = vmatpush.bf16.xpose.msra.mxu0 %v3036
      %3313 = vmatmul.bf16.gmra.mxu0 %v3033
      %v3314 = vpop.f32.mrf.mxu0
      %v3315 = vadd.f32 %v3302, %v3314
      %v3316 = vpop.f32.mrf.mxu0
      %3317 = vdwg.mxu0
      %3318 = vmatpush.bf16.xpose.msra.mxu0 %v2304
      %3319 = vmatpush.bf16.xpose.msra.mxu0 %v2297
      %3320 = vmatpush.bf16.xpose.msra.mxu0 %v2290
      %3321 = vmatpush.bf16.xpose.msra.mxu0 %v2283
      %3322 = vmatpush.bf16.xpose.msra.mxu0 %v2276
      %3323 = vmatpush.bf16.xpose.msra.mxu0 %v2269
      %3324 = vmatpush.bf16.xpose.msra.mxu0 %v2262
      %3325 = vmatpush.bf16.xpose.msra.mxu0 %v2255
      %3326 = vmatmul.bf16.gmra.mxu0 %v778
      %v3327 = vpop.f32.mrf.mxu0
      %v3328 = vadd.f32 %v752, %v3327
      %v3329 = vpop.f32.mrf.mxu0
      %3330 = vdwg.mxu0
      %3331 = vmatpush.bf16.xpose.msra.mxu0 %v2305
      %3332 = vmatpush.bf16.xpose.msra.mxu0 %v2298
      %3333 = vmatpush.bf16.xpose.msra.mxu0 %v2291
      %3334 = vmatpush.bf16.xpose.msra.mxu0 %v2284
      %3335 = vmatpush.bf16.xpose.msra.mxu0 %v2277
      %3336 = vmatpush.bf16.xpose.msra.mxu0 %v2270
      %3337 = vmatpush.bf16.xpose.msra.mxu0 %v2263
      %3338 = vmatpush.bf16.xpose.msra.mxu0 %v2256
      %3339 = vmatmul.bf16.gmra.mxu0 %v779
      %v3340 = vpop.f32.mrf.mxu0
      %v3341 = vadd.f32 %v3328, %v3340
      %v3342 = vpop.f32.mrf.mxu0
      %3343 = vdwg.mxu0
      %3344 = vmatpush.bf16.xpose.msra.mxu0 %v2306
      %3345 = vmatpush.bf16.xpose.msra.mxu0 %v2299
      %3346 = vmatpush.bf16.xpose.msra.mxu0 %v2292
      %3347 = vmatpush.bf16.xpose.msra.mxu0 %v2285
      %3348 = vmatpush.bf16.xpose.msra.mxu0 %v2278
      %3349 = vmatpush.bf16.xpose.msra.mxu0 %v2271
      %3350 = vmatpush.bf16.xpose.msra.mxu0 %v2264
      %3351 = vmatpush.bf16.xpose.msra.mxu0 %v2257
      %3352 = vmatmul.bf16.gmra.mxu0 %v780
      %v3353 = vpop.f32.mrf.mxu0
      %v3354 = vadd.f32 %v3341, %v3353
      %v3355 = vpop.f32.mrf.mxu0
      %3356 = vdwg.mxu0
      %3357 = vmatpush.bf16.xpose.msra.mxu0 %v2307
      %3358 = vmatpush.bf16.xpose.msra.mxu0 %v2300
      %3359 = vmatpush.bf16.xpose.msra.mxu0 %v2293
      %3360 = vmatpush.bf16.xpose.msra.mxu0 %v2286
      %3361 = vmatpush.bf16.xpose.msra.mxu0 %v2279
      %3362 = vmatpush.bf16.xpose.msra.mxu0 %v2272
      %3363 = vmatpush.bf16.xpose.msra.mxu0 %v2265
      %3364 = vmatpush.bf16.xpose.msra.mxu0 %v2258
      %3365 = vmatmul.bf16.gmra.mxu0 %v781
      %v3366 = vpop.f32.mrf.mxu0
      %v3367 = vadd.f32 %v3354, %v3366
      %v3368 = vpop.f32.mrf.mxu0
      %3369 = vdwg.mxu0
      %3370 = vmatpush.bf16.xpose.msra.mxu0 %v2308
      %3371 = vmatpush.bf16.xpose.msra.mxu0 %v2301
      %3372 = vmatpush.bf16.xpose.msra.mxu0 %v2294
      %3373 = vmatpush.bf16.xpose.msra.mxu0 %v2287
      %3374 = vmatpush.bf16.xpose.msra.mxu0 %v2280
      %3375 = vmatpush.bf16.xpose.msra.mxu0 %v2273
      %3376 = vmatpush.bf16.xpose.msra.mxu0 %v2266
      %3377 = vmatpush.bf16.xpose.msra.mxu0 %v2259
      %3378 = vmatmul.bf16.gmra.mxu0 %v782
      %v3379 = vpop.f32.mrf.mxu0
      %v3380 = vadd.f32 %v3367, %v3379
      %v3381 = vpop.f32.mrf.mxu0
      %3382 = vdwg.mxu0
      %3383 = vmatpush.bf16.xpose.msra.mxu0 %v2309
      %3384 = vmatpush.bf16.xpose.msra.mxu0 %v2302
      %3385 = vmatpush.bf16.xpose.msra.mxu0 %v2295
      %3386 = vmatpush.bf16.xpose.msra.mxu0 %v2288
      %3387 = vmatpush.bf16.xpose.msra.mxu0 %v2281
      %3388 = vmatpush.bf16.xpose.msra.mxu0 %v2274
      %3389 = vmatpush.bf16.xpose.msra.mxu0 %v2267
      %3390 = vmatpush.bf16.xpose.msra.mxu0 %v2260
      %3391 = vmatmul.bf16.gmra.mxu0 %v783
      %v3392 = vpop.f32.mrf.mxu0
      %v3393 = vadd.f32 %v3380, %v3392
      %v3394 = vpop.f32.mrf.mxu0
      %3395 = vdwg.mxu0
      %3396 = vmatpush.bf16.xpose.msra.mxu0 %v3081
      %3397 = vmatpush.bf16.xpose.msra.mxu0 %v3078
      %3398 = vmatpush.bf16.xpose.msra.mxu0 %v3075
      %3399 = vmatpush.bf16.xpose.msra.mxu0 %v3072
      %3400 = vmatpush.bf16.xpose.msra.mxu0 %v3069
      %3401 = vmatpush.bf16.xpose.msra.mxu0 %v3066
      %3402 = vmatpush.bf16.xpose.msra.mxu0 %v3063
      %3403 = vmatpush.bf16.xpose.msra.mxu0 %v3060
      %3404 = vmatmul.bf16.gmra.mxu0 %v3033
      %v3405 = vpop.f32.mrf.mxu0
      %v3406 = vadd.f32 %v3393, %v3405
      %v3407 = vpop.f32.mrf.mxu0
      %3408 = vdwg.mxu0
      %3409 = vmatpush.bf16.xpose.msra.mxu0 %v2360
      %3410 = vmatpush.bf16.xpose.msra.mxu0 %v2353
      %3411 = vmatpush.bf16.xpose.msra.mxu0 %v2346
      %3412 = vmatpush.bf16.xpose.msra.mxu0 %v2339
      %3413 = vmatpush.bf16.xpose.msra.mxu0 %v2332
      %3414 = vmatpush.bf16.xpose.msra.mxu0 %v2325
      %3415 = vmatpush.bf16.xpose.msra.mxu0 %v2318
      %3416 = vmatpush.bf16.xpose.msra.mxu0 %v2311
      %3417 = vmatmul.bf16.gmra.mxu0 %v778
      %v3418 = vpop.f32.mrf.mxu0
      %v3419 = vadd.f32 %v753, %v3418
      %v3420 = vpop.f32.mrf.mxu0
      %3421 = vdwg.mxu0
      %3422 = vmatpush.bf16.xpose.msra.mxu0 %v2361
      %3423 = vmatpush.bf16.xpose.msra.mxu0 %v2354
      %3424 = vmatpush.bf16.xpose.msra.mxu0 %v2347
      %3425 = vmatpush.bf16.xpose.msra.mxu0 %v2340
      %3426 = vmatpush.bf16.xpose.msra.mxu0 %v2333
      %3427 = vmatpush.bf16.xpose.msra.mxu0 %v2326
      %3428 = vmatpush.bf16.xpose.msra.mxu0 %v2319
      %3429 = vmatpush.bf16.xpose.msra.mxu0 %v2312
      %3430 = vmatmul.bf16.gmra.mxu0 %v779
      %v3431 = vpop.f32.mrf.mxu0
      %v3432 = vadd.f32 %v3419, %v3431
      %v3433 = vpop.f32.mrf.mxu0
      %3434 = vdwg.mxu0
      %3435 = vmatpush.bf16.xpose.msra.mxu0 %v2362
      %3436 = vmatpush.bf16.xpose.msra.mxu0 %v2355
      %3437 = vmatpush.bf16.xpose.msra.mxu0 %v2348
      %3438 = vmatpush.bf16.xpose.msra.mxu0 %v2341
      %3439 = vmatpush.bf16.xpose.msra.mxu0 %v2334
      %3440 = vmatpush.bf16.xpose.msra.mxu0 %v2327
      %3441 = vmatpush.bf16.xpose.msra.mxu0 %v2320
      %3442 = vmatpush.bf16.xpose.msra.mxu0 %v2313
      %3443 = vmatmul.bf16.gmra.mxu0 %v780
      %v3444 = vpop.f32.mrf.mxu0
      %v3445 = vadd.f32 %v3432, %v3444
      %v3446 = vpop.f32.mrf.mxu0
      %3447 = vdwg.mxu0
      %3448 = vmatpush.bf16.xpose.msra.mxu0 %v2363
      %3449 = vmatpush.bf16.xpose.msra.mxu0 %v2356
      %3450 = vmatpush.bf16.xpose.msra.mxu0 %v2349
      %3451 = vmatpush.bf16.xpose.msra.mxu0 %v2342
      %3452 = vmatpush.bf16.xpose.msra.mxu0 %v2335
      %3453 = vmatpush.bf16.xpose.msra.mxu0 %v2328
      %3454 = vmatpush.bf16.xpose.msra.mxu0 %v2321
      %3455 = vmatpush.bf16.xpose.msra.mxu0 %v2314
      %3456 = vmatmul.bf16.gmra.mxu0 %v781
      %v3457 = vpop.f32.mrf.mxu0
      %v3458 = vadd.f32 %v3445, %v3457
      %v3459 = vpop.f32.mrf.mxu0
      %3460 = vdwg.mxu0
      %3461 = vmatpush.bf16.xpose.msra.mxu0 %v2364
      %3462 = vmatpush.bf16.xpose.msra.mxu0 %v2357
      %3463 = vmatpush.bf16.xpose.msra.mxu0 %v2350
      %3464 = vmatpush.bf16.xpose.msra.mxu0 %v2343
      %3465 = vmatpush.bf16.xpose.msra.mxu0 %v2336
      %3466 = vmatpush.bf16.xpose.msra.mxu0 %v2329
      %3467 = vmatpush.bf16.xpose.msra.mxu0 %v2322
      %3468 = vmatpush.bf16.xpose.msra.mxu0 %v2315
      %3469 = vmatmul.bf16.gmra.mxu0 %v782
      %v3470 = vpop.f32.mrf.mxu0
      %v3471 = vadd.f32 %v3458, %v3470
      %v3472 = vpop.f32.mrf.mxu0
      %3473 = vdwg.mxu0
      %3474 = vmatpush.bf16.xpose.msra.mxu0 %v2365
      %3475 = vmatpush.bf16.xpose.msra.mxu0 %v2358
      %3476 = vmatpush.bf16.xpose.msra.mxu0 %v2351
      %3477 = vmatpush.bf16.xpose.msra.mxu0 %v2344
      %3478 = vmatpush.bf16.xpose.msra.mxu0 %v2337
      %3479 = vmatpush.bf16.xpose.msra.mxu0 %v2330
      %3480 = vmatpush.bf16.xpose.msra.mxu0 %v2323
      %3481 = vmatpush.bf16.xpose.msra.mxu0 %v2316
      %3482 = vmatmul.bf16.gmra.mxu0 %v783
      %v3483 = vpop.f32.mrf.mxu0
      %v3484 = vadd.f32 %v3471, %v3483
      %v3485 = vpop.f32.mrf.mxu0
      %3486 = vdwg.mxu0
      %3487 = vmatpush.bf16.xpose.msra.mxu0 %v3105
      %3488 = vmatpush.bf16.xpose.msra.mxu0 %v3102
      %3489 = vmatpush.bf16.xpose.msra.mxu0 %v3099
      %3490 = vmatpush.bf16.xpose.msra.mxu0 %v3096
      %3491 = vmatpush.bf16.xpose.msra.mxu0 %v3093
      %3492 = vmatpush.bf16.xpose.msra.mxu0 %v3090
      %3493 = vmatpush.bf16.xpose.msra.mxu0 %v3087
      %3494 = vmatpush.bf16.xpose.msra.mxu0 %v3084
      %3495 = vmatmul.bf16.gmra.mxu0 %v3033
      %v3496 = vpop.f32.mrf.mxu0
      %v3497 = vadd.f32 %v3484, %v3496
      %v3498 = vpop.f32.mrf.mxu0
      %3499 = vdwg.mxu0
      %3500 = vmatpush.bf16.xpose.msra.mxu0 %v2416
      %3501 = vmatpush.bf16.xpose.msra.mxu0 %v2409
      %3502 = vmatpush.bf16.xpose.msra.mxu0 %v2402
      %3503 = vmatpush.bf16.xpose.msra.mxu0 %v2395
      %3504 = vmatpush.bf16.xpose.msra.mxu0 %v2388
      %3505 = vmatpush.bf16.xpose.msra.mxu0 %v2381
      %3506 = vmatpush.bf16.xpose.msra.mxu0 %v2374
      %3507 = vmatpush.bf16.xpose.msra.mxu0 %v2367
      %3508 = vmatmul.bf16.gmra.mxu0 %v778
      %v3509 = vpop.f32.mrf.mxu0
      %v3510 = vadd.f32 %v754, %v3509
      %v3511 = vpop.f32.mrf.mxu0
      %3512 = vdwg.mxu0
      %3513 = vmatpush.bf16.xpose.msra.mxu0 %v2417
      %3514 = vmatpush.bf16.xpose.msra.mxu0 %v2410
      %3515 = vmatpush.bf16.xpose.msra.mxu0 %v2403
      %3516 = vmatpush.bf16.xpose.msra.mxu0 %v2396
      %3517 = vmatpush.bf16.xpose.msra.mxu0 %v2389
      %3518 = vmatpush.bf16.xpose.msra.mxu0 %v2382
      %3519 = vmatpush.bf16.xpose.msra.mxu0 %v2375
      %3520 = vmatpush.bf16.xpose.msra.mxu0 %v2368
      %3521 = vmatmul.bf16.gmra.mxu0 %v779
      %v3522 = vpop.f32.mrf.mxu0
      %v3523 = vadd.f32 %v3510, %v3522
      %v3524 = vpop.f32.mrf.mxu0
      %3525 = vdwg.mxu0
      %3526 = vmatpush.bf16.xpose.msra.mxu0 %v2418
      %3527 = vmatpush.bf16.xpose.msra.mxu0 %v2411
      %3528 = vmatpush.bf16.xpose.msra.mxu0 %v2404
      %3529 = vmatpush.bf16.xpose.msra.mxu0 %v2397
      %3530 = vmatpush.bf16.xpose.msra.mxu0 %v2390
      %3531 = vmatpush.bf16.xpose.msra.mxu0 %v2383
      %3532 = vmatpush.bf16.xpose.msra.mxu0 %v2376
      %3533 = vmatpush.bf16.xpose.msra.mxu0 %v2369
      %3534 = vmatmul.bf16.gmra.mxu0 %v780
      %v3535 = vpop.f32.mrf.mxu0
      %v3536 = vadd.f32 %v3523, %v3535
      %v3537 = vpop.f32.mrf.mxu0
      %3538 = vdwg.mxu0
      %3539 = vmatpush.bf16.xpose.msra.mxu0 %v2419
      %3540 = vmatpush.bf16.xpose.msra.mxu0 %v2412
      %3541 = vmatpush.bf16.xpose.msra.mxu0 %v2405
      %3542 = vmatpush.bf16.xpose.msra.mxu0 %v2398
      %3543 = vmatpush.bf16.xpose.msra.mxu0 %v2391
      %3544 = vmatpush.bf16.xpose.msra.mxu0 %v2384
      %3545 = vmatpush.bf16.xpose.msra.mxu0 %v2377
      %3546 = vmatpush.bf16.xpose.msra.mxu0 %v2370
      %3547 = vmatmul.bf16.gmra.mxu0 %v781
      %v3548 = vpop.f32.mrf.mxu0
      %v3549 = vadd.f32 %v3536, %v3548
      %v3550 = vpop.f32.mrf.mxu0
      %3551 = vdwg.mxu0
      %3552 = vmatpush.bf16.xpose.msra.mxu0 %v2420
      %3553 = vmatpush.bf16.xpose.msra.mxu0 %v2413
      %3554 = vmatpush.bf16.xpose.msra.mxu0 %v2406
      %3555 = vmatpush.bf16.xpose.msra.mxu0 %v2399
      %3556 = vmatpush.bf16.xpose.msra.mxu0 %v2392
      %3557 = vmatpush.bf16.xpose.msra.mxu0 %v2385
      %3558 = vmatpush.bf16.xpose.msra.mxu0 %v2378
      %3559 = vmatpush.bf16.xpose.msra.mxu0 %v2371
      %3560 = vmatmul.bf16.gmra.mxu0 %v782
      %v3561 = vpop.f32.mrf.mxu0
      %v3562 = vadd.f32 %v3549, %v3561
      %v3563 = vpop.f32.mrf.mxu0
      %3564 = vdwg.mxu0
      %3565 = vmatpush.bf16.xpose.msra.mxu0 %v2421
      %3566 = vmatpush.bf16.xpose.msra.mxu0 %v2414
      %3567 = vmatpush.bf16.xpose.msra.mxu0 %v2407
      %3568 = vmatpush.bf16.xpose.msra.mxu0 %v2400
      %3569 = vmatpush.bf16.xpose.msra.mxu0 %v2393
      %3570 = vmatpush.bf16.xpose.msra.mxu0 %v2386
      %3571 = vmatpush.bf16.xpose.msra.mxu0 %v2379
      %3572 = vmatpush.bf16.xpose.msra.mxu0 %v2372
      %3573 = vmatmul.bf16.gmra.mxu0 %v783
      %v3574 = vpop.f32.mrf.mxu0
      %v3575 = vadd.f32 %v3562, %v3574
      %v3576 = vpop.f32.mrf.mxu0
      %3577 = vdwg.mxu0
      %3578 = vmatpush.bf16.xpose.msra.mxu0 %v3129
      %3579 = vmatpush.bf16.xpose.msra.mxu0 %v3126
      %3580 = vmatpush.bf16.xpose.msra.mxu0 %v3123
      %3581 = vmatpush.bf16.xpose.msra.mxu0 %v3120
      %3582 = vmatpush.bf16.xpose.msra.mxu0 %v3117
      %3583 = vmatpush.bf16.xpose.msra.mxu0 %v3114
      %3584 = vmatpush.bf16.xpose.msra.mxu0 %v3111
      %3585 = vmatpush.bf16.xpose.msra.mxu0 %v3108
      %3586 = vmatmul.bf16.gmra.mxu0 %v3033
      %v3587 = vpop.f32.mrf.mxu0
      %v3588 = vadd.f32 %v3575, %v3587
      %v3589 = vpop.f32.mrf.mxu0
      %3590 = vdwg.mxu0
      %3591 = vmatpush.bf16.xpose.msra.mxu0 %v2472
      %3592 = vmatpush.bf16.xpose.msra.mxu0 %v2465
      %3593 = vmatpush.bf16.xpose.msra.mxu0 %v2458
      %3594 = vmatpush.bf16.xpose.msra.mxu0 %v2451
      %3595 = vmatpush.bf16.xpose.msra.mxu0 %v2444
      %3596 = vmatpush.bf16.xpose.msra.mxu0 %v2437
      %3597 = vmatpush.bf16.xpose.msra.mxu0 %v2430
      %3598 = vmatpush.bf16.xpose.msra.mxu0 %v2423
      %3599 = vmatmul.bf16.gmra.mxu0 %v778
      %v3600 = vpop.f32.mrf.mxu0
      %v3601 = vadd.f32 %v755, %v3600
      %v3602 = vpop.f32.mrf.mxu0
      %3603 = vdwg.mxu0
      %3604 = vmatpush.bf16.xpose.msra.mxu0 %v2473
      %3605 = vmatpush.bf16.xpose.msra.mxu0 %v2466
      %3606 = vmatpush.bf16.xpose.msra.mxu0 %v2459
      %3607 = vmatpush.bf16.xpose.msra.mxu0 %v2452
      %3608 = vmatpush.bf16.xpose.msra.mxu0 %v2445
      %3609 = vmatpush.bf16.xpose.msra.mxu0 %v2438
      %3610 = vmatpush.bf16.xpose.msra.mxu0 %v2431
      %3611 = vmatpush.bf16.xpose.msra.mxu0 %v2424
      %3612 = vmatmul.bf16.gmra.mxu0 %v779
      %v3613 = vpop.f32.mrf.mxu0
      %v3614 = vadd.f32 %v3601, %v3613
      %v3615 = vpop.f32.mrf.mxu0
      %3616 = vdwg.mxu0
      %3617 = vmatpush.bf16.xpose.msra.mxu0 %v2474
      %3618 = vmatpush.bf16.xpose.msra.mxu0 %v2467
      %3619 = vmatpush.bf16.xpose.msra.mxu0 %v2460
      %3620 = vmatpush.bf16.xpose.msra.mxu0 %v2453
      %3621 = vmatpush.bf16.xpose.msra.mxu0 %v2446
      %3622 = vmatpush.bf16.xpose.msra.mxu0 %v2439
      %3623 = vmatpush.bf16.xpose.msra.mxu0 %v2432
      %3624 = vmatpush.bf16.xpose.msra.mxu0 %v2425
      %3625 = vmatmul.bf16.gmra.mxu0 %v780
      %v3626 = vpop.f32.mrf.mxu0
      %v3627 = vadd.f32 %v3614, %v3626
      %v3628 = vpop.f32.mrf.mxu0
      %3629 = vdwg.mxu0
      %3630 = vmatpush.bf16.xpose.msra.mxu0 %v2475
      %3631 = vmatpush.bf16.xpose.msra.mxu0 %v2468
      %3632 = vmatpush.bf16.xpose.msra.mxu0 %v2461
      %3633 = vmatpush.bf16.xpose.msra.mxu0 %v2454
      %3634 = vmatpush.bf16.xpose.msra.mxu0 %v2447
      %3635 = vmatpush.bf16.xpose.msra.mxu0 %v2440
      %3636 = vmatpush.bf16.xpose.msra.mxu0 %v2433
      %3637 = vmatpush.bf16.xpose.msra.mxu0 %v2426
      %3638 = vmatmul.bf16.gmra.mxu0 %v781
      %v3639 = vpop.f32.mrf.mxu0
      %v3640 = vadd.f32 %v3627, %v3639
      %v3641 = vpop.f32.mrf.mxu0
      %3642 = vdwg.mxu0
      %3643 = vmatpush.bf16.xpose.msra.mxu0 %v2476
      %3644 = vmatpush.bf16.xpose.msra.mxu0 %v2469
      %3645 = vmatpush.bf16.xpose.msra.mxu0 %v2462
      %3646 = vmatpush.bf16.xpose.msra.mxu0 %v2455
      %3647 = vmatpush.bf16.xpose.msra.mxu0 %v2448
      %3648 = vmatpush.bf16.xpose.msra.mxu0 %v2441
      %3649 = vmatpush.bf16.xpose.msra.mxu0 %v2434
      %3650 = vmatpush.bf16.xpose.msra.mxu0 %v2427
      %3651 = vmatmul.bf16.gmra.mxu0 %v782
      %v3652 = vpop.f32.mrf.mxu0
      %v3653 = vadd.f32 %v3640, %v3652
      %v3654 = vpop.f32.mrf.mxu0
      %3655 = vdwg.mxu0
      %3656 = vmatpush.bf16.xpose.msra.mxu0 %v2477
      %3657 = vmatpush.bf16.xpose.msra.mxu0 %v2470
      %3658 = vmatpush.bf16.xpose.msra.mxu0 %v2463
      %3659 = vmatpush.bf16.xpose.msra.mxu0 %v2456
      %3660 = vmatpush.bf16.xpose.msra.mxu0 %v2449
      %3661 = vmatpush.bf16.xpose.msra.mxu0 %v2442
      %3662 = vmatpush.bf16.xpose.msra.mxu0 %v2435
      %3663 = vmatpush.bf16.xpose.msra.mxu0 %v2428
      %3664 = vmatmul.bf16.gmra.mxu0 %v783
      %v3665 = vpop.f32.mrf.mxu0
      %v3666 = vadd.f32 %v3653, %v3665
      %v3667 = vpop.f32.mrf.mxu0
      %3668 = vdwg.mxu0
      %3669 = vmatpush.bf16.xpose.msra.mxu0 %v3153
      %3670 = vmatpush.bf16.xpose.msra.mxu0 %v3150
      %3671 = vmatpush.bf16.xpose.msra.mxu0 %v3147
      %3672 = vmatpush.bf16.xpose.msra.mxu0 %v3144
      %3673 = vmatpush.bf16.xpose.msra.mxu0 %v3141
      %3674 = vmatpush.bf16.xpose.msra.mxu0 %v3138
      %3675 = vmatpush.bf16.xpose.msra.mxu0 %v3135
      %3676 = vmatpush.bf16.xpose.msra.mxu0 %v3132
      %3677 = vmatmul.bf16.gmra.mxu0 %v3033
      %v3678 = vpop.f32.mrf.mxu0
      %v3679 = vadd.f32 %v3666, %v3678
      %v3680 = vpop.f32.mrf.mxu0
      %3681 = vdwg.mxu0
      %3682 = vmatpush.bf16.xpose.msra.mxu0 %v2528
      %3683 = vmatpush.bf16.xpose.msra.mxu0 %v2521
      %3684 = vmatpush.bf16.xpose.msra.mxu0 %v2514
      %3685 = vmatpush.bf16.xpose.msra.mxu0 %v2507
      %3686 = vmatpush.bf16.xpose.msra.mxu0 %v2500
      %3687 = vmatpush.bf16.xpose.msra.mxu0 %v2493
      %3688 = vmatpush.bf16.xpose.msra.mxu0 %v2486
      %3689 = vmatpush.bf16.xpose.msra.mxu0 %v2479
      %3690 = vmatmul.bf16.gmra.mxu0 %v778
      %v3691 = vpop.f32.mrf.mxu0
      %v3692 = vadd.f32 %v756, %v3691
      %v3693 = vpop.f32.mrf.mxu0
      %3694 = vdwg.mxu0
      %3695 = vmatpush.bf16.xpose.msra.mxu0 %v2529
      %3696 = vmatpush.bf16.xpose.msra.mxu0 %v2522
      %3697 = vmatpush.bf16.xpose.msra.mxu0 %v2515
      %3698 = vmatpush.bf16.xpose.msra.mxu0 %v2508
      %3699 = vmatpush.bf16.xpose.msra.mxu0 %v2501
      %3700 = vmatpush.bf16.xpose.msra.mxu0 %v2494
      %3701 = vmatpush.bf16.xpose.msra.mxu0 %v2487
      %3702 = vmatpush.bf16.xpose.msra.mxu0 %v2480
      %3703 = vmatmul.bf16.gmra.mxu0 %v779
      %v3704 = vpop.f32.mrf.mxu0
      %v3705 = vadd.f32 %v3692, %v3704
      %v3706 = vpop.f32.mrf.mxu0
      %3707 = vdwg.mxu0
      %3708 = vmatpush.bf16.xpose.msra.mxu0 %v2530
      %3709 = vmatpush.bf16.xpose.msra.mxu0 %v2523
      %3710 = vmatpush.bf16.xpose.msra.mxu0 %v2516
      %3711 = vmatpush.bf16.xpose.msra.mxu0 %v2509
      %3712 = vmatpush.bf16.xpose.msra.mxu0 %v2502
      %3713 = vmatpush.bf16.xpose.msra.mxu0 %v2495
      %3714 = vmatpush.bf16.xpose.msra.mxu0 %v2488
      %3715 = vmatpush.bf16.xpose.msra.mxu0 %v2481
      %3716 = vmatmul.bf16.gmra.mxu0 %v780
      %v3717 = vpop.f32.mrf.mxu0
      %v3718 = vadd.f32 %v3705, %v3717
      %v3719 = vpop.f32.mrf.mxu0
      %3720 = vdwg.mxu0
      %3721 = vmatpush.bf16.xpose.msra.mxu0 %v2531
      %3722 = vmatpush.bf16.xpose.msra.mxu0 %v2524
      %3723 = vmatpush.bf16.xpose.msra.mxu0 %v2517
      %3724 = vmatpush.bf16.xpose.msra.mxu0 %v2510
      %3725 = vmatpush.bf16.xpose.msra.mxu0 %v2503
      %3726 = vmatpush.bf16.xpose.msra.mxu0 %v2496
      %3727 = vmatpush.bf16.xpose.msra.mxu0 %v2489
      %3728 = vmatpush.bf16.xpose.msra.mxu0 %v2482
      %3729 = vmatmul.bf16.gmra.mxu0 %v781
      %v3730 = vpop.f32.mrf.mxu0
      %v3731 = vadd.f32 %v3718, %v3730
      %v3732 = vpop.f32.mrf.mxu0
      %3733 = vdwg.mxu0
      %3734 = vmatpush.bf16.xpose.msra.mxu0 %v2532
      %3735 = vmatpush.bf16.xpose.msra.mxu0 %v2525
      %3736 = vmatpush.bf16.xpose.msra.mxu0 %v2518
      %3737 = vmatpush.bf16.xpose.msra.mxu0 %v2511
      %3738 = vmatpush.bf16.xpose.msra.mxu0 %v2504
      %3739 = vmatpush.bf16.xpose.msra.mxu0 %v2497
      %3740 = vmatpush.bf16.xpose.msra.mxu0 %v2490
      %3741 = vmatpush.bf16.xpose.msra.mxu0 %v2483
      %3742 = vmatmul.bf16.gmra.mxu0 %v782
      %v3743 = vpop.f32.mrf.mxu0
      %v3744 = vadd.f32 %v3731, %v3743
      %v3745 = vpop.f32.mrf.mxu0
      %3746 = vdwg.mxu0
      %3747 = vmatpush.bf16.xpose.msra.mxu0 %v2533
      %3748 = vmatpush.bf16.xpose.msra.mxu0 %v2526
      %3749 = vmatpush.bf16.xpose.msra.mxu0 %v2519
      %3750 = vmatpush.bf16.xpose.msra.mxu0 %v2512
      %3751 = vmatpush.bf16.xpose.msra.mxu0 %v2505
      %3752 = vmatpush.bf16.xpose.msra.mxu0 %v2498
      %3753 = vmatpush.bf16.xpose.msra.mxu0 %v2491
      %3754 = vmatpush.bf16.xpose.msra.mxu0 %v2484
      %3755 = vmatmul.bf16.gmra.mxu0 %v783
      %v3756 = vpop.f32.mrf.mxu0
      %v3757 = vadd.f32 %v3744, %v3756
      %v3758 = vpop.f32.mrf.mxu0
      %3759 = vdwg.mxu0
      %3760 = vmatpush.bf16.xpose.msra.mxu0 %v3177
      %3761 = vmatpush.bf16.xpose.msra.mxu0 %v3174
      %3762 = vmatpush.bf16.xpose.msra.mxu0 %v3171
      %3763 = vmatpush.bf16.xpose.msra.mxu0 %v3168
      %3764 = vmatpush.bf16.xpose.msra.mxu0 %v3165
      %3765 = vmatpush.bf16.xpose.msra.mxu0 %v3162
      %3766 = vmatpush.bf16.xpose.msra.mxu0 %v3159
      %3767 = vmatpush.bf16.xpose.msra.mxu0 %v3156
      %3768 = vmatmul.bf16.gmra.mxu0 %v3033
      %v3769 = vpop.f32.mrf.mxu0
      %v3770 = vadd.f32 %v3757, %v3769
      %v3771 = vpop.f32.mrf.mxu0
      %3772 = vdwg.mxu0
      %3773 = vmatpush.bf16.xpose.msra.mxu0 %v2584
      %3774 = vmatpush.bf16.xpose.msra.mxu0 %v2577
      %3775 = vmatpush.bf16.xpose.msra.mxu0 %v2570
      %3776 = vmatpush.bf16.xpose.msra.mxu0 %v2563
      %3777 = vmatpush.bf16.xpose.msra.mxu0 %v2556
      %3778 = vmatpush.bf16.xpose.msra.mxu0 %v2549
      %3779 = vmatpush.bf16.xpose.msra.mxu0 %v2542
      %3780 = vmatpush.bf16.xpose.msra.mxu0 %v2535
      %3781 = vmatmul.bf16.gmra.mxu0 %v778
      %v3782 = vpop.f32.mrf.mxu0
      %v3783 = vadd.f32 %v757, %v3782
      %v3784 = vpop.f32.mrf.mxu0
      %3785 = vdwg.mxu0
      %3786 = vmatpush.bf16.xpose.msra.mxu0 %v2585
      %3787 = vmatpush.bf16.xpose.msra.mxu0 %v2578
      %3788 = vmatpush.bf16.xpose.msra.mxu0 %v2571
      %3789 = vmatpush.bf16.xpose.msra.mxu0 %v2564
      %3790 = vmatpush.bf16.xpose.msra.mxu0 %v2557
      %3791 = vmatpush.bf16.xpose.msra.mxu0 %v2550
      %3792 = vmatpush.bf16.xpose.msra.mxu0 %v2543
      %3793 = vmatpush.bf16.xpose.msra.mxu0 %v2536
      %3794 = vmatmul.bf16.gmra.mxu0 %v779
      %v3795 = vpop.f32.mrf.mxu0
      %v3796 = vadd.f32 %v3783, %v3795
      %v3797 = vpop.f32.mrf.mxu0
      %3798 = vdwg.mxu0
      %3799 = vmatpush.bf16.xpose.msra.mxu0 %v2586
      %3800 = vmatpush.bf16.xpose.msra.mxu0 %v2579
      %3801 = vmatpush.bf16.xpose.msra.mxu0 %v2572
      %3802 = vmatpush.bf16.xpose.msra.mxu0 %v2565
      %3803 = vmatpush.bf16.xpose.msra.mxu0 %v2558
      %3804 = vmatpush.bf16.xpose.msra.mxu0 %v2551
      %3805 = vmatpush.bf16.xpose.msra.mxu0 %v2544
      %3806 = vmatpush.bf16.xpose.msra.mxu0 %v2537
      %3807 = vmatmul.bf16.gmra.mxu0 %v780
      %v3808 = vpop.f32.mrf.mxu0
      %v3809 = vadd.f32 %v3796, %v3808
      %v3810 = vpop.f32.mrf.mxu0
      %3811 = vdwg.mxu0
      %3812 = vmatpush.bf16.xpose.msra.mxu0 %v2587
      %3813 = vmatpush.bf16.xpose.msra.mxu0 %v2580
      %3814 = vmatpush.bf16.xpose.msra.mxu0 %v2573
      %3815 = vmatpush.bf16.xpose.msra.mxu0 %v2566
      %3816 = vmatpush.bf16.xpose.msra.mxu0 %v2559
      %3817 = vmatpush.bf16.xpose.msra.mxu0 %v2552
      %3818 = vmatpush.bf16.xpose.msra.mxu0 %v2545
      %3819 = vmatpush.bf16.xpose.msra.mxu0 %v2538
      %3820 = vmatmul.bf16.gmra.mxu0 %v781
      %v3821 = vpop.f32.mrf.mxu0
      %v3822 = vadd.f32 %v3809, %v3821
      %v3823 = vpop.f32.mrf.mxu0
      %3824 = vdwg.mxu0
      %3825 = vmatpush.bf16.xpose.msra.mxu0 %v2588
      %3826 = vmatpush.bf16.xpose.msra.mxu0 %v2581
      %3827 = vmatpush.bf16.xpose.msra.mxu0 %v2574
      %3828 = vmatpush.bf16.xpose.msra.mxu0 %v2567
      %3829 = vmatpush.bf16.xpose.msra.mxu0 %v2560
      %3830 = vmatpush.bf16.xpose.msra.mxu0 %v2553
      %3831 = vmatpush.bf16.xpose.msra.mxu0 %v2546
      %3832 = vmatpush.bf16.xpose.msra.mxu0 %v2539
      %3833 = vmatmul.bf16.gmra.mxu0 %v782
      %v3834 = vpop.f32.mrf.mxu0
      %v3835 = vadd.f32 %v3822, %v3834
      %v3836 = vpop.f32.mrf.mxu0
      %3837 = vdwg.mxu0
      %3838 = vmatpush.bf16.xpose.msra.mxu0 %v2589
      %3839 = vmatpush.bf16.xpose.msra.mxu0 %v2582
      %3840 = vmatpush.bf16.xpose.msra.mxu0 %v2575
      %3841 = vmatpush.bf16.xpose.msra.mxu0 %v2568
      %3842 = vmatpush.bf16.xpose.msra.mxu0 %v2561
      %3843 = vmatpush.bf16.xpose.msra.mxu0 %v2554
      %3844 = vmatpush.bf16.xpose.msra.mxu0 %v2547
      %3845 = vmatpush.bf16.xpose.msra.mxu0 %v2540
      %3846 = vmatmul.bf16.gmra.mxu0 %v783
      %v3847 = vpop.f32.mrf.mxu0
      %v3848 = vadd.f32 %v3835, %v3847
      %v3849 = vpop.f32.mrf.mxu0
      %3850 = vdwg.mxu0
      %3851 = vmatpush.bf16.xpose.msra.mxu0 %v3201
      %3852 = vmatpush.bf16.xpose.msra.mxu0 %v3198
      %3853 = vmatpush.bf16.xpose.msra.mxu0 %v3195
      %3854 = vmatpush.bf16.xpose.msra.mxu0 %v3192
      %3855 = vmatpush.bf16.xpose.msra.mxu0 %v3189
      %3856 = vmatpush.bf16.xpose.msra.mxu0 %v3186
      %3857 = vmatpush.bf16.xpose.msra.mxu0 %v3183
      %3858 = vmatpush.bf16.xpose.msra.mxu0 %v3180
      %3859 = vmatmul.bf16.gmra.mxu0 %v3033
      %v3860 = vpop.f32.mrf.mxu0
      %v3861 = vadd.f32 %v3848, %v3860
      %v3862 = vpop.f32.mrf.mxu0
      %3863 = vdwg.mxu0
      %3864 = vmatpush.bf16.xpose.msra.mxu0 %v2640
      %3865 = vmatpush.bf16.xpose.msra.mxu0 %v2633
      %3866 = vmatpush.bf16.xpose.msra.mxu0 %v2626
      %3867 = vmatpush.bf16.xpose.msra.mxu0 %v2619
      %3868 = vmatpush.bf16.xpose.msra.mxu0 %v2612
      %3869 = vmatpush.bf16.xpose.msra.mxu0 %v2605
      %3870 = vmatpush.bf16.xpose.msra.mxu0 %v2598
      %3871 = vmatpush.bf16.xpose.msra.mxu0 %v2591
      %3872 = vmatmul.bf16.gmra.mxu0 %v778
      %v3873 = vpop.f32.mrf.mxu0
      %v3874 = vadd.f32 %v758, %v3873
      %v3875 = vpop.f32.mrf.mxu0
      %3876 = vdwg.mxu0
      %3877 = vmatpush.bf16.xpose.msra.mxu0 %v2641
      %3878 = vmatpush.bf16.xpose.msra.mxu0 %v2634
      %3879 = vmatpush.bf16.xpose.msra.mxu0 %v2627
      %3880 = vmatpush.bf16.xpose.msra.mxu0 %v2620
      %3881 = vmatpush.bf16.xpose.msra.mxu0 %v2613
      %3882 = vmatpush.bf16.xpose.msra.mxu0 %v2606
      %3883 = vmatpush.bf16.xpose.msra.mxu0 %v2599
      %3884 = vmatpush.bf16.xpose.msra.mxu0 %v2592
      %3885 = vmatmul.bf16.gmra.mxu0 %v779
      %v3886 = vpop.f32.mrf.mxu0
      %v3887 = vadd.f32 %v3874, %v3886
      %v3888 = vpop.f32.mrf.mxu0
      %3889 = vdwg.mxu0
      %3890 = vmatpush.bf16.xpose.msra.mxu0 %v2642
      %3891 = vmatpush.bf16.xpose.msra.mxu0 %v2635
      %3892 = vmatpush.bf16.xpose.msra.mxu0 %v2628
      %3893 = vmatpush.bf16.xpose.msra.mxu0 %v2621
      %3894 = vmatpush.bf16.xpose.msra.mxu0 %v2614
      %3895 = vmatpush.bf16.xpose.msra.mxu0 %v2607
      %3896 = vmatpush.bf16.xpose.msra.mxu0 %v2600
      %3897 = vmatpush.bf16.xpose.msra.mxu0 %v2593
      %3898 = vmatmul.bf16.gmra.mxu0 %v780
      %v3899 = vpop.f32.mrf.mxu0
      %v3900 = vadd.f32 %v3887, %v3899
      %v3901 = vpop.f32.mrf.mxu0
      %3902 = vdwg.mxu0
      %3903 = vmatpush.bf16.xpose.msra.mxu0 %v2643
      %3904 = vmatpush.bf16.xpose.msra.mxu0 %v2636
      %3905 = vmatpush.bf16.xpose.msra.mxu0 %v2629
      %3906 = vmatpush.bf16.xpose.msra.mxu0 %v2622
      %3907 = vmatpush.bf16.xpose.msra.mxu0 %v2615
      %3908 = vmatpush.bf16.xpose.msra.mxu0 %v2608
      %3909 = vmatpush.bf16.xpose.msra.mxu0 %v2601
      %3910 = vmatpush.bf16.xpose.msra.mxu0 %v2594
      %3911 = vmatmul.bf16.gmra.mxu0 %v781
      %v3912 = vpop.f32.mrf.mxu0
      %v3913 = vadd.f32 %v3900, %v3912
      %v3914 = vpop.f32.mrf.mxu0
      %3915 = vdwg.mxu0
      %3916 = vmatpush.bf16.xpose.msra.mxu0 %v2644
      %3917 = vmatpush.bf16.xpose.msra.mxu0 %v2637
      %3918 = vmatpush.bf16.xpose.msra.mxu0 %v2630
      %3919 = vmatpush.bf16.xpose.msra.mxu0 %v2623
      %3920 = vmatpush.bf16.xpose.msra.mxu0 %v2616
      %3921 = vmatpush.bf16.xpose.msra.mxu0 %v2609
      %3922 = vmatpush.bf16.xpose.msra.mxu0 %v2602
      %3923 = vmatpush.bf16.xpose.msra.mxu0 %v2595
      %3924 = vmatmul.bf16.gmra.mxu0 %v782
      %v3925 = vpop.f32.mrf.mxu0
      %v3926 = vadd.f32 %v3913, %v3925
      %v3927 = vpop.f32.mrf.mxu0
      %3928 = vdwg.mxu0
      %3929 = vmatpush.bf16.xpose.msra.mxu0 %v2645
      %3930 = vmatpush.bf16.xpose.msra.mxu0 %v2638
      %3931 = vmatpush.bf16.xpose.msra.mxu0 %v2631
      %3932 = vmatpush.bf16.xpose.msra.mxu0 %v2624
      %3933 = vmatpush.bf16.xpose.msra.mxu0 %v2617
      %3934 = vmatpush.bf16.xpose.msra.mxu0 %v2610
      %3935 = vmatpush.bf16.xpose.msra.mxu0 %v2603
      %3936 = vmatpush.bf16.xpose.msra.mxu0 %v2596
      %3937 = vmatmul.bf16.gmra.mxu0 %v783
      %v3938 = vpop.f32.mrf.mxu0
      %v3939 = vadd.f32 %v3926, %v3938
      %v3940 = vpop.f32.mrf.mxu0
      %3941 = vdwg.mxu0
      %3942 = vmatpush.bf16.xpose.msra.mxu0 %v3225
      %3943 = vmatpush.bf16.xpose.msra.mxu0 %v3222
      %3944 = vmatpush.bf16.xpose.msra.mxu0 %v3219
      %3945 = vmatpush.bf16.xpose.msra.mxu0 %v3216
      %3946 = vmatpush.bf16.xpose.msra.mxu0 %v3213
      %3947 = vmatpush.bf16.xpose.msra.mxu0 %v3210
      %3948 = vmatpush.bf16.xpose.msra.mxu0 %v3207
      %3949 = vmatpush.bf16.xpose.msra.mxu0 %v3204
      %3950 = vmatmul.bf16.gmra.mxu0 %v3033
      %v3951 = vpop.f32.mrf.mxu0
      %v3952 = vadd.f32 %v3939, %v3951
      %v3953 = vpop.f32.mrf.mxu0
      %3954 = vdwg.mxu0
      %vm3955 = vcmp.gt.f32.partialorder %v3315, 0.0
      %vm3956 = vcmp.gt.f32.partialorder %v3406, 0.0
      %vm3957 = vcmp.gt.f32.partialorder %v3497, 0.0
      %vm3958 = vcmp.gt.f32.partialorder %v3588, 0.0
      %vm3959 = vcmp.gt.f32.partialorder %v3679, 0.0
      %vm3960 = vcmp.gt.f32.partialorder %v3770, 0.0
      %vm3961 = vcmp.gt.f32.partialorder %v3861, 0.0
      %vm3962 = vcmp.gt.f32.partialorder %v3952, 0.0
      %v3963 = vmul.f32 %v3315, 0.01
      %v3964 = vmul.f32 %v3406, 0.01
      %v3965 = vmul.f32 %v3497, 0.01
      %v3966 = vmul.f32 %v3588, 0.01
      %v3967 = vmul.f32 %v3679, 0.01
      %v3968 = vmul.f32 %v3770, 0.01
      %v3969 = vmul.f32 %v3861, 0.01
      %v3970 = vmul.f32 %v3952, 0.01
      %v3971 = vsel %vm3955, %v3315, %v3963
      %v3972 = vsel %vm3956, %v3406, %v3964
      %v3973 = vsel %vm3957, %v3497, %v3965
      %v3974 = vsel %vm3958, %v3588, %v3966
      %v3975 = vsel %vm3959, %v3679, %v3967
      %v3976 = vsel %vm3960, %v3770, %v3968
      %v3977 = vsel %vm3961, %v3861, %v3969
      %v3978 = vsel %vm3962, %v3952, %v3970
      %v3979 = vrot.slane %v3971, 4
      %v3980 = vmax.f32 %v3971, %v3979
      %v3981 = vrot.slane %v3980, 2
      %v3982 = vmax.f32 %v3980, %v3981
      %v3983 = vrot.slane %v3982, 1
      %v3984 = vmax.f32 %v3982, %v3983
      %v3985 = vrot.slane %v3972, 4
      %v3986 = vmax.f32 %v3972, %v3985
      %v3987 = vrot.slane %v3986, 2
      %v3988 = vmax.f32 %v3986, %v3987
      %v3989 = vrot.slane %v3988, 1
      %v3990 = vmax.f32 %v3988, %v3989
      %v3991 = vrot.slane %v3973, 4
      %v3992 = vmax.f32 %v3973, %v3991
      %v3993 = vrot.slane %v3992, 2
      %v3994 = vmax.f32 %v3992, %v3993
      %v3995 = vrot.slane %v3994, 1
      %v3996 = vmax.f32 %v3994, %v3995
      %v3997 = vrot.slane %v3974, 4
      %v3998 = vmax.f32 %v3974, %v3997
      %v3999 = vrot.slane %v3998, 2
      %v4000 = vmax.f32 %v3998, %v3999
      %v4001 = vrot.slane %v4000, 1
      %v4002 = vmax.f32 %v4000, %v4001
      %v4003 = vrot.slane %v3975, 4
      %v4004 = vmax.f32 %v3975, %v4003
      %v4005 = vrot.slane %v4004, 2
      %v4006 = vmax.f32 %v4004, %v4005
      %v4007 = vrot.slane %v4006, 1
      %v4008 = vmax.f32 %v4006, %v4007
      %v4009 = vrot.slane %v3976, 4
      %v4010 = vmax.f32 %v3976, %v4009
      %v4011 = vrot.slane %v4010, 2
      %v4012 = vmax.f32 %v4010, %v4011
      %v4013 = vrot.slane %v4012, 1
      %v4014 = vmax.f32 %v4012, %v4013
      %v4015 = vrot.slane %v3977, 4
      %v4016 = vmax.f32 %v3977, %v4015
      %v4017 = vrot.slane %v4016, 2
      %v4018 = vmax.f32 %v4016, %v4017
      %v4019 = vrot.slane %v4018, 1
      %v4020 = vmax.f32 %v4018, %v4019
      %v4021 = vrot.slane %v3978, 4
      %v4022 = vmax.f32 %v3978, %v4021
      %v4023 = vrot.slane %v4022, 2
      %v4024 = vmax.f32 %v4022, %v4023
      %v4025 = vrot.slane %v4024, 1
      %v4026 = vmax.f32 %v4024, %v4025
      %vm4027 = vcmp.ge.f32.partialorder %v3971, %v3984
      %vm4028 = vcmp.ge.f32.partialorder %v3972, %v3990
      %vm4029 = vcmp.ge.f32.partialorder %v3973, %v3996
      %vm4030 = vcmp.ge.f32.partialorder %v3974, %v4002
      %vm4031 = vcmp.ge.f32.partialorder %v3975, %v4008
      %vm4032 = vcmp.ge.f32.partialorder %v3976, %v4014
      %vm4033 = vcmp.ge.f32.partialorder %v3977, %v4020
      %vm4034 = vcmp.ge.f32.partialorder %v3978, %v4026
      %v4035 = vsel %vm4027, -inf, %v3971
      %v4036 = vsel %vm4028, -inf, %v3972
      %v4037 = vsel %vm4029, -inf, %v3973
      %v4038 = vsel %vm4030, -inf, %v3974
      %v4039 = vsel %vm4031, -inf, %v3975
      %v4040 = vsel %vm4032, -inf, %v3976
      %v4041 = vsel %vm4033, -inf, %v3977
      %v4042 = vsel %vm4034, -inf, %v3978
      %v4043 = vrot.slane %v4035, 4
      %v4044 = vmax.f32 %v4035, %v4043
      %v4045 = vrot.slane %v4044, 2
      %v4046 = vmax.f32 %v4044, %v4045
      %v4047 = vrot.slane %v4046, 1
      %v4048 = vmax.f32 %v4046, %v4047
      %v4049 = vrot.slane %v4036, 4
      %v4050 = vmax.f32 %v4036, %v4049
      %v4051 = vrot.slane %v4050, 2
      %v4052 = vmax.f32 %v4050, %v4051
      %v4053 = vrot.slane %v4052, 1
      %v4054 = vmax.f32 %v4052, %v4053
      %v4055 = vrot.slane %v4037, 4
      %v4056 = vmax.f32 %v4037, %v4055
      %v4057 = vrot.slane %v4056, 2
      %v4058 = vmax.f32 %v4056, %v4057
      %v4059 = vrot.slane %v4058, 1
      %v4060 = vmax.f32 %v4058, %v4059
      %v4061 = vrot.slane %v4038, 4
      %v4062 = vmax.f32 %v4038, %v4061
      %v4063 = vrot.slane %v4062, 2
      %v4064 = vmax.f32 %v4062, %v4063
      %v4065 = vrot.slane %v4064, 1
      %v4066 = vmax.f32 %v4064, %v4065
      %v4067 = vrot.slane %v4039, 4
      %v4068 = vmax.f32 %v4039, %v4067
      %v4069 = vrot.slane %v4068, 2
      %v4070 = vmax.f32 %v4068, %v4069
      %v4071 = vrot.slane %v4070, 1
      %v4072 = vmax.f32 %v4070, %v4071
      %v4073 = vrot.slane %v4040, 4
      %v4074 = vmax.f32 %v4040, %v4073
      %v4075 = vrot.slane %v4074, 2
      %v4076 = vmax.f32 %v4074, %v4075
      %v4077 = vrot.slane %v4076, 1
      %v4078 = vmax.f32 %v4076, %v4077
      %v4079 = vrot.slane %v4041, 4
      %v4080 = vmax.f32 %v4041, %v4079
      %v4081 = vrot.slane %v4080, 2
      %v4082 = vmax.f32 %v4080, %v4081
      %v4083 = vrot.slane %v4082, 1
      %v4084 = vmax.f32 %v4082, %v4083
      %v4085 = vrot.slane %v4042, 4
      %v4086 = vmax.f32 %v4042, %v4085
      %v4087 = vrot.slane %v4086, 2
      %v4088 = vmax.f32 %v4086, %v4087
      %v4089 = vrot.slane %v4088, 1
      %v4090 = vmax.f32 %v4088, %v4089
      %vm4091 = vcmp.ge.f32.partialorder %v4035, %v4048
      %vm4092 = vcmp.ge.f32.partialorder %v4036, %v4054
      %vm4093 = vcmp.ge.f32.partialorder %v4037, %v4060
      %vm4094 = vcmp.ge.f32.partialorder %v4038, %v4066
      %vm4095 = vcmp.ge.f32.partialorder %v4039, %v4072
      %vm4096 = vcmp.ge.f32.partialorder %v4040, %v4078
      %vm4097 = vcmp.ge.f32.partialorder %v4041, %v4084
      %vm4098 = vcmp.ge.f32.partialorder %v4042, %v4090
      %v4099 = vsel %vm4091, -inf, %v4035
      %v4100 = vsel %vm4092, -inf, %v4036
      %v4101 = vsel %vm4093, -inf, %v4037
      %v4102 = vsel %vm4094, -inf, %v4038
      %v4103 = vsel %vm4095, -inf, %v4039
      %v4104 = vsel %vm4096, -inf, %v4040
      %v4105 = vsel %vm4097, -inf, %v4041
      %v4106 = vsel %vm4098, -inf, %v4042
      %v4107 = vrot.slane %v4099, 4
      %v4108 = vmax.f32 %v4099, %v4107
      %v4109 = vrot.slane %v4108, 2
      %v4110 = vmax.f32 %v4108, %v4109
      %v4111 = vrot.slane %v4110, 1
      %v4112 = vmax.f32 %v4110, %v4111
      %v4113 = vrot.slane %v4100, 4
      %v4114 = vmax.f32 %v4100, %v4113
      %v4115 = vrot.slane %v4114, 2
      %v4116 = vmax.f32 %v4114, %v4115
      %v4117 = vrot.slane %v4116, 1
      %v4118 = vmax.f32 %v4116, %v4117
      %v4119 = vrot.slane %v4101, 4
      %v4120 = vmax.f32 %v4101, %v4119
      %v4121 = vrot.slane %v4120, 2
      %v4122 = vmax.f32 %v4120, %v4121
      %v4123 = vrot.slane %v4122, 1
      %v4124 = vmax.f32 %v4122, %v4123
      %v4125 = vrot.slane %v4102, 4
      %v4126 = vmax.f32 %v4102, %v4125
      %v4127 = vrot.slane %v4126, 2
      %v4128 = vmax.f32 %v4126, %v4127
      %v4129 = vrot.slane %v4128, 1
      %v4130 = vmax.f32 %v4128, %v4129
      %v4131 = vrot.slane %v4103, 4
      %v4132 = vmax.f32 %v4103, %v4131
      %v4133 = vrot.slane %v4132, 2
      %v4134 = vmax.f32 %v4132, %v4133
      %v4135 = vrot.slane %v4134, 1
      %v4136 = vmax.f32 %v4134, %v4135
      %v4137 = vrot.slane %v4104, 4
      %v4138 = vmax.f32 %v4104, %v4137
      %v4139 = vrot.slane %v4138, 2
      %v4140 = vmax.f32 %v4138, %v4139
      %v4141 = vrot.slane %v4140, 1
      %v4142 = vmax.f32 %v4140, %v4141
      %v4143 = vrot.slane %v4105, 4
      %v4144 = vmax.f32 %v4105, %v4143
      %v4145 = vrot.slane %v4144, 2
      %v4146 = vmax.f32 %v4144, %v4145
      %v4147 = vrot.slane %v4146, 1
      %v4148 = vmax.f32 %v4146, %v4147
      %v4149 = vrot.slane %v4106, 4
      %v4150 = vmax.f32 %v4106, %v4149
      %v4151 = vrot.slane %v4150, 2
      %v4152 = vmax.f32 %v4150, %v4151
      %v4153 = vrot.slane %v4152, 1
      %v4154 = vmax.f32 %v4152, %v4153
      %vm4155 = vcmp.ge.f32.partialorder %v4099, %v4112
      %vm4156 = vcmp.ge.f32.partialorder %v4100, %v4118
      %vm4157 = vcmp.ge.f32.partialorder %v4101, %v4124
      %vm4158 = vcmp.ge.f32.partialorder %v4102, %v4130
      %vm4159 = vcmp.ge.f32.partialorder %v4103, %v4136
      %vm4160 = vcmp.ge.f32.partialorder %v4104, %v4142
      %vm4161 = vcmp.ge.f32.partialorder %v4105, %v4148
      %vm4162 = vcmp.ge.f32.partialorder %v4106, %v4154
      %v4163 = vsel %vm4155, -inf, %v4099
      %v4164 = vsel %vm4156, -inf, %v4100
      %v4165 = vsel %vm4157, -inf, %v4101
      %v4166 = vsel %vm4158, -inf, %v4102
      %v4167 = vsel %vm4159, -inf, %v4103
      %v4168 = vsel %vm4160, -inf, %v4104
      %v4169 = vsel %vm4161, -inf, %v4105
      %v4170 = vsel %vm4162, -inf, %v4106
      %v4171 = vrot.slane %v4163, 4
      %v4172 = vmax.f32 %v4163, %v4171
      %v4173 = vrot.slane %v4172, 2
      %v4174 = vmax.f32 %v4172, %v4173
      %v4175 = vrot.slane %v4174, 1
      %v4176 = vmax.f32 %v4174, %v4175
      %v4177 = vrot.slane %v4164, 4
      %v4178 = vmax.f32 %v4164, %v4177
      %v4179 = vrot.slane %v4178, 2
      %v4180 = vmax.f32 %v4178, %v4179
      %v4181 = vrot.slane %v4180, 1
      %v4182 = vmax.f32 %v4180, %v4181
      %v4183 = vrot.slane %v4165, 4
      %v4184 = vmax.f32 %v4165, %v4183
      %v4185 = vrot.slane %v4184, 2
      %v4186 = vmax.f32 %v4184, %v4185
      %v4187 = vrot.slane %v4186, 1
      %v4188 = vmax.f32 %v4186, %v4187
      %v4189 = vrot.slane %v4166, 4
      %v4190 = vmax.f32 %v4166, %v4189
      %v4191 = vrot.slane %v4190, 2
      %v4192 = vmax.f32 %v4190, %v4191
      %v4193 = vrot.slane %v4192, 1
      %v4194 = vmax.f32 %v4192, %v4193
      %v4195 = vrot.slane %v4167, 4
      %v4196 = vmax.f32 %v4167, %v4195
      %v4197 = vrot.slane %v4196, 2
      %v4198 = vmax.f32 %v4196, %v4197
      %v4199 = vrot.slane %v4198, 1
      %v4200 = vmax.f32 %v4198, %v4199
      %v4201 = vrot.slane %v4168, 4
      %v4202 = vmax.f32 %v4168, %v4201
      %v4203 = vrot.slane %v4202, 2
      %v4204 = vmax.f32 %v4202, %v4203
      %v4205 = vrot.slane %v4204, 1
      %v4206 = vmax.f32 %v4204, %v4205
      %v4207 = vrot.slane %v4169, 4
      %v4208 = vmax.f32 %v4169, %v4207
      %v4209 = vrot.slane %v4208, 2
      %v4210 = vmax.f32 %v4208, %v4209
      %v4211 = vrot.slane %v4210, 1
      %v4212 = vmax.f32 %v4210, %v4211
      %v4213 = vrot.slane %v4170, 4
      %v4214 = vmax.f32 %v4170, %v4213
      %v4215 = vrot.slane %v4214, 2
      %v4216 = vmax.f32 %v4214, %v4215
      %v4217 = vrot.slane %v4216, 1
      %v4218 = vmax.f32 %v4216, %v4217
      %vm4219 = vcmp.ge.f32.partialorder %v4163, %v4176
      %vm4220 = vcmp.ge.f32.partialorder %v4164, %v4182
      %vm4221 = vcmp.ge.f32.partialorder %v4165, %v4188
      %vm4222 = vcmp.ge.f32.partialorder %v4166, %v4194
      %vm4223 = vcmp.ge.f32.partialorder %v4167, %v4200
      %vm4224 = vcmp.ge.f32.partialorder %v4168, %v4206
      %vm4225 = vcmp.ge.f32.partialorder %v4169, %v4212
      %vm4226 = vcmp.ge.f32.partialorder %v4170, %v4218
      %v4227 = vsel %vm4219, -inf, %v4163
      %v4228 = vsel %vm4220, -inf, %v4164
      %v4229 = vsel %vm4221, -inf, %v4165
      %v4230 = vsel %vm4222, -inf, %v4166
      %v4231 = vsel %vm4223, -inf, %v4167
      %v4232 = vsel %vm4224, -inf, %v4168
      %v4233 = vsel %vm4225, -inf, %v4169
      %v4234 = vsel %vm4226, -inf, %v4170
      %v4235 = vrot.slane %v4227, 4
      %v4236 = vmax.f32 %v4227, %v4235
      %v4237 = vrot.slane %v4236, 2
      %v4238 = vmax.f32 %v4236, %v4237
      %v4239 = vrot.slane %v4238, 1
      %v4240 = vmax.f32 %v4238, %v4239
      %v4241 = vrot.slane %v4228, 4
      %v4242 = vmax.f32 %v4228, %v4241
      %v4243 = vrot.slane %v4242, 2
      %v4244 = vmax.f32 %v4242, %v4243
      %v4245 = vrot.slane %v4244, 1
      %v4246 = vmax.f32 %v4244, %v4245
      %v4247 = vrot.slane %v4229, 4
      %v4248 = vmax.f32 %v4229, %v4247
      %v4249 = vrot.slane %v4248, 2
      %v4250 = vmax.f32 %v4248, %v4249
      %v4251 = vrot.slane %v4250, 1
      %v4252 = vmax.f32 %v4250, %v4251
      %v4253 = vrot.slane %v4230, 4
      %v4254 = vmax.f32 %v4230, %v4253
      %v4255 = vrot.slane %v4254, 2
      %v4256 = vmax.f32 %v4254, %v4255
      %v4257 = vrot.slane %v4256, 1
      %v4258 = vmax.f32 %v4256, %v4257
      %v4259 = vrot.slane %v4231, 4
      %v4260 = vmax.f32 %v4231, %v4259
      %v4261 = vrot.slane %v4260, 2
      %v4262 = vmax.f32 %v4260, %v4261
      %v4263 = vrot.slane %v4262, 1
      %v4264 = vmax.f32 %v4262, %v4263
      %v4265 = vrot.slane %v4232, 4
      %v4266 = vmax.f32 %v4232, %v4265
      %v4267 = vrot.slane %v4266, 2
      %v4268 = vmax.f32 %v4266, %v4267
      %v4269 = vrot.slane %v4268, 1
      %v4270 = vmax.f32 %v4268, %v4269
      %v4271 = vrot.slane %v4233, 4
      %v4272 = vmax.f32 %v4233, %v4271
      %v4273 = vrot.slane %v4272, 2
      %v4274 = vmax.f32 %v4272, %v4273
      %v4275 = vrot.slane %v4274, 1
      %v4276 = vmax.f32 %v4274, %v4275
      %v4277 = vrot.slane %v4234, 4
      %v4278 = vmax.f32 %v4234, %v4277
      %v4279 = vrot.slane %v4278, 2
      %v4280 = vmax.f32 %v4278, %v4279
      %v4281 = vrot.slane %v4280, 1
      %v4282 = vmax.f32 %v4280, %v4281
      %vm4283 = vcmp.ge.f32.partialorder %v3971, %v4240
      %vm4284 = vcmp.ge.f32.partialorder %v3972, %v4246
      %vm4285 = vcmp.ge.f32.partialorder %v3973, %v4252
      %vm4286 = vcmp.ge.f32.partialorder %v3974, %v4258
      %vm4287 = vcmp.ge.f32.partialorder %v3975, %v4264
      %vm4288 = vcmp.ge.f32.partialorder %v3976, %v4270
      %vm4289 = vcmp.ge.f32.partialorder %v3977, %v4276
      %vm4290 = vcmp.ge.f32.partialorder %v3978, %v4282
      %v4291 = vsel %vm4283, %v3971, 0.0
      %v4292 = vsel %vm4284, %v3972, 0.0
      %v4293 = vsel %vm4285, %v3973, 0.0
      %v4294 = vsel %vm4286, %v3974, 0.0
      %v4295 = vsel %vm4287, %v3975, 0.0
      %v4296 = vsel %vm4288, %v3976, 0.0
      %v4297 = vsel %vm4289, %v3977, 0.0
      %v4298 = vsel %vm4290, %v3978, 0.0
      %v4299 = vld [vmem:[#allocation2] sm:$0xff]
      %v4300 = vld [vmem:[#allocation2 + $0x8] sm:$0xff]
      %v4301 = vld [vmem:[#allocation2 + $0x10] sm:$0xff]
      %v4302 = vld [vmem:[#allocation2 + $0x18] sm:$0xff]
      %v4303 = vld [vmem:[#allocation2 + $0x20] sm:$0xff]
      %v4304 = vld [vmem:[#allocation2 + $0x28] sm:$0xff]
      %v4305 = vld [vmem:[#allocation2 + $0x30] sm:$0xff]
      %v4306 = vpack.c.bf16 %v4291, %v4291
      %v4307 = vpack.c.bf16 %v4292, %v4292
      %v4308 = vpack.c.bf16 %v4293, %v4293
      %v4309 = vpack.c.bf16 %v4294, %v4294
      %v4310 = vpack.c.bf16 %v4295, %v4295
      %v4311 = vpack.c.bf16 %v4296, %v4296
      %v4312 = vpack.c.bf16 %v4297, %v4297
      %v4313 = vpack.c.bf16 %v4298, %v4298
      %4378 = vmatpush.bf16.msra.mxu0 %v2248
      %4379 = vmatpush.bf16.msra.mxu0 %v2241
      %4380 = vmatpush.bf16.msra.mxu0 %v2234
      %4381 = vmatpush.bf16.msra.mxu0 %v2227
      %4382 = vmatpush.bf16.msra.mxu0 %v2220
      %4383 = vmatpush.bf16.msra.mxu0 %v2213
      %4384 = vmatpush.bf16.msra.mxu0 %v2206
      %4385 = vmatpush.bf16.msra.mxu0 %v2199
      %4386 = vmatmul.bf16.gmra.mxu0 %v4306
      %v4387 = vpop.f32.mrf.mxu0
      %v4388 = vadd.f32 0.0, %v4387
      %v4389 = vpop.f32.mrf.mxu0
      %4390 = vdwg.mxu0
      %4391 = vmatpush.bf16.msra.mxu0 %v2304
      %4392 = vmatpush.bf16.msra.mxu0 %v2297
      %4393 = vmatpush.bf16.msra.mxu0 %v2290
      %4394 = vmatpush.bf16.msra.mxu0 %v2283
      %4395 = vmatpush.bf16.msra.mxu0 %v2276
      %4396 = vmatpush.bf16.msra.mxu0 %v2269
      %4397 = vmatpush.bf16.msra.mxu0 %v2262
      %4398 = vmatpush.bf16.msra.mxu0 %v2255
      %4399 = vmatmul.bf16.gmra.mxu0 %v4307
      %v4400 = vpop.f32.mrf.mxu0
      %v4401 = vadd.f32 %v4388, %v4400
      %v4402 = vpop.f32.mrf.mxu0
      %4403 = vdwg.mxu0
      %4404 = vmatpush.bf16.msra.mxu0 %v2360
      %4405 = vmatpush.bf16.msra.mxu0 %v2353
      %4406 = vmatpush.bf16.msra.mxu0 %v2346
      %4407 = vmatpush.bf16.msra.mxu0 %v2339
      %4408 = vmatpush.bf16.msra.mxu0 %v2332
      %4409 = vmatpush.bf16.msra.mxu0 %v2325
      %4410 = vmatpush.bf16.msra.mxu0 %v2318
      %4411 = vmatpush.bf16.msra.mxu0 %v2311
      %4412 = vmatmul.bf16.gmra.mxu0 %v4308
      %v4413 = vpop.f32.mrf.mxu0
      %v4414 = vadd.f32 %v4401, %v4413
      %v4415 = vpop.f32.mrf.mxu0
      %4416 = vdwg.mxu0
      %4417 = vmatpush.bf16.msra.mxu0 %v2416
      %4418 = vmatpush.bf16.msra.mxu0 %v2409
      %4419 = vmatpush.bf16.msra.mxu0 %v2402
      %4420 = vmatpush.bf16.msra.mxu0 %v2395
      %4421 = vmatpush.bf16.msra.mxu0 %v2388
      %4422 = vmatpush.bf16.msra.mxu0 %v2381
      %4423 = vmatpush.bf16.msra.mxu0 %v2374
      %4424 = vmatpush.bf16.msra.mxu0 %v2367
      %4425 = vmatmul.bf16.gmra.mxu0 %v4309
      %v4426 = vpop.f32.mrf.mxu0
      %v4427 = vadd.f32 %v4414, %v4426
      %v4428 = vpop.f32.mrf.mxu0
      %4429 = vdwg.mxu0
      %4430 = vmatpush.bf16.msra.mxu0 %v2472
      %4431 = vmatpush.bf16.msra.mxu0 %v2465
      %4432 = vmatpush.bf16.msra.mxu0 %v2458
      %4433 = vmatpush.bf16.msra.mxu0 %v2451
      %4434 = vmatpush.bf16.msra.mxu0 %v2444
      %4435 = vmatpush.bf16.msra.mxu0 %v2437
      %4436 = vmatpush.bf16.msra.mxu0 %v2430
      %4437 = vmatpush.bf16.msra.mxu0 %v2423
      %4438 = vmatmul.bf16.gmra.mxu0 %v4310
      %v4439 = vpop.f32.mrf.mxu0
      %v4440 = vadd.f32 %v4427, %v4439
      %v4441 = vpop.f32.mrf.mxu0
      %4442 = vdwg.mxu0
      %4443 = vmatpush.bf16.msra.mxu0 %v2528
      %4444 = vmatpush.bf16.msra.mxu0 %v2521
      %4445 = vmatpush.bf16.msra.mxu0 %v2514
      %4446 = vmatpush.bf16.msra.mxu0 %v2507
      %4447 = vmatpush.bf16.msra.mxu0 %v2500
      %4448 = vmatpush.bf16.msra.mxu0 %v2493
      %4449 = vmatpush.bf16.msra.mxu0 %v2486
      %4450 = vmatpush.bf16.msra.mxu0 %v2479
      %4451 = vmatmul.bf16.gmra.mxu0 %v4311
      %v4452 = vpop.f32.mrf.mxu0
      %v4453 = vadd.f32 %v4440, %v4452
      %v4454 = vpop.f32.mrf.mxu0
      %4455 = vdwg.mxu0
      %4456 = vmatpush.bf16.msra.mxu0 %v2584
      %4457 = vmatpush.bf16.msra.mxu0 %v2577
      %4458 = vmatpush.bf16.msra.mxu0 %v2570
      %4459 = vmatpush.bf16.msra.mxu0 %v2563
      %4460 = vmatpush.bf16.msra.mxu0 %v2556
      %4461 = vmatpush.bf16.msra.mxu0 %v2549
      %4462 = vmatpush.bf16.msra.mxu0 %v2542
      %4463 = vmatpush.bf16.msra.mxu0 %v2535
      %4464 = vmatmul.bf16.gmra.mxu0 %v4312
      %v4465 = vpop.f32.mrf.mxu0
      %v4466 = vadd.f32 %v4453, %v4465
      %v4467 = vpop.f32.mrf.mxu0
      %4468 = vdwg.mxu0
      %4469 = vmatpush.bf16.msra.mxu0 %v2640
      %4470 = vmatpush.bf16.msra.mxu0 %v2633
      %4471 = vmatpush.bf16.msra.mxu0 %v2626
      %4472 = vmatpush.bf16.msra.mxu0 %v2619
      %4473 = vmatpush.bf16.msra.mxu0 %v2612
      %4474 = vmatpush.bf16.msra.mxu0 %v2605
      %4475 = vmatpush.bf16.msra.mxu0 %v2598
      %4476 = vmatpush.bf16.msra.mxu0 %v2591
      %4477 = vmatmul.bf16.gmra.mxu0 %v4313
      %v4478 = vpop.f32.mrf.mxu0
      %v4479 = vadd.f32 %v4466, %v4478
      %v4480 = vpop.f32.mrf.mxu0
      %4481 = vdwg.mxu0
      %4482 = vmatpush.bf16.msra.mxu0 %v2249
      %4483 = vmatpush.bf16.msra.mxu0 %v2242
      %4484 = vmatpush.bf16.msra.mxu0 %v2235
      %4485 = vmatpush.bf16.msra.mxu0 %v2228
      %4486 = vmatpush.bf16.msra.mxu0 %v2221
      %4487 = vmatpush.bf16.msra.mxu0 %v2214
      %4488 = vmatpush.bf16.msra.mxu0 %v2207
      %4489 = vmatpush.bf16.msra.mxu0 %v2200
      %4490 = vmatmul.bf16.gmra.mxu0 %v4306
      %v4491 = vpop.f32.mrf.mxu0
      %v4492 = vadd.f32 0.0, %v4491
      %v4493 = vpop.f32.mrf.mxu0
      %4494 = vdwg.mxu0
      %4495 = vmatpush.bf16.msra.mxu0 %v2305
      %4496 = vmatpush.bf16.msra.mxu0 %v2298
      %4497 = vmatpush.bf16.msra.mxu0 %v2291
      %4498 = vmatpush.bf16.msra.mxu0 %v2284
      %4499 = vmatpush.bf16.msra.mxu0 %v2277
      %4500 = vmatpush.bf16.msra.mxu0 %v2270
      %4501 = vmatpush.bf16.msra.mxu0 %v2263
      %4502 = vmatpush.bf16.msra.mxu0 %v2256
      %4503 = vmatmul.bf16.gmra.mxu0 %v4307
      %v4504 = vpop.f32.mrf.mxu0
      %v4505 = vadd.f32 %v4492, %v4504
      %v4506 = vpop.f32.mrf.mxu0
      %4507 = vdwg.mxu0
      %4508 = vmatpush.bf16.msra.mxu0 %v2361
      %4509 = vmatpush.bf16.msra.mxu0 %v2354
      %4510 = vmatpush.bf16.msra.mxu0 %v2347
      %4511 = vmatpush.bf16.msra.mxu0 %v2340
      %4512 = vmatpush.bf16.msra.mxu0 %v2333
      %4513 = vmatpush.bf16.msra.mxu0 %v2326
      %4514 = vmatpush.bf16.msra.mxu0 %v2319
      %4515 = vmatpush.bf16.msra.mxu0 %v2312
      %4516 = vmatmul.bf16.gmra.mxu0 %v4308
      %v4517 = vpop.f32.mrf.mxu0
      %v4518 = vadd.f32 %v4505, %v4517
      %v4519 = vpop.f32.mrf.mxu0
      %4520 = vdwg.mxu0
      %4521 = vmatpush.bf16.msra.mxu0 %v2417
      %4522 = vmatpush.bf16.msra.mxu0 %v2410
      %4523 = vmatpush.bf16.msra.mxu0 %v2403
      %4524 = vmatpush.bf16.msra.mxu0 %v2396
      %4525 = vmatpush.bf16.msra.mxu0 %v2389
      %4526 = vmatpush.bf16.msra.mxu0 %v2382
      %4527 = vmatpush.bf16.msra.mxu0 %v2375
      %4528 = vmatpush.bf16.msra.mxu0 %v2368
      %4529 = vmatmul.bf16.gmra.mxu0 %v4309
      %v4530 = vpop.f32.mrf.mxu0
      %v4531 = vadd.f32 %v4518, %v4530
      %v4532 = vpop.f32.mrf.mxu0
      %4533 = vdwg.mxu0
      %4534 = vmatpush.bf16.msra.mxu0 %v2473
      %4535 = vmatpush.bf16.msra.mxu0 %v2466
      %4536 = vmatpush.bf16.msra.mxu0 %v2459
      %4537 = vmatpush.bf16.msra.mxu0 %v2452
      %4538 = vmatpush.bf16.msra.mxu0 %v2445
      %4539 = vmatpush.bf16.msra.mxu0 %v2438
      %4540 = vmatpush.bf16.msra.mxu0 %v2431
      %4541 = vmatpush.bf16.msra.mxu0 %v2424
      %4542 = vmatmul.bf16.gmra.mxu0 %v4310
      %v4543 = vpop.f32.mrf.mxu0
      %v4544 = vadd.f32 %v4531, %v4543
      %v4545 = vpop.f32.mrf.mxu0
      %4546 = vdwg.mxu0
      %4547 = vmatpush.bf16.msra.mxu0 %v2529
      %4548 = vmatpush.bf16.msra.mxu0 %v2522
      %4549 = vmatpush.bf16.msra.mxu0 %v2515
      %4550 = vmatpush.bf16.msra.mxu0 %v2508
      %4551 = vmatpush.bf16.msra.mxu0 %v2501
      %4552 = vmatpush.bf16.msra.mxu0 %v2494
      %4553 = vmatpush.bf16.msra.mxu0 %v2487
      %4554 = vmatpush.bf16.msra.mxu0 %v2480
      %4555 = vmatmul.bf16.gmra.mxu0 %v4311
      %v4556 = vpop.f32.mrf.mxu0
      %v4557 = vadd.f32 %v4544, %v4556
      %v4558 = vpop.f32.mrf.mxu0
      %4559 = vdwg.mxu0
      %4560 = vmatpush.bf16.msra.mxu0 %v2585
      %4561 = vmatpush.bf16.msra.mxu0 %v2578
      %4562 = vmatpush.bf16.msra.mxu0 %v2571
      %4563 = vmatpush.bf16.msra.mxu0 %v2564
      %4564 = vmatpush.bf16.msra.mxu0 %v2557
      %4565 = vmatpush.bf16.msra.mxu0 %v2550
      %4566 = vmatpush.bf16.msra.mxu0 %v2543
      %4567 = vmatpush.bf16.msra.mxu0 %v2536
      %4568 = vmatmul.bf16.gmra.mxu0 %v4312
      %v4569 = vpop.f32.mrf.mxu0
      %v4570 = vadd.f32 %v4557, %v4569
      %v4571 = vpop.f32.mrf.mxu0
      %4572 = vdwg.mxu0
      %4573 = vmatpush.bf16.msra.mxu0 %v2641
      %4574 = vmatpush.bf16.msra.mxu0 %v2634
      %4575 = vmatpush.bf16.msra.mxu0 %v2627
      %4576 = vmatpush.bf16.msra.mxu0 %v2620
      %4577 = vmatpush.bf16.msra.mxu0 %v2613
      %4578 = vmatpush.bf16.msra.mxu0 %v2606
      %4579 = vmatpush.bf16.msra.mxu0 %v2599
      %4580 = vmatpush.bf16.msra.mxu0 %v2592
      %4581 = vmatmul.bf16.gmra.mxu0 %v4313
      %v4582 = vpop.f32.mrf.mxu0
      %v4583 = vadd.f32 %v4570, %v4582
      %v4584 = vpop.f32.mrf.mxu0
      %4585 = vdwg.mxu0
      %4586 = vmatpush.bf16.msra.mxu0 %v2250
      %4587 = vmatpush.bf16.msra.mxu0 %v2243
      %4588 = vmatpush.bf16.msra.mxu0 %v2236
      %4589 = vmatpush.bf16.msra.mxu0 %v2229
      %4590 = vmatpush.bf16.msra.mxu0 %v2222
      %4591 = vmatpush.bf16.msra.mxu0 %v2215
      %4592 = vmatpush.bf16.msra.mxu0 %v2208
      %4593 = vmatpush.bf16.msra.mxu0 %v2201
      %4594 = vmatmul.bf16.gmra.mxu0 %v4306
      %v4595 = vpop.f32.mrf.mxu0
      %v4596 = vadd.f32 0.0, %v4595
      %v4597 = vpop.f32.mrf.mxu0
      %4598 = vdwg.mxu0
      %4599 = vmatpush.bf16.msra.mxu0 %v2306
      %4600 = vmatpush.bf16.msra.mxu0 %v2299
      %4601 = vmatpush.bf16.msra.mxu0 %v2292
      %4602 = vmatpush.bf16.msra.mxu0 %v2285
      %4603 = vmatpush.bf16.msra.mxu0 %v2278
      %4604 = vmatpush.bf16.msra.mxu0 %v2271
      %4605 = vmatpush.bf16.msra.mxu0 %v2264
      %4606 = vmatpush.bf16.msra.mxu0 %v2257
      %4607 = vmatmul.bf16.gmra.mxu0 %v4307
      %v4608 = vpop.f32.mrf.mxu0
      %v4609 = vadd.f32 %v4596, %v4608
      %v4610 = vpop.f32.mrf.mxu0
      %4611 = vdwg.mxu0
      %4612 = vmatpush.bf16.msra.mxu0 %v2362
      %4613 = vmatpush.bf16.msra.mxu0 %v2355
      %4614 = vmatpush.bf16.msra.mxu0 %v2348
      %4615 = vmatpush.bf16.msra.mxu0 %v2341
      %4616 = vmatpush.bf16.msra.mxu0 %v2334
      %4617 = vmatpush.bf16.msra.mxu0 %v2327
      %4618 = vmatpush.bf16.msra.mxu0 %v2320
      %4619 = vmatpush.bf16.msra.mxu0 %v2313
      %4620 = vmatmul.bf16.gmra.mxu0 %v4308
      %v4621 = vpop.f32.mrf.mxu0
      %v4622 = vadd.f32 %v4609, %v4621
      %v4623 = vpop.f32.mrf.mxu0
      %4624 = vdwg.mxu0
      %4625 = vmatpush.bf16.msra.mxu0 %v2418
      %4626 = vmatpush.bf16.msra.mxu0 %v2411
      %4627 = vmatpush.bf16.msra.mxu0 %v2404
      %4628 = vmatpush.bf16.msra.mxu0 %v2397
      %4629 = vmatpush.bf16.msra.mxu0 %v2390
      %4630 = vmatpush.bf16.msra.mxu0 %v2383
      %4631 = vmatpush.bf16.msra.mxu0 %v2376
      %4632 = vmatpush.bf16.msra.mxu0 %v2369
      %4633 = vmatmul.bf16.gmra.mxu0 %v4309
      %v4634 = vpop.f32.mrf.mxu0
      %v4635 = vadd.f32 %v4622, %v4634
      %v4636 = vpop.f32.mrf.mxu0
      %4637 = vdwg.mxu0
      %4638 = vmatpush.bf16.msra.mxu0 %v2474
      %4639 = vmatpush.bf16.msra.mxu0 %v2467
      %4640 = vmatpush.bf16.msra.mxu0 %v2460
      %4641 = vmatpush.bf16.msra.mxu0 %v2453
      %4642 = vmatpush.bf16.msra.mxu0 %v2446
      %4643 = vmatpush.bf16.msra.mxu0 %v2439
      %4644 = vmatpush.bf16.msra.mxu0 %v2432
      %4645 = vmatpush.bf16.msra.mxu0 %v2425
      %4646 = vmatmul.bf16.gmra.mxu0 %v4310
      %v4647 = vpop.f32.mrf.mxu0
      %v4648 = vadd.f32 %v4635, %v4647
      %v4649 = vpop.f32.mrf.mxu0
      %4650 = vdwg.mxu0
      %4651 = vmatpush.bf16.msra.mxu0 %v2530
      %4652 = vmatpush.bf16.msra.mxu0 %v2523
      %4653 = vmatpush.bf16.msra.mxu0 %v2516
      %4654 = vmatpush.bf16.msra.mxu0 %v2509
      %4655 = vmatpush.bf16.msra.mxu0 %v2502
      %4656 = vmatpush.bf16.msra.mxu0 %v2495
      %4657 = vmatpush.bf16.msra.mxu0 %v2488
      %4658 = vmatpush.bf16.msra.mxu0 %v2481
      %4659 = vmatmul.bf16.gmra.mxu0 %v4311
      %v4660 = vpop.f32.mrf.mxu0
      %v4661 = vadd.f32 %v4648, %v4660
      %v4662 = vpop.f32.mrf.mxu0
      %4663 = vdwg.mxu0
      %4664 = vmatpush.bf16.msra.mxu0 %v2586
      %4665 = vmatpush.bf16.msra.mxu0 %v2579
      %4666 = vmatpush.bf16.msra.mxu0 %v2572
      %4667 = vmatpush.bf16.msra.mxu0 %v2565
      %4668 = vmatpush.bf16.msra.mxu0 %v2558
      %4669 = vmatpush.bf16.msra.mxu0 %v2551
      %4670 = vmatpush.bf16.msra.mxu0 %v2544
      %4671 = vmatpush.bf16.msra.mxu0 %v2537
      %4672 = vmatmul.bf16.gmra.mxu0 %v4312
      %v4673 = vpop.f32.mrf.mxu0
      %v4674 = vadd.f32 %v4661, %v4673
      %v4675 = vpop.f32.mrf.mxu0
      %4676 = vdwg.mxu0
      %4677 = vmatpush.bf16.msra.mxu0 %v2642
      %4678 = vmatpush.bf16.msra.mxu0 %v2635
      %4679 = vmatpush.bf16.msra.mxu0 %v2628
      %4680 = vmatpush.bf16.msra.mxu0 %v2621
      %4681 = vmatpush.bf16.msra.mxu0 %v2614
      %4682 = vmatpush.bf16.msra.mxu0 %v2607
      %4683 = vmatpush.bf16.msra.mxu0 %v2600
      %4684 = vmatpush.bf16.msra.mxu0 %v2593
      %4685 = vmatmul.bf16.gmra.mxu0 %v4313
      %v4686 = vpop.f32.mrf.mxu0
      %v4687 = vadd.f32 %v4674, %v4686
      %v4688 = vpop.f32.mrf.mxu0
      %4689 = vdwg.mxu0
      %4690 = vmatpush.bf16.msra.mxu0 %v2251
      %4691 = vmatpush.bf16.msra.mxu0 %v2244
      %4692 = vmatpush.bf16.msra.mxu0 %v2237
      %4693 = vmatpush.bf16.msra.mxu0 %v2230
      %4694 = vmatpush.bf16.msra.mxu0 %v2223
      %4695 = vmatpush.bf16.msra.mxu0 %v2216
      %4696 = vmatpush.bf16.msra.mxu0 %v2209
      %4697 = vmatpush.bf16.msra.mxu0 %v2202
      %4698 = vmatmul.bf16.gmra.mxu0 %v4306
      %v4699 = vpop.f32.mrf.mxu0
      %v4700 = vadd.f32 0.0, %v4699
      %v4701 = vpop.f32.mrf.mxu0
      %4702 = vdwg.mxu0
      %4703 = vmatpush.bf16.msra.mxu0 %v2307
      %4704 = vmatpush.bf16.msra.mxu0 %v2300
      %4705 = vmatpush.bf16.msra.mxu0 %v2293
      %4706 = vmatpush.bf16.msra.mxu0 %v2286
      %4707 = vmatpush.bf16.msra.mxu0 %v2279
      %4708 = vmatpush.bf16.msra.mxu0 %v2272
      %4709 = vmatpush.bf16.msra.mxu0 %v2265
      %4710 = vmatpush.bf16.msra.mxu0 %v2258
      %4711 = vmatmul.bf16.gmra.mxu0 %v4307
      %v4712 = vpop.f32.mrf.mxu0
      %v4713 = vadd.f32 %v4700, %v4712
      %v4714 = vpop.f32.mrf.mxu0
      %4715 = vdwg.mxu0
      %4716 = vmatpush.bf16.msra.mxu0 %v2363
      %4717 = vmatpush.bf16.msra.mxu0 %v2356
      %4718 = vmatpush.bf16.msra.mxu0 %v2349
      %4719 = vmatpush.bf16.msra.mxu0 %v2342
      %4720 = vmatpush.bf16.msra.mxu0 %v2335
      %4721 = vmatpush.bf16.msra.mxu0 %v2328
      %4722 = vmatpush.bf16.msra.mxu0 %v2321
      %4723 = vmatpush.bf16.msra.mxu0 %v2314
      %4724 = vmatmul.bf16.gmra.mxu0 %v4308
      %v4725 = vpop.f32.mrf.mxu0
      %v4726 = vadd.f32 %v4713, %v4725
      %v4727 = vpop.f32.mrf.mxu0
      %4728 = vdwg.mxu0
      %4729 = vmatpush.bf16.msra.mxu0 %v2419
      %4730 = vmatpush.bf16.msra.mxu0 %v2412
      %4731 = vmatpush.bf16.msra.mxu0 %v2405
      %4732 = vmatpush.bf16.msra.mxu0 %v2398
      %4733 = vmatpush.bf16.msra.mxu0 %v2391
      %4734 = vmatpush.bf16.msra.mxu0 %v2384
      %4735 = vmatpush.bf16.msra.mxu0 %v2377
      %4736 = vmatpush.bf16.msra.mxu0 %v2370
      %4737 = vmatmul.bf16.gmra.mxu0 %v4309
      %v4738 = vpop.f32.mrf.mxu0
      %v4739 = vadd.f32 %v4726, %v4738
      %v4740 = vpop.f32.mrf.mxu0
      %4741 = vdwg.mxu0
      %4742 = vmatpush.bf16.msra.mxu0 %v2475
      %4743 = vmatpush.bf16.msra.mxu0 %v2468
      %4744 = vmatpush.bf16.msra.mxu0 %v2461
      %4745 = vmatpush.bf16.msra.mxu0 %v2454
      %4746 = vmatpush.bf16.msra.mxu0 %v2447
      %4747 = vmatpush.bf16.msra.mxu0 %v2440
      %4748 = vmatpush.bf16.msra.mxu0 %v2433
      %4749 = vmatpush.bf16.msra.mxu0 %v2426
      %4750 = vmatmul.bf16.gmra.mxu0 %v4310
      %v4751 = vpop.f32.mrf.mxu0
      %v4752 = vadd.f32 %v4739, %v4751
      %v4753 = vpop.f32.mrf.mxu0
      %4754 = vdwg.mxu0
      %4755 = vmatpush.bf16.msra.mxu0 %v2531
      %4756 = vmatpush.bf16.msra.mxu0 %v2524
      %4757 = vmatpush.bf16.msra.mxu0 %v2517
      %4758 = vmatpush.bf16.msra.mxu0 %v2510
      %4759 = vmatpush.bf16.msra.mxu0 %v2503
      %4760 = vmatpush.bf16.msra.mxu0 %v2496
      %4761 = vmatpush.bf16.msra.mxu0 %v2489
      %4762 = vmatpush.bf16.msra.mxu0 %v2482
      %4763 = vmatmul.bf16.gmra.mxu0 %v4311
      %v4764 = vpop.f32.mrf.mxu0
      %v4765 = vadd.f32 %v4752, %v4764
      %v4766 = vpop.f32.mrf.mxu0
      %4767 = vdwg.mxu0
      %4768 = vmatpush.bf16.msra.mxu0 %v2587
      %4769 = vmatpush.bf16.msra.mxu0 %v2580
      %4770 = vmatpush.bf16.msra.mxu0 %v2573
      %4771 = vmatpush.bf16.msra.mxu0 %v2566
      %4772 = vmatpush.bf16.msra.mxu0 %v2559
      %4773 = vmatpush.bf16.msra.mxu0 %v2552
      %4774 = vmatpush.bf16.msra.mxu0 %v2545
      %4775 = vmatpush.bf16.msra.mxu0 %v2538
      %4776 = vmatmul.bf16.gmra.mxu0 %v4312
      %v4777 = vpop.f32.mrf.mxu0
      %v4778 = vadd.f32 %v4765, %v4777
      %v4779 = vpop.f32.mrf.mxu0
      %4780 = vdwg.mxu0
      %4781 = vmatpush.bf16.msra.mxu0 %v2643
      %4782 = vmatpush.bf16.msra.mxu0 %v2636
      %4783 = vmatpush.bf16.msra.mxu0 %v2629
      %4784 = vmatpush.bf16.msra.mxu0 %v2622
      %4785 = vmatpush.bf16.msra.mxu0 %v2615
      %4786 = vmatpush.bf16.msra.mxu0 %v2608
      %4787 = vmatpush.bf16.msra.mxu0 %v2601
      %4788 = vmatpush.bf16.msra.mxu0 %v2594
      %4789 = vmatmul.bf16.gmra.mxu0 %v4313
      %v4790 = vpop.f32.mrf.mxu0
      %v4791 = vadd.f32 %v4778, %v4790
      %v4792 = vpop.f32.mrf.mxu0
      %4793 = vdwg.mxu0
      %4794 = vmatpush.bf16.msra.mxu0 %v2252
      %4795 = vmatpush.bf16.msra.mxu0 %v2245
      %4796 = vmatpush.bf16.msra.mxu0 %v2238
      %4797 = vmatpush.bf16.msra.mxu0 %v2231
      %4798 = vmatpush.bf16.msra.mxu0 %v2224
      %4799 = vmatpush.bf16.msra.mxu0 %v2217
      %4800 = vmatpush.bf16.msra.mxu0 %v2210
      %4801 = vmatpush.bf16.msra.mxu0 %v2203
      %4802 = vmatmul.bf16.gmra.mxu0 %v4306
      %v4803 = vpop.f32.mrf.mxu0
      %v4804 = vadd.f32 0.0, %v4803
      %v4805 = vpop.f32.mrf.mxu0
      %4806 = vdwg.mxu0
      %4807 = vmatpush.bf16.msra.mxu0 %v2308
      %4808 = vmatpush.bf16.msra.mxu0 %v2301
      %4809 = vmatpush.bf16.msra.mxu0 %v2294
      %4810 = vmatpush.bf16.msra.mxu0 %v2287
      %4811 = vmatpush.bf16.msra.mxu0 %v2280
      %4812 = vmatpush.bf16.msra.mxu0 %v2273
      %4813 = vmatpush.bf16.msra.mxu0 %v2266
      %4814 = vmatpush.bf16.msra.mxu0 %v2259
      %4815 = vmatmul.bf16.gmra.mxu0 %v4307
      %v4816 = vpop.f32.mrf.mxu0
      %v4817 = vadd.f32 %v4804, %v4816
      %v4818 = vpop.f32.mrf.mxu0
      %4819 = vdwg.mxu0
      %4820 = vmatpush.bf16.msra.mxu0 %v2364
      %4821 = vmatpush.bf16.msra.mxu0 %v2357
      %4822 = vmatpush.bf16.msra.mxu0 %v2350
      %4823 = vmatpush.bf16.msra.mxu0 %v2343
      %4824 = vmatpush.bf16.msra.mxu0 %v2336
      %4825 = vmatpush.bf16.msra.mxu0 %v2329
      %4826 = vmatpush.bf16.msra.mxu0 %v2322
      %4827 = vmatpush.bf16.msra.mxu0 %v2315
      %4828 = vmatmul.bf16.gmra.mxu0 %v4308
      %v4829 = vpop.f32.mrf.mxu0
      %v4830 = vadd.f32 %v4817, %v4829
      %v4831 = vpop.f32.mrf.mxu0
      %4832 = vdwg.mxu0
      %4833 = vmatpush.bf16.msra.mxu0 %v2420
      %4834 = vmatpush.bf16.msra.mxu0 %v2413
      %4835 = vmatpush.bf16.msra.mxu0 %v2406
      %4836 = vmatpush.bf16.msra.mxu0 %v2399
      %4837 = vmatpush.bf16.msra.mxu0 %v2392
      %4838 = vmatpush.bf16.msra.mxu0 %v2385
      %4839 = vmatpush.bf16.msra.mxu0 %v2378
      %4840 = vmatpush.bf16.msra.mxu0 %v2371
      %4841 = vmatmul.bf16.gmra.mxu0 %v4309
      %v4842 = vpop.f32.mrf.mxu0
      %v4843 = vadd.f32 %v4830, %v4842
      %v4844 = vpop.f32.mrf.mxu0
      %4845 = vdwg.mxu0
      %4846 = vmatpush.bf16.msra.mxu0 %v2476
      %4847 = vmatpush.bf16.msra.mxu0 %v2469
      %4848 = vmatpush.bf16.msra.mxu0 %v2462
      %4849 = vmatpush.bf16.msra.mxu0 %v2455
      %4850 = vmatpush.bf16.msra.mxu0 %v2448
      %4851 = vmatpush.bf16.msra.mxu0 %v2441
      %4852 = vmatpush.bf16.msra.mxu0 %v2434
      %4853 = vmatpush.bf16.msra.mxu0 %v2427
      %4854 = vmatmul.bf16.gmra.mxu0 %v4310
      %v4855 = vpop.f32.mrf.mxu0
      %v4856 = vadd.f32 %v4843, %v4855
      %v4857 = vpop.f32.mrf.mxu0
      %4858 = vdwg.mxu0
      %4859 = vmatpush.bf16.msra.mxu0 %v2532
      %4860 = vmatpush.bf16.msra.mxu0 %v2525
      %4861 = vmatpush.bf16.msra.mxu0 %v2518
      %4862 = vmatpush.bf16.msra.mxu0 %v2511
      %4863 = vmatpush.bf16.msra.mxu0 %v2504
      %4864 = vmatpush.bf16.msra.mxu0 %v2497
      %4865 = vmatpush.bf16.msra.mxu0 %v2490
      %4866 = vmatpush.bf16.msra.mxu0 %v2483
      %4867 = vmatmul.bf16.gmra.mxu0 %v4311
      %v4868 = vpop.f32.mrf.mxu0
      %v4869 = vadd.f32 %v4856, %v4868
      %v4870 = vpop.f32.mrf.mxu0
      %4871 = vdwg.mxu0
      %4872 = vmatpush.bf16.msra.mxu0 %v2588
      %4873 = vmatpush.bf16.msra.mxu0 %v2581
      %4874 = vmatpush.bf16.msra.mxu0 %v2574
      %4875 = vmatpush.bf16.msra.mxu0 %v2567
      %4876 = vmatpush.bf16.msra.mxu0 %v2560
      %4877 = vmatpush.bf16.msra.mxu0 %v2553
      %4878 = vmatpush.bf16.msra.mxu0 %v2546
      %4879 = vmatpush.bf16.msra.mxu0 %v2539
      %4880 = vmatmul.bf16.gmra.mxu0 %v4312
      %v4881 = vpop.f32.mrf.mxu0
      %v4882 = vadd.f32 %v4869, %v4881
      %v4883 = vpop.f32.mrf.mxu0
      %4884 = vdwg.mxu0
      %4885 = vmatpush.bf16.msra.mxu0 %v2644
      %4886 = vmatpush.bf16.msra.mxu0 %v2637
      %4887 = vmatpush.bf16.msra.mxu0 %v2630
      %4888 = vmatpush.bf16.msra.mxu0 %v2623
      %4889 = vmatpush.bf16.msra.mxu0 %v2616
      %4890 = vmatpush.bf16.msra.mxu0 %v2609
      %4891 = vmatpush.bf16.msra.mxu0 %v2602
      %4892 = vmatpush.bf16.msra.mxu0 %v2595
      %4893 = vmatmul.bf16.gmra.mxu0 %v4313
      %v4894 = vpop.f32.mrf.mxu0
      %v4895 = vadd.f32 %v4882, %v4894
      %v4896 = vpop.f32.mrf.mxu0
      %4897 = vdwg.mxu0
      %4898 = vmatpush.bf16.msra.mxu0 %v2253
      %4899 = vmatpush.bf16.msra.mxu0 %v2246
      %4900 = vmatpush.bf16.msra.mxu0 %v2239
      %4901 = vmatpush.bf16.msra.mxu0 %v2232
      %4902 = vmatpush.bf16.msra.mxu0 %v2225
      %4903 = vmatpush.bf16.msra.mxu0 %v2218
      %4904 = vmatpush.bf16.msra.mxu0 %v2211
      %4905 = vmatpush.bf16.msra.mxu0 %v2204
      %4906 = vmatmul.bf16.gmra.mxu0 %v4306
      %v4907 = vpop.f32.mrf.mxu0
      %v4908 = vadd.f32 0.0, %v4907
      %v4909 = vpop.f32.mrf.mxu0
      %4910 = vdwg.mxu0
      %4911 = vmatpush.bf16.msra.mxu0 %v2309
      %4912 = vmatpush.bf16.msra.mxu0 %v2302
      %4913 = vmatpush.bf16.msra.mxu0 %v2295
      %4914 = vmatpush.bf16.msra.mxu0 %v2288
      %4915 = vmatpush.bf16.msra.mxu0 %v2281
      %4916 = vmatpush.bf16.msra.mxu0 %v2274
      %4917 = vmatpush.bf16.msra.mxu0 %v2267
      %4918 = vmatpush.bf16.msra.mxu0 %v2260
      %4919 = vmatmul.bf16.gmra.mxu0 %v4307
      %v4920 = vpop.f32.mrf.mxu0
      %v4921 = vadd.f32 %v4908, %v4920
      %v4922 = vpop.f32.mrf.mxu0
      %4923 = vdwg.mxu0
      %4924 = vmatpush.bf16.msra.mxu0 %v2365
      %4925 = vmatpush.bf16.msra.mxu0 %v2358
      %4926 = vmatpush.bf16.msra.mxu0 %v2351
      %4927 = vmatpush.bf16.msra.mxu0 %v2344
      %4928 = vmatpush.bf16.msra.mxu0 %v2337
      %4929 = vmatpush.bf16.msra.mxu0 %v2330
      %4930 = vmatpush.bf16.msra.mxu0 %v2323
      %4931 = vmatpush.bf16.msra.mxu0 %v2316
      %4932 = vmatmul.bf16.gmra.mxu0 %v4308
      %v4933 = vpop.f32.mrf.mxu0
      %v4934 = vadd.f32 %v4921, %v4933
      %v4935 = vpop.f32.mrf.mxu0
      %4936 = vdwg.mxu0
      %4937 = vmatpush.bf16.msra.mxu0 %v2421
      %4938 = vmatpush.bf16.msra.mxu0 %v2414
      %4939 = vmatpush.bf16.msra.mxu0 %v2407
      %4940 = vmatpush.bf16.msra.mxu0 %v2400
      %4941 = vmatpush.bf16.msra.mxu0 %v2393
      %4942 = vmatpush.bf16.msra.mxu0 %v2386
      %4943 = vmatpush.bf16.msra.mxu0 %v2379
      %4944 = vmatpush.bf16.msra.mxu0 %v2372
      %4945 = vmatmul.bf16.gmra.mxu0 %v4309
      %v4946 = vpop.f32.mrf.mxu0
      %v4947 = vadd.f32 %v4934, %v4946
      %v4948 = vpop.f32.mrf.mxu0
      %4949 = vdwg.mxu0
      %4950 = vmatpush.bf16.msra.mxu0 %v2477
      %4951 = vmatpush.bf16.msra.mxu0 %v2470
      %4952 = vmatpush.bf16.msra.mxu0 %v2463
      %4953 = vmatpush.bf16.msra.mxu0 %v2456
      %4954 = vmatpush.bf16.msra.mxu0 %v2449
      %4955 = vmatpush.bf16.msra.mxu0 %v2442
      %4956 = vmatpush.bf16.msra.mxu0 %v2435
      %4957 = vmatpush.bf16.msra.mxu0 %v2428
      %4958 = vmatmul.bf16.gmra.mxu0 %v4310
      %v4959 = vpop.f32.mrf.mxu0
      %v4960 = vadd.f32 %v4947, %v4959
      %v4961 = vpop.f32.mrf.mxu0
      %4962 = vdwg.mxu0
      %4963 = vmatpush.bf16.msra.mxu0 %v2533
      %4964 = vmatpush.bf16.msra.mxu0 %v2526
      %4965 = vmatpush.bf16.msra.mxu0 %v2519
      %4966 = vmatpush.bf16.msra.mxu0 %v2512
      %4967 = vmatpush.bf16.msra.mxu0 %v2505
      %4968 = vmatpush.bf16.msra.mxu0 %v2498
      %4969 = vmatpush.bf16.msra.mxu0 %v2491
      %4970 = vmatpush.bf16.msra.mxu0 %v2484
      %4971 = vmatmul.bf16.gmra.mxu0 %v4311
      %v4972 = vpop.f32.mrf.mxu0
      %v4973 = vadd.f32 %v4960, %v4972
      %v4974 = vpop.f32.mrf.mxu0
      %4975 = vdwg.mxu0
      %4976 = vmatpush.bf16.msra.mxu0 %v2589
      %4977 = vmatpush.bf16.msra.mxu0 %v2582
      %4978 = vmatpush.bf16.msra.mxu0 %v2575
      %4979 = vmatpush.bf16.msra.mxu0 %v2568
      %4980 = vmatpush.bf16.msra.mxu0 %v2561
      %4981 = vmatpush.bf16.msra.mxu0 %v2554
      %4982 = vmatpush.bf16.msra.mxu0 %v2547
      %4983 = vmatpush.bf16.msra.mxu0 %v2540
      %4984 = vmatmul.bf16.gmra.mxu0 %v4312
      %v4985 = vpop.f32.mrf.mxu0
      %v4986 = vadd.f32 %v4973, %v4985
      %v4987 = vpop.f32.mrf.mxu0
      %4988 = vdwg.mxu0
      %4989 = vmatpush.bf16.msra.mxu0 %v2645
      %4990 = vmatpush.bf16.msra.mxu0 %v2638
      %4991 = vmatpush.bf16.msra.mxu0 %v2631
      %4992 = vmatpush.bf16.msra.mxu0 %v2624
      %4993 = vmatpush.bf16.msra.mxu0 %v2617
      %4994 = vmatpush.bf16.msra.mxu0 %v2610
      %4995 = vmatpush.bf16.msra.mxu0 %v2603
      %4996 = vmatpush.bf16.msra.mxu0 %v2596
      %4997 = vmatmul.bf16.gmra.mxu0 %v4313
      %v4998 = vpop.f32.mrf.mxu0
      %v4999 = vadd.f32 %v4986, %v4998
      %v5000 = vpop.f32.mrf.mxu0
      %5001 = vdwg.mxu0
      %5002 = vmatpush.bf16.msra.mxu0 %v2254
      %5003 = vmatpush.bf16.msra.mxu0 %v2247
      %5004 = vmatpush.bf16.msra.mxu0 %v2240
      %5005 = vmatpush.bf16.msra.mxu0 %v2233
      %5006 = vmatpush.bf16.msra.mxu0 %v2226
      %5007 = vmatpush.bf16.msra.mxu0 %v2219
      %5008 = vmatpush.bf16.msra.mxu0 %v2212
      %5009 = vmatpush.bf16.msra.mxu0 %v2205
      %5010 = vmatmul.bf16.gmra.mxu0 %v4306
      %v5011 = vpop.f32.mrf.mxu0
      %v5012 = vadd.f32 0.0, %v5011
      %v5013 = vpop.f32.mrf.mxu0
      %5014 = vdwg.mxu0
      %5015 = vmatpush.bf16.msra.mxu0 %v2310
      %5016 = vmatpush.bf16.msra.mxu0 %v2303
      %5017 = vmatpush.bf16.msra.mxu0 %v2296
      %5018 = vmatpush.bf16.msra.mxu0 %v2289
      %5019 = vmatpush.bf16.msra.mxu0 %v2282
      %5020 = vmatpush.bf16.msra.mxu0 %v2275
      %5021 = vmatpush.bf16.msra.mxu0 %v2268
      %5022 = vmatpush.bf16.msra.mxu0 %v2261
      %5023 = vmatmul.bf16.gmra.mxu0 %v4307
      %v5024 = vpop.f32.mrf.mxu0
      %v5025 = vadd.f32 %v5012, %v5024
      %v5026 = vpop.f32.mrf.mxu0
      %5027 = vdwg.mxu0
      %5028 = vmatpush.bf16.msra.mxu0 %v2366
      %5029 = vmatpush.bf16.msra.mxu0 %v2359
      %5030 = vmatpush.bf16.msra.mxu0 %v2352
      %5031 = vmatpush.bf16.msra.mxu0 %v2345
      %5032 = vmatpush.bf16.msra.mxu0 %v2338
      %5033 = vmatpush.bf16.msra.mxu0 %v2331
      %5034 = vmatpush.bf16.msra.mxu0 %v2324
      %5035 = vmatpush.bf16.msra.mxu0 %v2317
      %5036 = vmatmul.bf16.gmra.mxu0 %v4308
      %v5037 = vpop.f32.mrf.mxu0
      %v5038 = vadd.f32 %v5025, %v5037
      %v5039 = vpop.f32.mrf.mxu0
      %5040 = vdwg.mxu0
      %5041 = vmatpush.bf16.msra.mxu0 %v2422
      %5042 = vmatpush.bf16.msra.mxu0 %v2415
      %5043 = vmatpush.bf16.msra.mxu0 %v2408
      %5044 = vmatpush.bf16.msra.mxu0 %v2401
      %5045 = vmatpush.bf16.msra.mxu0 %v2394
      %5046 = vmatpush.bf16.msra.mxu0 %v2387
      %5047 = vmatpush.bf16.msra.mxu0 %v2380
      %5048 = vmatpush.bf16.msra.mxu0 %v2373
      %5049 = vmatmul.bf16.gmra.mxu0 %v4309
      %v5050 = vpop.f32.mrf.mxu0
      %v5051 = vadd.f32 %v5038, %v5050
      %v5052 = vpop.f32.mrf.mxu0
      %5053 = vdwg.mxu0
      %5054 = vmatpush.bf16.msra.mxu0 %v2478
      %5055 = vmatpush.bf16.msra.mxu0 %v2471
      %5056 = vmatpush.bf16.msra.mxu0 %v2464
      %5057 = vmatpush.bf16.msra.mxu0 %v2457
      %5058 = vmatpush.bf16.msra.mxu0 %v2450
      %5059 = vmatpush.bf16.msra.mxu0 %v2443
      %5060 = vmatpush.bf16.msra.mxu0 %v2436
      %5061 = vmatpush.bf16.msra.mxu0 %v2429
      %5062 = vmatmul.bf16.gmra.mxu0 %v4310
      %v5063 = vpop.f32.mrf.mxu0
      %v5064 = vadd.f32 %v5051, %v5063
      %v5065 = vpop.f32.mrf.mxu0
      %5066 = vdwg.mxu0
      %5067 = vmatpush.bf16.msra.mxu0 %v2534
      %5068 = vmatpush.bf16.msra.mxu0 %v2527
      %5069 = vmatpush.bf16.msra.mxu0 %v2520
      %5070 = vmatpush.bf16.msra.mxu0 %v2513
      %5071 = vmatpush.bf16.msra.mxu0 %v2506
      %5072 = vmatpush.bf16.msra.mxu0 %v2499
      %5073 = vmatpush.bf16.msra.mxu0 %v2492
      %5074 = vmatpush.bf16.msra.mxu0 %v2485
      %5075 = vmatmul.bf16.gmra.mxu0 %v4311
      %v5076 = vpop.f32.mrf.mxu0
      %v5077 = vadd.f32 %v5064, %v5076
      %v5078 = vpop.f32.mrf.mxu0
      %5079 = vdwg.mxu0
      %5080 = vmatpush.bf16.msra.mxu0 %v2590
      %5081 = vmatpush.bf16.msra.mxu0 %v2583
      %5082 = vmatpush.bf16.msra.mxu0 %v2576
      %5083 = vmatpush.bf16.msra.mxu0 %v2569
      %5084 = vmatpush.bf16.msra.mxu0 %v2562
      %5085 = vmatpush.bf16.msra.mxu0 %v2555
      %5086 = vmatpush.bf16.msra.mxu0 %v2548
      %5087 = vmatpush.bf16.msra.mxu0 %v2541
      %5088 = vmatmul.bf16.gmra.mxu0 %v4312
      %v5089 = vpop.f32.mrf.mxu0
      %v5090 = vadd.f32 %v5077, %v5089
      %v5091 = vpop.f32.mrf.mxu0
      %5092 = vdwg.mxu0
      %5093 = vmatpush.bf16.msra.mxu0 %v2646
      %5094 = vmatpush.bf16.msra.mxu0 %v2639
      %5095 = vmatpush.bf16.msra.mxu0 %v2632
      %5096 = vmatpush.bf16.msra.mxu0 %v2625
      %5097 = vmatpush.bf16.msra.mxu0 %v2618
      %5098 = vmatpush.bf16.msra.mxu0 %v2611
      %5099 = vmatpush.bf16.msra.mxu0 %v2604
      %5100 = vmatpush.bf16.msra.mxu0 %v2597
      %5101 = vmatmul.bf16.gmra.mxu0 %v4313
      %v5102 = vpop.f32.mrf.mxu0
      %v5103 = vadd.f32 %v5090, %v5102
      %v5104 = vpop.f32.mrf.mxu0
      %5105 = vdwg.mxu0
      %v5106 = vadd.f32 %v4299, %v4479
      %v5107 = vadd.f32 %v4300, %v4583
      %v5108 = vadd.f32 %v4301, %v4687
      %v5109 = vadd.f32 %v4302, %v4791
      %v5110 = vadd.f32 %v4303, %v4895
      %v5111 = vadd.f32 %v4304, %v4999
      %v5112 = vadd.f32 %v4305, %v5103
      %5113 = vst [vmem:[#allocation2] sm:$0xff] %v5106
      %5114 = vst [vmem:[#allocation2 + $0x8] sm:$0xff] %v5107
      %5115 = vst [vmem:[#allocation2 + $0x10] sm:$0xff] %v5108
      %5116 = vst [vmem:[#allocation2 + $0x18] sm:$0xff] %v5109
      %5117 = vst [vmem:[#allocation2 + $0x20] sm:$0xff] %v5110
      %5118 = vst [vmem:[#allocation2 + $0x28] sm:$0xff] %v5111
      %5119 = vst.msk [vmem:[#allocation2 + $0x30] sm:$0xff] %vm3031, %v5112
      // Predicated region
      $region37: #{fcwta_forward.1} parent=31 // pred_check
        %p5120 = pneg %p221
      $region38: #{fcwta_forward.1} parent=31 // pred_check_branch
        %5122 = sbr.rel (%p5120) target = $region40
      $region39: #{fcwta_forward.1} parent=31 // pred_region
        %v5123 = vld [vmem:[#allocation2] sm:$0xff]
        %v5124 = vld [vmem:[#allocation2 + $0x8] sm:$0xff]
        %v5125 = vld [vmem:[#allocation2 + $0x10] sm:$0xff]
        %v5126 = vld [vmem:[#allocation2 + $0x18] sm:$0xff]
        %v5127 = vld [vmem:[#allocation2 + $0x20] sm:$0xff]
        %v5128 = vld [vmem:[#allocation2 + $0x28] sm:$0xff]
        %v5129 = vld [vmem:[#allocation2 + $0x30] sm:$0xff]
        %5130 = vst [vmem:[%s220] sm:$0xff] %v5123
        %5131 = vst [vmem:[%s220 + $0x8] sm:$0xff] %v5124
        %5132 = vst [vmem:[%s220 + $0x10] sm:$0xff] %v5125
        %5133 = vst [vmem:[%s220 + $0x18] sm:$0xff] %v5126
        %5134 = vst [vmem:[%s220 + $0x20] sm:$0xff] %v5127
        %5135 = vst [vmem:[%s220 + $0x28] sm:$0xff] %v5128
        %5136 = vst.msk [vmem:[%s220 + $0x30] sm:$0xff] %vm3031, %v5129
      $region40: #{fcwta_forward.1} parent=31 // pred_fallthru
        _
      %p5137 = scmp.lt.s32.totalorder %s18, 1
      %s5138 = scalar_select %p5137, %s18, 1
      %s5139 = smul.addr %s5138, 7
      %s5140 = smul.addr %s5139, 8
      %s5141 = scalar_lea.vmem %s3, %s5140
      // Predicated region
      $region41: #{fcwta_forward.1} parent=31 // pred_check
        %p5142 = pneg %p121
      $region42: #{fcwta_forward.1} parent=31 // pred_check_branch
        %5144 = sbr.rel (%p5142) target = $region44
      $region43: #{fcwta_forward.1} parent=31 // pred_region
        _
      $region44: #{fcwta_forward.1} parent=31 // pred_fallthru
        _
    $region32: #{fcwta_forward.1} parent=5 // pred_fallthru
      _
    %p5145 = scmp.le.s32.totalorder 2, %s9
    // Predicated region
    $region45: #{fcwta_forward.1} parent=5 // pred_check
      %p5146 = pneg %p5145
    $region46: #{fcwta_forward.1} parent=5 // pred_check_branch
      %5148 = sbr.rel (%p5146) target = $region48
    $region47: #{fcwta_forward.1} parent=5 // pred_region
      %s5149 = ssub.s32 %s9, 2
      // Predicated region
      $region49: #{fcwta_forward.1} parent=47 // pred_check
        %p5150 = pneg %p127
      $region50: #{fcwta_forward.1} parent=47 // pred_check_branch
        %5152 = sbr.rel (%p5150) target = $region52
      $region51: #{fcwta_forward.1} parent=47 // pred_region
        %p5153 = scmp.lt.s32.totalorder %s20, 1
        %s5154 = scalar_select %p5153, %s20, 1
        %s5155 = smul.addr %s5154, 7
        %s5156 = smul.addr %s5155, 8
        %s5157 = scalar_lea.vmem %s3, %s5156
      $region52: #{fcwta_forward.1} parent=47 // pred_fallthru
        _
    $region48: #{fcwta_forward.1} parent=5 // pred_fallthru
      _
  $region6: #{fcwta_forward.1} parent=0 // loop_footer
    %s13 = sadd.s32 1, %s9
  $region7: #{fcwta_forward.1} parent=0 // loop_footer_branch
    %8 = sbr.rel target = $region3
  $region8: #{fcwta_forward.1} parent=0 // loop_exit
    _

</llo_original>
